<compile_context>
chip_gen: v6e
topology: v6e:2x2x1
jax: 0.10.0
libtpu: 0.0.40
codegen_flags: <defaults>
</compile_context>

<pallas_src>
import math

import jax
import jax.numpy as jnp
from jax.experimental import pallas as pl
from jax.experimental.pallas import tpu as pltpu

# ---- synthetic (small) CodeBERT config -------------------------------------
B, S, H = 2, 8, 128          # batch, seq, hidden
T = B * S                    # folded batch*seq rows processed in one step
NH, HD = 4, 32               # attention heads, head dim (NH * HD == H)
FF = 256                     # FFN intermediate size
NUM_LAYERS = 2               # encoder layers
NUM_LABELS = 6               # multi-label classifier output
LANE = 128                   # lane-dense width for the classifier output slab
VOCAB = 256
PAD_ID = 1                   # RoBERTa padding idx (drives position ids)
MAX_POS = S + 2
EPS = 1e-5
NEG = -1e9                   # additive attention-mask value

# indices into the packed per-layer (NUM_LAYERS, 6, H) vector array
_BO, _LN1G, _LN1B, _BO2, _LN2G, _LN2B = range(6)


def _layernorm(x, g, b):
    # fused statistics: var = E[x^2] - E[x]^2 (both reductions independent)
    m = jnp.mean(x, axis=-1, keepdims=True)
    m2 = jnp.mean(x * x, axis=-1, keepdims=True)
    var = m2 - m * m
    return (x - m) * jax.lax.rsqrt(var + EPS) * g + b


def _split_heads(x2d):
    # (T, H) -> (NH, T, HD), bf16 operand for the batched attention matmuls
    return jnp.transpose(x2d.astype(jnp.bfloat16).reshape(T, NH, HD), (1, 0, 2))


# ---------------------------------------------------------------------------
# fused kernel: embedding-LN -> NUM_LAYERS encoder layers -> pooler -> classifier
# (whole batch in one step; no grid)
# ---------------------------------------------------------------------------
def fused_forward_kernel(emb_ref, mask_ref,
                         embln_ref,
                         wqkv_ref, bqkv_ref, wo_ref, wi_ref, bi_ref, wo2_ref,
                         vec_ref,
                         wp_ref, wc_ref, headb_ref,
                         out_ref):
    x = _layernorm(emb_ref[...], embln_ref[0:1], embln_ref[1:2])       # (T, H) f32

    # block-diag + padding additive key mask, broadcast ONCE to (NH, T, T)
    add_mask = jnp.broadcast_to(mask_ref[...][None, :, :], (NH, T, T))

    for l in range(NUM_LAYERS):                                        # static unroll (L <= 4)
        vec_l = vec_ref[l]                                             # (6, H) f32

        # --- multi-head self-attention -----------------------------------
        # fused QKV: one lane-dense (T,H)@(H,3H) bf16 MXU push, f32 accumulate.
        # softmax scale 1/sqrt(HD) is pre-folded into the Q third of Wqkv/bqkv.
        qkv = (jnp.dot(x.astype(jnp.bfloat16), wqkv_ref[l],
                       preferred_element_type=jnp.float32)
               + bqkv_ref[l])                                          # (T, 3H) f32

        q = _split_heads(qkv[:, 0 * H:1 * H])                          # (NH, T, HD) bf16
        k = _split_heads(qkv[:, 1 * H:2 * H])
        v = _split_heads(qkv[:, 2 * H:3 * H])

        # heads-batched QK^T (one batched MXU push per layer)
        s = jnp.einsum('htd,hkd->htk', q, k,
                       preferred_element_type=jnp.float32)             # (NH, T, T) f32
        s = s + add_mask
        s = s - jnp.max(s, axis=-1, keepdims=True)
        p = jnp.exp(s)
        p = p * pl.reciprocal(jnp.sum(p, axis=-1, keepdims=True), approx=True)

        # heads-batched PV, then one relayout back to (T, H)
        ctx = jnp.einsum('htk,hkd->htd', p.astype(jnp.bfloat16), v,
                         preferred_element_type=jnp.float32)           # (NH, T, HD)
        ctx = jnp.transpose(ctx, (1, 0, 2)).reshape(T, H)

        attn = (jnp.dot(ctx.astype(jnp.bfloat16), wo_ref[l],
                        preferred_element_type=jnp.float32)
                + vec_l[_BO:_BO + 1])
        # dropout(0.1) is identity in eval mode
        h1 = _layernorm(attn + x, vec_l[_LN1G:_LN1G + 1], vec_l[_LN1B:_LN1B + 1])

        # --- feed-forward --------------------------------------------------
        ff = (jnp.dot(h1.astype(jnp.bfloat16), wi_ref[l],
                      preferred_element_type=jnp.float32)
              + bi_ref[l])
        # tanh GELU (EUP slot); slight numerics deviation from HF exact erf GELU
        ff = jax.nn.gelu(ff, approximate=True)
        ff = (jnp.dot(ff.astype(jnp.bfloat16), wo2_ref[l],
                      preferred_element_type=jnp.float32)
              + vec_l[_BO2:_BO2 + 1])
        x = _layernorm(ff + h1, vec_l[_LN2G:_LN2G + 1], vec_l[_LN2B:_LN2B + 1])

    # --- RoBERTa pooler ([CLS] per batch element) + classifier ---------------
    cls = x.reshape(B, S, H)[:, 0, :]                                  # (B, H)
    pooled = jnp.tanh(
        jnp.dot(cls.astype(jnp.bfloat16), wp_ref[...],
                preferred_element_type=jnp.float32)
        + headb_ref[0:1])
    logits = (jnp.dot(pooled.astype(jnp.bfloat16), wc_ref[...],
                      preferred_element_type=jnp.float32)
              + headb_ref[1:2])                                        # (B, LANE) lane-dense
    out_ref[...] = logits


# ---------------------------------------------------------------------------
# pallas_call wrapper (no grid: whole batch in one step, weights single-buffered)
# ---------------------------------------------------------------------------
def pallas_codebert_forward(emb_flat, add_mask, p):
    weights = [p["emb_ln"], p["wqkv"], p["bqkv"], p["wo"], p["wi"], p["bi"],
               p["wo2"], p["vec"], p["pooler_w"], p["cls_w_pad"], p["head_b"]]
    n_in = 2 + len(weights)
    vmem_spec = lambda: pl.BlockSpec(memory_space=pltpu.MemorySpace.VMEM)
    logits_pad = pl.pallas_call(
        fused_forward_kernel,
        out_shape=jax.ShapeDtypeStruct((B, LANE), jnp.float32),
        in_specs=[vmem_spec() for _ in range(n_in)],
        out_specs=vmem_spec(),
    )(emb_flat, add_mask, *weights)
    return logits_pad[:, :NUM_LABELS]


# ---------------------------------------------------------------------------
# parameters & forward
# ---------------------------------------------------------------------------
def init_params(key):
    keys = iter(jax.random.split(key, 64))

    def nrm(shape):
        return 0.02 * jax.random.normal(next(keys), shape, jnp.float32)

    L = NUM_LAYERS
    # packed per-layer LN/bias vectors: [bo, ln1g, ln1b, bo2, ln2g, ln2b]
    vec = jnp.zeros((L, 6, H), jnp.float32)
    vec = vec.at[:, _LN1G].set(1.0).at[:, _LN2G].set(1.0)

    # fused Q|K|V projection with the softmax scale folded into the Q third
    scale = 1.0 / math.sqrt(HD)
    wqkv = nrm((L, H, 3 * H))
    wqkv = wqkv.at[:, :, 0:H].multiply(scale)
    bqkv = jnp.zeros((L, 1, 3 * H), jnp.float32)
    bqkv = bqkv.at[:, :, 0:H].multiply(scale)

    # classifier weight / bias zero-padded to a 128-lane slab
    cls_w = nrm((H, NUM_LABELS))
    cls_w_pad = jnp.zeros((H, LANE), jnp.float32).at[:, :NUM_LABELS].set(cls_w)
    head_b = jnp.zeros((2, LANE), jnp.float32)        # row 0: pooler_b, row 1: cls_b(pad)

    bf = jnp.bfloat16
    params = dict(
        word_emb=nrm((VOCAB, H)),
        pos_emb=nrm((MAX_POS, H)),
        tok_emb=nrm((1, H)),
        emb_ln=jnp.concatenate(                        # row 0: gamma, row 1: beta
            [jnp.ones((1, H), jnp.float32), jnp.zeros((1, H), jnp.float32)], axis=0),
        wqkv=wqkv.astype(bf),                          # bf16 MXU weights
        bqkv=bqkv,                                     # f32 biases / LN params
        wo=nrm((L, H, H)).astype(bf),
        wi=nrm((L, H, FF)).astype(bf),
        bi=jnp.zeros((L, 1, FF), jnp.float32),
        wo2=nrm((L, FF, H)).astype(bf),
        vec=vec,
        pooler_w=nrm((H, H)).astype(bf),
        cls_w_pad=cls_w_pad.astype(bf),
        head_b=head_b,
    )
    return params


def codebert_classifier_forward(params, input_ids, attention_mask):
    mask_i = attention_mask.astype(jnp.int32)

    # embeddings (gathers are JAX glue; everything else runs inside the kernel)
    word = params["word_emb"][input_ids]                                  # (B, S, H)
    pos_ids = (jnp.cumsum(mask_i, axis=1) * mask_i) + PAD_ID
    pos = params["pos_emb"][pos_ids]                                      # (B, S, H)
    tok = params["tok_emb"][0]                                            # (H,)
    emb_flat = (word + pos + tok).astype(jnp.float32).reshape(T, H)

    # block-diagonal additive key mask over the folded (B*S) rows:
    # query i may attend to key j iff same batch element and key j is not padding.
    batch_ids = jnp.arange(T, dtype=jnp.int32) // S
    same_batch = batch_ids[:, None] == batch_ids[None, :]
    key_valid = (mask_i.reshape(T) == 1)[None, :]
    add_mask = jnp.where(same_batch & key_valid, 0.0, NEG).astype(jnp.float32)

    return pallas_codebert_forward(emb_flat, add_mask, params)            # (B, NUM_LABELS)


if __name__ == "__main__":
    root = jax.random.PRNGKey(0)
    k_param, k_ids = jax.random.split(root)

    params = init_params(k_param)
    input_ids = jax.random.randint(k_ids, (B, S), 2, VOCAB, dtype=jnp.int32)
    attention_mask = jnp.ones((B, S), jnp.int32).at[1, S - 2:].set(0)
    input_ids = jnp.where(attention_mask == 1, input_ids, PAD_ID)

    logits = jax.jit(codebert_classifier_forward)(params, input_ids, attention_mask)
    jax.block_until_ready(logits)
    assert logits.shape == (B, NUM_LABELS)
    assert bool(jnp.all(jnp.isfinite(logits)))
    print("KERNEL_OK")
</pallas_src>

<mosaic_0001>
module attributes {stable_mosaic.version = 11 : i64} {
  func.func @fused_forward_kernel(%arg0: memref<16x128xf32, #tpu.memory_space<vmem>>, %arg1: memref<16x16xf32, #tpu.memory_space<vmem>>, %arg2: memref<2x128xf32, #tpu.memory_space<vmem>>, %arg3: memref<2x128x384xbf16, #tpu.memory_space<vmem>>, %arg4: memref<2x1x384xf32, #tpu.memory_space<vmem>>, %arg5: memref<2x128x128xbf16, #tpu.memory_space<vmem>>, %arg6: memref<2x128x256xbf16, #tpu.memory_space<vmem>>, %arg7: memref<2x1x256xf32, #tpu.memory_space<vmem>>, %arg8: memref<2x256x128xbf16, #tpu.memory_space<vmem>>, %arg9: memref<2x6x128xf32, #tpu.memory_space<vmem>>, %arg10: memref<128x128xbf16, #tpu.memory_space<vmem>>, %arg11: memref<128x128xbf16, #tpu.memory_space<vmem>>, %arg12: memref<2x128xf32, #tpu.memory_space<vmem>>, %arg13: memref<2x128xf32, #tpu.memory_space<vmem>>) attributes {dimension_semantics = [], scalar_prefetch = 0 : i64, scratch_operands = 0 : i64, tpu.core_type = #tpu.core_type<tc>} {
    %c0 = arith.constant 0 : index
    %c0_0 = arith.constant 0 : index
    %0 = vector.load %arg0[%c0, %c0_0] : memref<16x128xf32, #tpu.memory_space<vmem>>, vector<16x128xf32>
    %c0_1 = arith.constant 0 : index
    %c0_2 = arith.constant 0 : index
    %1 = vector.load %arg2[%c0_1, %c0_2] : memref<2x128xf32, #tpu.memory_space<vmem>>, vector<1x128xf32>
    %c1 = arith.constant 1 : index
    %c0_3 = arith.constant 0 : index
    %2 = vector.load %arg2[%c1, %c0_3] : memref<2x128xf32, #tpu.memory_space<vmem>>, vector<1x128xf32>
    %cst = arith.constant dense<0.000000e+00> : vector<16xf32>
    %3 = vector.multi_reduction <add>, %0, %cst [1] : vector<16x128xf32> to vector<16xf32>
    %4 = vector.shape_cast %3 : vector<16xf32> to vector<16x1xf32>
    %cst_4 = arith.constant 1.280000e+02 : f32
    %5 = vector.broadcast %cst_4 : f32 to vector<16x1xf32>
    %6 = arith.divf %4, %5 : vector<16x1xf32>
    %7 = arith.mulf %0, %0 : vector<16x128xf32>
    %cst_5 = arith.constant dense<0.000000e+00> : vector<16xf32>
    %8 = vector.multi_reduction <add>, %7, %cst_5 [1] : vector<16x128xf32> to vector<16xf32>
    %9 = vector.shape_cast %8 : vector<16xf32> to vector<16x1xf32>
    %cst_6 = arith.constant 1.280000e+02 : f32
    %10 = vector.broadcast %cst_6 : f32 to vector<16x1xf32>
    %11 = arith.divf %9, %10 : vector<16x1xf32>
    %12 = arith.mulf %6, %6 : vector<16x1xf32>
    %13 = arith.subf %11, %12 : vector<16x1xf32>
    %14 = vector.broadcast %6 : vector<16x1xf32> to vector<16x128xf32>
    %15 = arith.subf %0, %14 : vector<16x128xf32>
    %cst_7 = arith.constant 9.99999974E-6 : f32
    %16 = vector.broadcast %cst_7 : f32 to vector<16x1xf32>
    %17 = arith.addf %13, %16 : vector<16x1xf32>
    %18 = math.rsqrt %17 : vector<16x1xf32>
    %19 = vector.broadcast %18 : vector<16x1xf32> to vector<16x128xf32>
    %20 = arith.mulf %15, %19 : vector<16x128xf32>
    %21 = vector.broadcast %1 : vector<1x128xf32> to vector<16x128xf32>
    %22 = arith.mulf %20, %21 : vector<16x128xf32>
    %23 = vector.broadcast %2 : vector<1x128xf32> to vector<16x128xf32>
    %24 = arith.addf %22, %23 : vector<16x128xf32>
    %c0_8 = arith.constant 0 : index
    %c0_9 = arith.constant 0 : index
    %25 = vector.load %arg1[%c0_8, %c0_9] : memref<16x16xf32, #tpu.memory_space<vmem>>, vector<16x16xf32>
    %26 = vector.shape_cast %25 : vector<16x16xf32> to vector<1x16x16xf32>
    %27 = vector.shape_cast %26 : vector<1x16x16xf32> to vector<1x16x16xf32>
    %28 = vector.broadcast %27 : vector<1x16x16xf32> to vector<4x16x16xf32>
    %c0_10 = arith.constant 0 : index
    %c0_11 = arith.constant 0 : index
    %c0_12 = arith.constant 0 : index
    %29 = vector.load %arg9[%c0_10, %c0_11, %c0_12] : memref<2x6x128xf32, #tpu.memory_space<vmem>>, vector<1x6x128xf32>
    %30 = vector.shape_cast %29 : vector<1x6x128xf32> to vector<6x128xf32>
    %31 = arith.truncf %24 : vector<16x128xf32> to vector<16x128xbf16>
    %c0_13 = arith.constant 0 : index
    %c0_14 = arith.constant 0 : index
    %c0_15 = arith.constant 0 : index
    %32 = vector.load %arg3[%c0_13, %c0_14, %c0_15] : memref<2x128x384xbf16, #tpu.memory_space<vmem>>, vector<1x128x384xbf16>
    %33 = vector.shape_cast %32 : vector<1x128x384xbf16> to vector<128x384xbf16>
    %cst_16 = arith.constant dense<0.000000e+00> : vector<16x384xf32>
    %34 = tpu.matmul %31, %33, %cst_16 {dimension_numbers = #tpu.dot_dimension_numbers<[1], [0], [0], [1], [0, 0, 1, 1], [], []>} : vector<16x128xbf16>, vector<128x384xbf16>, vector<16x384xf32> -> vector<16x384xf32>
    %c0_17 = arith.constant 0 : index
    %c0_18 = arith.constant 0 : index
    %c0_19 = arith.constant 0 : index
    %35 = vector.load %arg4[%c0_17, %c0_18, %c0_19] : memref<2x1x384xf32, #tpu.memory_space<vmem>>, vector<1x1x384xf32>
    %36 = vector.shape_cast %35 : vector<1x1x384xf32> to vector<1x384xf32>
    %37 = vector.broadcast %36 : vector<1x384xf32> to vector<16x384xf32>
    %38 = arith.addf %34, %37 : vector<16x384xf32>
    %39 = vector.extract_strided_slice %38 {offsets = [0, 0], sizes = [16, 128], strides = [1, 1]} : vector<16x384xf32> to vector<16x128xf32>
    %40 = arith.truncf %39 : vector<16x128xf32> to vector<16x128xbf16>
    %41 = vector.shape_cast %40 : vector<16x128xbf16> to vector<16x4x32xbf16>
    %42 = tpu.transpose %41, [1, 0, 2] : vector<16x4x32xbf16> -> vector<4x16x32xbf16>
    %43 = vector.extract_strided_slice %38 {offsets = [0, 128], sizes = [16, 128], strides = [1, 1]} : vector<16x384xf32> to vector<16x128xf32>
    %44 = arith.truncf %43 : vector<16x128xf32> to vector<16x128xbf16>
    %45 = vector.shape_cast %44 : vector<16x128xbf16> to vector<16x4x32xbf16>
    %46 = tpu.transpose %45, [1, 0, 2] : vector<16x4x32xbf16> -> vector<4x16x32xbf16>
    %47 = vector.extract_strided_slice %38 {offsets = [0, 256], sizes = [16, 128], strides = [1, 1]} : vector<16x384xf32> to vector<16x128xf32>
    %48 = arith.truncf %47 : vector<16x128xf32> to vector<16x128xbf16>
    %49 = vector.shape_cast %48 : vector<16x128xbf16> to vector<16x4x32xbf16>
    %50 = tpu.transpose %49, [1, 0, 2] : vector<16x4x32xbf16> -> vector<4x16x32xbf16>
    "tpu.trace_start"() <{level = 10 : i32, message = "htd,hkd->htk"}> : () -> ()
    %cst_20 = arith.constant dense<0.000000e+00> : vector<4x16x16xf32>
    %51 = tpu.matmul %42, %46, %cst_20 {dimension_numbers = #tpu.dot_dimension_numbers<[2], [2], [1], [1], [0, 0, 0, 1, 1, 1], [0], [0]>} : vector<4x16x32xbf16>, vector<4x16x32xbf16>, vector<4x16x16xf32> -> vector<4x16x16xf32>
    "tpu.trace_stop"() : () -> ()
    %52 = arith.addf %51, %28 : vector<4x16x16xf32>
    %cst_21 = arith.constant dense<0xFF800000> : vector<4x16xf32>
    %53 = vector.multi_reduction <maximumf>, %52, %cst_21 [2] : vector<4x16x16xf32> to vector<4x16xf32>
    %54 = vector.shape_cast %53 : vector<4x16xf32> to vector<4x16x1xf32>
    %55 = vector.broadcast %54 : vector<4x16x1xf32> to vector<4x16x16xf32>
    %56 = arith.subf %52, %55 : vector<4x16x16xf32>
    %57 = math.exp %56 : vector<4x16x16xf32>
    %cst_22 = arith.constant dense<0.000000e+00> : vector<4x16xf32>
    %58 = vector.multi_reduction <add>, %57, %cst_22 [2] : vector<4x16x16xf32> to vector<4x16xf32>
    %59 = vector.shape_cast %58 : vector<4x16xf32> to vector<4x16x1xf32>
    %60 = tpu.reciprocal %59 {approx = true} : vector<4x16x1xf32> -> vector<4x16x1xf32>
    %61 = vector.broadcast %60 : vector<4x16x1xf32> to vector<4x16x16xf32>
    %62 = arith.mulf %57, %61 : vector<4x16x16xf32>
    %63 = arith.truncf %62 : vector<4x16x16xf32> to vector<4x16x16xbf16>
    "tpu.trace_start"() <{level = 10 : i32, message = "htk,hkd->htd"}> : () -> ()
    %cst_23 = arith.constant dense<0.000000e+00> : vector<4x16x32xf32>
    %64 = tpu.matmul %63, %50, %cst_23 {dimension_numbers = #tpu.dot_dimension_numbers<[2], [1], [1], [2], [0, 0, 0, 1, 1, 2], [0], [0]>} : vector<4x16x16xbf16>, vector<4x16x32xbf16>, vector<4x16x32xf32> -> vector<4x16x32xf32>
    "tpu.trace_stop"() : () -> ()
    %65 = tpu.transpose %64, [1, 0, 2] : vector<4x16x32xf32> -> vector<16x4x32xf32>
    %66 = vector.shape_cast %65 : vector<16x4x32xf32> to vector<16x128xf32>
    %67 = arith.truncf %66 : vector<16x128xf32> to vector<16x128xbf16>
    %c0_24 = arith.constant 0 : index
    %c0_25 = arith.constant 0 : index
    %c0_26 = arith.constant 0 : index
    %68 = vector.load %arg5[%c0_24, %c0_25, %c0_26] : memref<2x128x128xbf16, #tpu.memory_space<vmem>>, vector<1x128x128xbf16>
    %69 = vector.shape_cast %68 : vector<1x128x128xbf16> to vector<128x128xbf16>
    %cst_27 = arith.constant dense<0.000000e+00> : vector<16x128xf32>
    %70 = tpu.matmul %67, %69, %cst_27 {dimension_numbers = #tpu.dot_dimension_numbers<[1], [0], [0], [1], [0, 0, 1, 1], [], []>} : vector<16x128xbf16>, vector<128x128xbf16>, vector<16x128xf32> -> vector<16x128xf32>
    %71 = vector.extract_strided_slice %30 {offsets = [0, 0], sizes = [1, 128], strides = [1, 1]} : vector<6x128xf32> to vector<1x128xf32>
    %72 = vector.broadcast %71 : vector<1x128xf32> to vector<16x128xf32>
    %73 = arith.addf %70, %72 : vector<16x128xf32>
    %74 = arith.addf %73, %24 : vector<16x128xf32>
    %75 = vector.extract_strided_slice %30 {offsets = [1, 0], sizes = [1, 128], strides = [1, 1]} : vector<6x128xf32> to vector<1x128xf32>
    %76 = vector.extract_strided_slice %30 {offsets = [2, 0], sizes = [1, 128], strides = [1, 1]} : vector<6x128xf32> to vector<1x128xf32>
    %cst_28 = arith.constant dense<0.000000e+00> : vector<16xf32>
    %77 = vector.multi_reduction <add>, %74, %cst_28 [1] : vector<16x128xf32> to vector<16xf32>
    %78 = vector.shape_cast %77 : vector<16xf32> to vector<16x1xf32>
    %cst_29 = arith.constant 1.280000e+02 : f32
    %79 = vector.broadcast %cst_29 : f32 to vector<16x1xf32>
    %80 = arith.divf %78, %79 : vector<16x1xf32>
    %81 = arith.mulf %74, %74 : vector<16x128xf32>
    %cst_30 = arith.constant dense<0.000000e+00> : vector<16xf32>
    %82 = vector.multi_reduction <add>, %81, %cst_30 [1] : vector<16x128xf32> to vector<16xf32>
    %83 = vector.shape_cast %82 : vector<16xf32> to vector<16x1xf32>
    %cst_31 = arith.constant 1.280000e+02 : f32
    %84 = vector.broadcast %cst_31 : f32 to vector<16x1xf32>
    %85 = arith.divf %83, %84 : vector<16x1xf32>
    %86 = arith.mulf %80, %80 : vector<16x1xf32>
    %87 = arith.subf %85, %86 : vector<16x1xf32>
    %88 = vector.broadcast %80 : vector<16x1xf32> to vector<16x128xf32>
    %89 = arith.subf %74, %88 : vector<16x128xf32>
    %cst_32 = arith.constant 9.99999974E-6 : f32
    %90 = vector.broadcast %cst_32 : f32 to vector<16x1xf32>
    %91 = arith.addf %87, %90 : vector<16x1xf32>
    %92 = math.rsqrt %91 : vector<16x1xf32>
    %93 = vector.broadcast %92 : vector<16x1xf32> to vector<16x128xf32>
    %94 = arith.mulf %89, %93 : vector<16x128xf32>
    %95 = vector.broadcast %75 : vector<1x128xf32> to vector<16x128xf32>
    %96 = arith.mulf %94, %95 : vector<16x128xf32>
    %97 = vector.broadcast %76 : vector<1x128xf32> to vector<16x128xf32>
    %98 = arith.addf %96, %97 : vector<16x128xf32>
    %99 = arith.truncf %98 : vector<16x128xf32> to vector<16x128xbf16>
    %c0_33 = arith.constant 0 : index
    %c0_34 = arith.constant 0 : index
    %c0_35 = arith.constant 0 : index
    %100 = vector.load %arg6[%c0_33, %c0_34, %c0_35] : memref<2x128x256xbf16, #tpu.memory_space<vmem>>, vector<1x128x256xbf16>
    %101 = vector.shape_cast %100 : vector<1x128x256xbf16> to vector<128x256xbf16>
    %cst_36 = arith.constant dense<0.000000e+00> : vector<16x256xf32>
    %102 = tpu.matmul %99, %101, %cst_36 {dimension_numbers = #tpu.dot_dimension_numbers<[1], [0], [0], [1], [0, 0, 1, 1], [], []>} : vector<16x128xbf16>, vector<128x256xbf16>, vector<16x256xf32> -> vector<16x256xf32>
    %c0_37 = arith.constant 0 : index
    %c0_38 = arith.constant 0 : index
    %c0_39 = arith.constant 0 : index
    %103 = vector.load %arg7[%c0_37, %c0_38, %c0_39] : memref<2x1x256xf32, #tpu.memory_space<vmem>>, vector<1x1x256xf32>
    %104 = vector.shape_cast %103 : vector<1x1x256xf32> to vector<1x256xf32>
    %105 = vector.broadcast %104 : vector<1x256xf32> to vector<16x256xf32>
    %106 = arith.addf %102, %105 : vector<16x256xf32>
    %107 = arith.mulf %106, %106 : vector<16x256xf32>
    %108 = arith.mulf %106, %107 : vector<16x256xf32>
    %cst_40 = arith.constant 4.471500e-02 : f32
    %109 = vector.broadcast %cst_40 : f32 to vector<16x256xf32>
    %110 = arith.mulf %109, %108 : vector<16x256xf32>
    %111 = arith.addf %106, %110 : vector<16x256xf32>
    %cst_41 = arith.constant 0.797884583 : f32
    %112 = vector.broadcast %cst_41 : f32 to vector<16x256xf32>
    %113 = arith.mulf %112, %111 : vector<16x256xf32>
    %114 = math.tanh %113 : vector<16x256xf32>
    %cst_42 = arith.constant 1.000000e+00 : f32
    %115 = vector.broadcast %cst_42 : f32 to vector<16x256xf32>
    %116 = arith.addf %115, %114 : vector<16x256xf32>
    %cst_43 = arith.constant 5.000000e-01 : f32
    %117 = vector.broadcast %cst_43 : f32 to vector<16x256xf32>
    %118 = arith.mulf %117, %116 : vector<16x256xf32>
    %119 = arith.mulf %106, %118 : vector<16x256xf32>
    %120 = arith.truncf %119 : vector<16x256xf32> to vector<16x256xbf16>
    %c0_44 = arith.constant 0 : index
    %c0_45 = arith.constant 0 : index
    %c0_46 = arith.constant 0 : index
    %121 = vector.load %arg8[%c0_44, %c0_45, %c0_46] : memref<2x256x128xbf16, #tpu.memory_space<vmem>>, vector<1x256x128xbf16>
    %122 = vector.shape_cast %121 : vector<1x256x128xbf16> to vector<256x128xbf16>
    %cst_47 = arith.constant dense<0.000000e+00> : vector<16x128xf32>
    %123 = tpu.matmul %120, %122, %cst_47 {dimension_numbers = #tpu.dot_dimension_numbers<[1], [0], [0], [1], [0, 0, 1, 1], [], []>} : vector<16x256xbf16>, vector<256x128xbf16>, vector<16x128xf32> -> vector<16x128xf32>
    %124 = vector.extract_strided_slice %30 {offsets = [3, 0], sizes = [1, 128], strides = [1, 1]} : vector<6x128xf32> to vector<1x128xf32>
    %125 = vector.broadcast %124 : vector<1x128xf32> to vector<16x128xf32>
    %126 = arith.addf %123, %125 : vector<16x128xf32>
    %127 = arith.addf %126, %98 : vector<16x128xf32>
    %128 = vector.extract_strided_slice %30 {offsets = [4, 0], sizes = [1, 128], strides = [1, 1]} : vector<6x128xf32> to vector<1x128xf32>
    %129 = vector.extract_strided_slice %30 {offsets = [5, 0], sizes = [1, 128], strides = [1, 1]} : vector<6x128xf32> to vector<1x128xf32>
    %cst_48 = arith.constant dense<0.000000e+00> : vector<16xf32>
    %130 = vector.multi_reduction <add>, %127, %cst_48 [1] : vector<16x128xf32> to vector<16xf32>
    %131 = vector.shape_cast %130 : vector<16xf32> to vector<16x1xf32>
    %cst_49 = arith.constant 1.280000e+02 : f32
    %132 = vector.broadcast %cst_49 : f32 to vector<16x1xf32>
    %133 = arith.divf %131, %132 : vector<16x1xf32>
    %134 = arith.mulf %127, %127 : vector<16x128xf32>
    %cst_50 = arith.constant dense<0.000000e+00> : vector<16xf32>
    %135 = vector.multi_reduction <add>, %134, %cst_50 [1] : vector<16x128xf32> to vector<16xf32>
    %136 = vector.shape_cast %135 : vector<16xf32> to vector<16x1xf32>
    %cst_51 = arith.constant 1.280000e+02 : f32
    %137 = vector.broadcast %cst_51 : f32 to vector<16x1xf32>
    %138 = arith.divf %136, %137 : vector<16x1xf32>
    %139 = arith.mulf %133, %133 : vector<16x1xf32>
    %140 = arith.subf %138, %139 : vector<16x1xf32>
    %141 = vector.broadcast %133 : vector<16x1xf32> to vector<16x128xf32>
    %142 = arith.subf %127, %141 : vector<16x128xf32>
    %cst_52 = arith.constant 9.99999974E-6 : f32
    %143 = vector.broadcast %cst_52 : f32 to vector<16x1xf32>
    %144 = arith.addf %140, %143 : vector<16x1xf32>
    %145 = math.rsqrt %144 : vector<16x1xf32>
    %146 = vector.broadcast %145 : vector<16x1xf32> to vector<16x128xf32>
    %147 = arith.mulf %142, %146 : vector<16x128xf32>
    %148 = vector.broadcast %128 : vector<1x128xf32> to vector<16x128xf32>
    %149 = arith.mulf %147, %148 : vector<16x128xf32>
    %150 = vector.broadcast %129 : vector<1x128xf32> to vector<16x128xf32>
    %151 = arith.addf %149, %150 : vector<16x128xf32>
    %c1_53 = arith.constant 1 : index
    %c0_54 = arith.constant 0 : index
    %c0_55 = arith.constant 0 : index
    %152 = vector.load %arg9[%c1_53, %c0_54, %c0_55] : memref<2x6x128xf32, #tpu.memory_space<vmem>>, vector<1x6x128xf32>
    %153 = vector.shape_cast %152 : vector<1x6x128xf32> to vector<6x128xf32>
    %154 = arith.truncf %151 : vector<16x128xf32> to vector<16x128xbf16>
    %c1_56 = arith.constant 1 : index
    %c0_57 = arith.constant 0 : index
    %c0_58 = arith.constant 0 : index
    %155 = vector.load %arg3[%c1_56, %c0_57, %c0_58] : memref<2x128x384xbf16, #tpu.memory_space<vmem>>, vector<1x128x384xbf16>
    %156 = vector.shape_cast %155 : vector<1x128x384xbf16> to vector<128x384xbf16>
    %cst_59 = arith.constant dense<0.000000e+00> : vector<16x384xf32>
    %157 = tpu.matmul %154, %156, %cst_59 {dimension_numbers = #tpu.dot_dimension_numbers<[1], [0], [0], [1], [0, 0, 1, 1], [], []>} : vector<16x128xbf16>, vector<128x384xbf16>, vector<16x384xf32> -> vector<16x384xf32>
    %c1_60 = arith.constant 1 : index
    %c0_61 = arith.constant 0 : index
    %c0_62 = arith.constant 0 : index
    %158 = vector.load %arg4[%c1_60, %c0_61, %c0_62] : memref<2x1x384xf32, #tpu.memory_space<vmem>>, vector<1x1x384xf32>
    %159 = vector.shape_cast %158 : vector<1x1x384xf32> to vector<1x384xf32>
    %160 = vector.broadcast %159 : vector<1x384xf32> to vector<16x384xf32>
    %161 = arith.addf %157, %160 : vector<16x384xf32>
    %162 = vector.extract_strided_slice %161 {offsets = [0, 0], sizes = [16, 128], strides = [1, 1]} : vector<16x384xf32> to vector<16x128xf32>
    %163 = arith.truncf %162 : vector<16x128xf32> to vector<16x128xbf16>
    %164 = vector.shape_cast %163 : vector<16x128xbf16> to vector<16x4x32xbf16>
    %165 = tpu.transpose %164, [1, 0, 2] : vector<16x4x32xbf16> -> vector<4x16x32xbf16>
    %166 = vector.extract_strided_slice %161 {offsets = [0, 128], sizes = [16, 128], strides = [1, 1]} : vector<16x384xf32> to vector<16x128xf32>
    %167 = arith.truncf %166 : vector<16x128xf32> to vector<16x128xbf16>
    %168 = vector.shape_cast %167 : vector<16x128xbf16> to vector<16x4x32xbf16>
    %169 = tpu.transpose %168, [1, 0, 2] : vector<16x4x32xbf16> -> vector<4x16x32xbf16>
    %170 = vector.extract_strided_slice %161 {offsets = [0, 256], sizes = [16, 128], strides = [1, 1]} : vector<16x384xf32> to vector<16x128xf32>
    %171 = arith.truncf %170 : vector<16x128xf32> to vector<16x128xbf16>
    %172 = vector.shape_cast %171 : vector<16x128xbf16> to vector<16x4x32xbf16>
    %173 = tpu.transpose %172, [1, 0, 2] : vector<16x4x32xbf16> -> vector<4x16x32xbf16>
    "tpu.trace_start"() <{level = 10 : i32, message = "htd,hkd->htk"}> : () -> ()
    %cst_63 = arith.constant dense<0.000000e+00> : vector<4x16x16xf32>
    %174 = tpu.matmul %165, %169, %cst_63 {dimension_numbers = #tpu.dot_dimension_numbers<[2], [2], [1], [1], [0, 0, 0, 1, 1, 1], [0], [0]>} : vector<4x16x32xbf16>, vector<4x16x32xbf16>, vector<4x16x16xf32> -> vector<4x16x16xf32>
    "tpu.trace_stop"() : () -> ()
    %175 = arith.addf %174, %28 : vector<4x16x16xf32>
    %cst_64 = arith.constant dense<0xFF800000> : vector<4x16xf32>
    %176 = vector.multi_reduction <maximumf>, %175, %cst_64 [2] : vector<4x16x16xf32> to vector<4x16xf32>
    %177 = vector.shape_cast %176 : vector<4x16xf32> to vector<4x16x1xf32>
    %178 = vector.broadcast %177 : vector<4x16x1xf32> to vector<4x16x16xf32>
    %179 = arith.subf %175, %178 : vector<4x16x16xf32>
    %180 = math.exp %179 : vector<4x16x16xf32>
    %cst_65 = arith.constant dense<0.000000e+00> : vector<4x16xf32>
    %181 = vector.multi_reduction <add>, %180, %cst_65 [2] : vector<4x16x16xf32> to vector<4x16xf32>
    %182 = vector.shape_cast %181 : vector<4x16xf32> to vector<4x16x1xf32>
    %183 = tpu.reciprocal %182 {approx = true} : vector<4x16x1xf32> -> vector<4x16x1xf32>
    %184 = vector.broadcast %183 : vector<4x16x1xf32> to vector<4x16x16xf32>
    %185 = arith.mulf %180, %184 : vector<4x16x16xf32>
    %186 = arith.truncf %185 : vector<4x16x16xf32> to vector<4x16x16xbf16>
    "tpu.trace_start"() <{level = 10 : i32, message = "htk,hkd->htd"}> : () -> ()
    %cst_66 = arith.constant dense<0.000000e+00> : vector<4x16x32xf32>
    %187 = tpu.matmul %186, %173, %cst_66 {dimension_numbers = #tpu.dot_dimension_numbers<[2], [1], [1], [2], [0, 0, 0, 1, 1, 2], [0], [0]>} : vector<4x16x16xbf16>, vector<4x16x32xbf16>, vector<4x16x32xf32> -> vector<4x16x32xf32>
    "tpu.trace_stop"() : () -> ()
    %188 = tpu.transpose %187, [1, 0, 2] : vector<4x16x32xf32> -> vector<16x4x32xf32>
    %189 = vector.shape_cast %188 : vector<16x4x32xf32> to vector<16x128xf32>
    %190 = arith.truncf %189 : vector<16x128xf32> to vector<16x128xbf16>
    %c1_67 = arith.constant 1 : index
    %c0_68 = arith.constant 0 : index
    %c0_69 = arith.constant 0 : index
    %191 = vector.load %arg5[%c1_67, %c0_68, %c0_69] : memref<2x128x128xbf16, #tpu.memory_space<vmem>>, vector<1x128x128xbf16>
    %192 = vector.shape_cast %191 : vector<1x128x128xbf16> to vector<128x128xbf16>
    %cst_70 = arith.constant dense<0.000000e+00> : vector<16x128xf32>
    %193 = tpu.matmul %190, %192, %cst_70 {dimension_numbers = #tpu.dot_dimension_numbers<[1], [0], [0], [1], [0, 0, 1, 1], [], []>} : vector<16x128xbf16>, vector<128x128xbf16>, vector<16x128xf32> -> vector<16x128xf32>
    %194 = vector.extract_strided_slice %153 {offsets = [0, 0], sizes = [1, 128], strides = [1, 1]} : vector<6x128xf32> to vector<1x128xf32>
    %195 = vector.broadcast %194 : vector<1x128xf32> to vector<16x128xf32>
    %196 = arith.addf %193, %195 : vector<16x128xf32>
    %197 = arith.addf %196, %151 : vector<16x128xf32>
    %198 = vector.extract_strided_slice %153 {offsets = [1, 0], sizes = [1, 128], strides = [1, 1]} : vector<6x128xf32> to vector<1x128xf32>
    %199 = vector.extract_strided_slice %153 {offsets = [2, 0], sizes = [1, 128], strides = [1, 1]} : vector<6x128xf32> to vector<1x128xf32>
    %cst_71 = arith.constant dense<0.000000e+00> : vector<16xf32>
    %200 = vector.multi_reduction <add>, %197, %cst_71 [1] : vector<16x128xf32> to vector<16xf32>
    %201 = vector.shape_cast %200 : vector<16xf32> to vector<16x1xf32>
    %cst_72 = arith.constant 1.280000e+02 : f32
    %202 = vector.broadcast %cst_72 : f32 to vector<16x1xf32>
    %203 = arith.divf %201, %202 : vector<16x1xf32>
    %204 = arith.mulf %197, %197 : vector<16x128xf32>
    %cst_73 = arith.constant dense<0.000000e+00> : vector<16xf32>
    %205 = vector.multi_reduction <add>, %204, %cst_73 [1] : vector<16x128xf32> to vector<16xf32>
    %206 = vector.shape_cast %205 : vector<16xf32> to vector<16x1xf32>
    %cst_74 = arith.constant 1.280000e+02 : f32
    %207 = vector.broadcast %cst_74 : f32 to vector<16x1xf32>
    %208 = arith.divf %206, %207 : vector<16x1xf32>
    %209 = arith.mulf %203, %203 : vector<16x1xf32>
    %210 = arith.subf %208, %209 : vector<16x1xf32>
    %211 = vector.broadcast %203 : vector<16x1xf32> to vector<16x128xf32>
    %212 = arith.subf %197, %211 : vector<16x128xf32>
    %cst_75 = arith.constant 9.99999974E-6 : f32
    %213 = vector.broadcast %cst_75 : f32 to vector<16x1xf32>
    %214 = arith.addf %210, %213 : vector<16x1xf32>
    %215 = math.rsqrt %214 : vector<16x1xf32>
    %216 = vector.broadcast %215 : vector<16x1xf32> to vector<16x128xf32>
    %217 = arith.mulf %212, %216 : vector<16x128xf32>
    %218 = vector.broadcast %198 : vector<1x128xf32> to vector<16x128xf32>
    %219 = arith.mulf %217, %218 : vector<16x128xf32>
    %220 = vector.broadcast %199 : vector<1x128xf32> to vector<16x128xf32>
    %221 = arith.addf %219, %220 : vector<16x128xf32>
    %222 = arith.truncf %221 : vector<16x128xf32> to vector<16x128xbf16>
    %c1_76 = arith.constant 1 : index
    %c0_77 = arith.constant 0 : index
    %c0_78 = arith.constant 0 : index
    %223 = vector.load %arg6[%c1_76, %c0_77, %c0_78] : memref<2x128x256xbf16, #tpu.memory_space<vmem>>, vector<1x128x256xbf16>
    %224 = vector.shape_cast %223 : vector<1x128x256xbf16> to vector<128x256xbf16>
    %cst_79 = arith.constant dense<0.000000e+00> : vector<16x256xf32>
    %225 = tpu.matmul %222, %224, %cst_79 {dimension_numbers = #tpu.dot_dimension_numbers<[1], [0], [0], [1], [0, 0, 1, 1], [], []>} : vector<16x128xbf16>, vector<128x256xbf16>, vector<16x256xf32> -> vector<16x256xf32>
    %c1_80 = arith.constant 1 : index
    %c0_81 = arith.constant 0 : index
    %c0_82 = arith.constant 0 : index
    %226 = vector.load %arg7[%c1_80, %c0_81, %c0_82] : memref<2x1x256xf32, #tpu.memory_space<vmem>>, vector<1x1x256xf32>
    %227 = vector.shape_cast %226 : vector<1x1x256xf32> to vector<1x256xf32>
    %228 = vector.broadcast %227 : vector<1x256xf32> to vector<16x256xf32>
    %229 = arith.addf %225, %228 : vector<16x256xf32>
    %230 = arith.mulf %229, %229 : vector<16x256xf32>
    %231 = arith.mulf %229, %230 : vector<16x256xf32>
    %cst_83 = arith.constant 4.471500e-02 : f32
    %232 = vector.broadcast %cst_83 : f32 to vector<16x256xf32>
    %233 = arith.mulf %232, %231 : vector<16x256xf32>
    %234 = arith.addf %229, %233 : vector<16x256xf32>
    %cst_84 = arith.constant 0.797884583 : f32
    %235 = vector.broadcast %cst_84 : f32 to vector<16x256xf32>
    %236 = arith.mulf %235, %234 : vector<16x256xf32>
    %237 = math.tanh %236 : vector<16x256xf32>
    %cst_85 = arith.constant 1.000000e+00 : f32
    %238 = vector.broadcast %cst_85 : f32 to vector<16x256xf32>
    %239 = arith.addf %238, %237 : vector<16x256xf32>
    %cst_86 = arith.constant 5.000000e-01 : f32
    %240 = vector.broadcast %cst_86 : f32 to vector<16x256xf32>
    %241 = arith.mulf %240, %239 : vector<16x256xf32>
    %242 = arith.mulf %229, %241 : vector<16x256xf32>
    %243 = arith.truncf %242 : vector<16x256xf32> to vector<16x256xbf16>
    %c1_87 = arith.constant 1 : index
    %c0_88 = arith.constant 0 : index
    %c0_89 = arith.constant 0 : index
    %244 = vector.load %arg8[%c1_87, %c0_88, %c0_89] : memref<2x256x128xbf16, #tpu.memory_space<vmem>>, vector<1x256x128xbf16>
    %245 = vector.shape_cast %244 : vector<1x256x128xbf16> to vector<256x128xbf16>
    %cst_90 = arith.constant dense<0.000000e+00> : vector<16x128xf32>
    %246 = tpu.matmul %243, %245, %cst_90 {dimension_numbers = #tpu.dot_dimension_numbers<[1], [0], [0], [1], [0, 0, 1, 1], [], []>} : vector<16x256xbf16>, vector<256x128xbf16>, vector<16x128xf32> -> vector<16x128xf32>
    %247 = vector.extract_strided_slice %153 {offsets = [3, 0], sizes = [1, 128], strides = [1, 1]} : vector<6x128xf32> to vector<1x128xf32>
    %248 = vector.broadcast %247 : vector<1x128xf32> to vector<16x128xf32>
    %249 = arith.addf %246, %248 : vector<16x128xf32>
    %250 = arith.addf %249, %221 : vector<16x128xf32>
    %251 = vector.extract_strided_slice %153 {offsets = [4, 0], sizes = [1, 128], strides = [1, 1]} : vector<6x128xf32> to vector<1x128xf32>
    %252 = vector.extract_strided_slice %153 {offsets = [5, 0], sizes = [1, 128], strides = [1, 1]} : vector<6x128xf32> to vector<1x128xf32>
    %cst_91 = arith.constant dense<0.000000e+00> : vector<16xf32>
    %253 = vector.multi_reduction <add>, %250, %cst_91 [1] : vector<16x128xf32> to vector<16xf32>
    %254 = vector.shape_cast %253 : vector<16xf32> to vector<16x1xf32>
    %cst_92 = arith.constant 1.280000e+02 : f32
    %255 = vector.broadcast %cst_92 : f32 to vector<16x1xf32>
    %256 = arith.divf %254, %255 : vector<16x1xf32>
    %257 = arith.mulf %250, %250 : vector<16x128xf32>
    %cst_93 = arith.constant dense<0.000000e+00> : vector<16xf32>
    %258 = vector.multi_reduction <add>, %257, %cst_93 [1] : vector<16x128xf32> to vector<16xf32>
    %259 = vector.shape_cast %258 : vector<16xf32> to vector<16x1xf32>
    %cst_94 = arith.constant 1.280000e+02 : f32
    %260 = vector.broadcast %cst_94 : f32 to vector<16x1xf32>
    %261 = arith.divf %259, %260 : vector<16x1xf32>
    %262 = arith.mulf %256, %256 : vector<16x1xf32>
    %263 = arith.subf %261, %262 : vector<16x1xf32>
    %264 = vector.broadcast %256 : vector<16x1xf32> to vector<16x128xf32>
    %265 = arith.subf %250, %264 : vector<16x128xf32>
    %cst_95 = arith.constant 9.99999974E-6 : f32
    %266 = vector.broadcast %cst_95 : f32 to vector<16x1xf32>
    %267 = arith.addf %263, %266 : vector<16x1xf32>
    %268 = math.rsqrt %267 : vector<16x1xf32>
    %269 = vector.broadcast %268 : vector<16x1xf32> to vector<16x128xf32>
    %270 = arith.mulf %265, %269 : vector<16x128xf32>
    %271 = vector.broadcast %251 : vector<1x128xf32> to vector<16x128xf32>
    %272 = arith.mulf %270, %271 : vector<16x128xf32>
    %273 = vector.broadcast %252 : vector<1x128xf32> to vector<16x128xf32>
    %274 = arith.addf %272, %273 : vector<16x128xf32>
    %275 = vector.shape_cast %274 : vector<16x128xf32> to vector<2x8x128xf32>
    %276 = vector.extract_strided_slice %275 {offsets = [0, 0, 0], sizes = [2, 1, 128], strides = [1, 1, 1]} : vector<2x8x128xf32> to vector<2x1x128xf32>
    %277 = vector.shape_cast %276 : vector<2x1x128xf32> to vector<2x128xf32>
    %278 = arith.truncf %277 : vector<2x128xf32> to vector<2x128xbf16>
    %c0_96 = arith.constant 0 : index
    %c0_97 = arith.constant 0 : index
    %279 = vector.load %arg10[%c0_96, %c0_97] : memref<128x128xbf16, #tpu.memory_space<vmem>>, vector<128x128xbf16>
    %cst_98 = arith.constant dense<0.000000e+00> : vector<2x128xf32>
    %280 = tpu.matmul %278, %279, %cst_98 {dimension_numbers = #tpu.dot_dimension_numbers<[1], [0], [0], [1], [0, 0, 1, 1], [], []>} : vector<2x128xbf16>, vector<128x128xbf16>, vector<2x128xf32> -> vector<2x128xf32>
    %c0_99 = arith.constant 0 : index
    %c0_100 = arith.constant 0 : index
    %281 = vector.load %arg12[%c0_99, %c0_100] : memref<2x128xf32, #tpu.memory_space<vmem>>, vector<1x128xf32>
    %282 = vector.broadcast %281 : vector<1x128xf32> to vector<2x128xf32>
    %283 = arith.addf %280, %282 : vector<2x128xf32>
    %284 = math.tanh %283 : vector<2x128xf32>
    %285 = arith.truncf %284 : vector<2x128xf32> to vector<2x128xbf16>
    %c0_101 = arith.constant 0 : index
    %c0_102 = arith.constant 0 : index
    %286 = vector.load %arg11[%c0_101, %c0_102] : memref<128x128xbf16, #tpu.memory_space<vmem>>, vector<128x128xbf16>
    %cst_103 = arith.constant dense<0.000000e+00> : vector<2x128xf32>
    %287 = tpu.matmul %285, %286, %cst_103 {dimension_numbers = #tpu.dot_dimension_numbers<[1], [0], [0], [1], [0, 0, 1, 1], [], []>} : vector<2x128xbf16>, vector<128x128xbf16>, vector<2x128xf32> -> vector<2x128xf32>
    %c1_104 = arith.constant 1 : index
    %c0_105 = arith.constant 0 : index
    %288 = vector.load %arg12[%c1_104, %c0_105] : memref<2x128xf32, #tpu.memory_space<vmem>>, vector<1x128xf32>
    %289 = vector.broadcast %288 : vector<1x128xf32> to vector<2x128xf32>
    %290 = arith.addf %287, %289 : vector<2x128xf32>
    %c0_106 = arith.constant 0 : index
    %c0_107 = arith.constant 0 : index
    %291 = vector.load %arg13[%c0_106, %c0_107] : memref<2x128xf32, #tpu.memory_space<vmem>>, vector<2x128xf32>
    tpu.vector_store %arg13[%c0_106, %c0_107], %290 {strides = array<i32>} : memref<2x128xf32, #tpu.memory_space<vmem>>, vector<2x128xf32>,
    return
  }
}

</mosaic_0001>

<llo_original>
// kernel: codebert_classifier_forward.1
$region0: #{codebert_classifier_forward.1}
  #allocation0 [shape = 'u32[]', space=smem, size = 0x4, offset = 0x4, fixed_abs, tag = 'smem constant byte address 0x4 - core index']
  #allocation1 [shape = 'u32[144,128]{1,0:T(1,128)}', space=vmem, size = 0x12000, scoped, tag = 'internal scratch']
  %s0 = inlined_call_operand.vmem [shape: f32[16,128], index: 0, kind: input, shape index: {}]
  %s1 = inlined_call_operand.vmem [shape: f32[16,16], index: 1, kind: input, shape index: {}]
  %s2 = inlined_call_operand.vmem [shape: f32[2,128], index: 2, kind: input, shape index: {}]
  %s3 = inlined_call_operand.hbm [shape: bf16[2,128,384], index: 3, kind: input, shape index: {}]
  %s4 = inlined_call_operand.vmem [shape: f32[2,1,384], index: 4, kind: input, shape index: {}]
  %s5 = inlined_call_operand.vmem [shape: bf16[2,128,128], index: 5, kind: input, shape index: {}]
  %s6 = inlined_call_operand.vmem [shape: bf16[2,128,256], index: 6, kind: input, shape index: {}]
  %s7 = inlined_call_operand.vmem [shape: f32[2,1,256], index: 7, kind: input, shape index: {}]
  %s8 = inlined_call_operand.hbm [shape: bf16[2,256,128], index: 8, kind: input, shape index: {}]
  %s9 = inlined_call_operand.vmem [shape: f32[2,6,128], index: 9, kind: input, shape index: {}]
  %s10 = inlined_call_operand.hbm [shape: bf16[128,128], index: 10, kind: input, shape index: {}]
  %s11 = inlined_call_operand.hbm [shape: bf16[128,128], index: 11, kind: input, shape index: {}]
  %s12 = inlined_call_operand.vmem [shape: f32[2,128], index: 12, kind: input, shape index: {}]
  %s13 = inlined_call_operand.hbm [shape: f32[2,128], index: 13, kind: output, shape index: {}]
  %s14 = sld [smem:[#allocation0]]
  $region78: #{codebert_classifier_forward.1} parent=0
    _
  %s16 = ssub.s32 1, %s14
  %s17 = scalar_select 0, %s16, %s14
  $region1: #{codebert_classifier_forward.1} parent=0
    #allocation2 [shape = 'u8[196608]{0}', space=vmem, size = 0x30000, scoped, tag = 'input window, operand 3, single buffered']
    #allocation3 [shape = 's32[1]{0}', space=sflag, size = 0x4, scoped, tag = 'scoped memory for codebert_classifier_forward.1']
    #allocation4 [shape = 's32[1]{0}', space=sflag, size = 0x4, scoped, tag = 'scoped memory for codebert_classifier_forward.1']
    #allocation5 [shape = 'u8[131072]{0}', space=vmem, size = 0x20000, scoped, tag = 'input window, operand 8, single buffered']
    #allocation6 [shape = 's32[1]{0}', space=sflag, size = 0x4, scoped, tag = 'scoped memory for codebert_classifier_forward.1']
    #allocation7 [shape = 'u8[32768]{0}', space=vmem, size = 0x8000, scoped, tag = 'input window, operand 10, single buffered']
    #allocation8 [shape = 'u8[32768]{0}', space=vmem, size = 0x8000, scoped, tag = 'input window, operand 11, single buffered']
    #allocation9 [shape = 's32[1]{0}', space=sflag, size = 0x4, scoped, tag = 'scoped memory for codebert_classifier_forward.1']
    #allocation10 [shape = 'u8[1024]{0}', space=vmem, size = 0x400, scoped, tag = 'output window, operand 0, single buffered']
    %18 = vsyncpa [#allocation3], 0
    %19 = vsyncpa [#allocation6], 0
    %20 = vsyncpa [#allocation9], 0
    %21 = vsyncpa [#allocation4], 0
    // Predicated region
    $region2: #{codebert_classifier_forward.1} parent=1 // pred_check
      _
    $region3: #{codebert_classifier_forward.1} parent=1 // pred_check_branch
      %23 = sbr.rel (0) target = $region5
    $region4: #{codebert_classifier_forward.1} parent=1 // pred_region
      _
    $region5: #{codebert_classifier_forward.1} parent=1 // pred_fallthru
      _
    // Predicated region
    $region6: #{codebert_classifier_forward.1} parent=1 // pred_check
      _
    $region7: #{codebert_classifier_forward.1} parent=1 // pred_check_branch
      %25 = sbr.rel (0) target = $region9
    $region8: #{codebert_classifier_forward.1} parent=1 // pred_region
      _
    $region9: #{codebert_classifier_forward.1} parent=1 // pred_fallthru
      _
    // Predicated region
    $region10: #{codebert_classifier_forward.1} parent=1 // pred_check
      _
    $region11: #{codebert_classifier_forward.1} parent=1 // pred_check_branch
      %27 = sbr.rel (0) target = $region13
    $region12: #{codebert_classifier_forward.1} parent=1 // pred_region
      _
    $region13: #{codebert_classifier_forward.1} parent=1 // pred_fallthru
      _
    // Predicated region
    $region14: #{codebert_classifier_forward.1} parent=1 // pred_check
      _
    $region15: #{codebert_classifier_forward.1} parent=1 // pred_check_branch
      %29 = sbr.rel (0) target = $region17
    $region16: #{codebert_classifier_forward.1} parent=1 // pred_region
      %s31 = ssub.s32 6144, 6144
      %32 = vsyncadd [#allocation3], %s31
      %s33 = sshll.u32 [#allocation2], 4
      %s34 = int_to_ptr.vmem [resolvable:$true] %s33
      %39 = dma.hbm_to_vmem [thread:$0]  %s3, 6144, %s34, [#allocation3], 192, 192, 12
    $region17: #{codebert_classifier_forward.1} parent=1 // pred_fallthru
      _
    // Predicated region
    $region18: #{codebert_classifier_forward.1} parent=1 // pred_check
      _
    $region19: #{codebert_classifier_forward.1} parent=1 // pred_check_branch
      %41 = sbr.rel (0) target = $region21
    $region20: #{codebert_classifier_forward.1} parent=1 // pred_region
      _
    $region21: #{codebert_classifier_forward.1} parent=1 // pred_fallthru
      _
    // Predicated region
    $region22: #{codebert_classifier_forward.1} parent=1 // pred_check
      _
    $region23: #{codebert_classifier_forward.1} parent=1 // pred_check_branch
      %43 = sbr.rel (0) target = $region25
    $region24: #{codebert_classifier_forward.1} parent=1 // pred_region
      _
    $region25: #{codebert_classifier_forward.1} parent=1 // pred_fallthru
      _
    // Predicated region
    $region26: #{codebert_classifier_forward.1} parent=1 // pred_check
      _
    $region27: #{codebert_classifier_forward.1} parent=1 // pred_check_branch
      %45 = sbr.rel (0) target = $region29
    $region28: #{codebert_classifier_forward.1} parent=1 // pred_region
      _
    $region29: #{codebert_classifier_forward.1} parent=1 // pred_fallthru
      _
    // Predicated region
    $region30: #{codebert_classifier_forward.1} parent=1 // pred_check
      _
    $region31: #{codebert_classifier_forward.1} parent=1 // pred_check_branch
      %47 = sbr.rel (0) target = $region33
    $region32: #{codebert_classifier_forward.1} parent=1 // pred_region
      _
    $region33: #{codebert_classifier_forward.1} parent=1 // pred_fallthru
      _
    // Predicated region
    $region34: #{codebert_classifier_forward.1} parent=1 // pred_check
      _
    $region35: #{codebert_classifier_forward.1} parent=1 // pred_check_branch
      %49 = sbr.rel (0) target = $region37
    $region36: #{codebert_classifier_forward.1} parent=1 // pred_region
      %s51 = ssub.s32 4096, 4096
      %52 = vsyncadd [#allocation6], %s51
      %s53 = sshll.u32 [#allocation5], 4
      %s54 = int_to_ptr.vmem [resolvable:$true] %s53
      %59 = dma.hbm_to_vmem [thread:$0]  %s8, 4096, %s54, [#allocation6], 64, 64, 4
    $region37: #{codebert_classifier_forward.1} parent=1 // pred_fallthru
      _
    // Predicated region
    $region38: #{codebert_classifier_forward.1} parent=1 // pred_check
      _
    $region39: #{codebert_classifier_forward.1} parent=1 // pred_check_branch
      %61 = sbr.rel (0) target = $region41
    $region40: #{codebert_classifier_forward.1} parent=1 // pred_region
      _
    $region41: #{codebert_classifier_forward.1} parent=1 // pred_fallthru
      _
    // Predicated region
    $region42: #{codebert_classifier_forward.1} parent=1 // pred_check
      _
    $region43: #{codebert_classifier_forward.1} parent=1 // pred_check_branch
      %63 = sbr.rel (0) target = $region45
    $region44: #{codebert_classifier_forward.1} parent=1 // pred_region
      %s65 = ssub.s32 1024, 1024
      %66 = vsyncadd [#allocation6], %s65
      %s67 = sshll.u32 [#allocation7], 4
      %s68 = int_to_ptr.vmem [resolvable:$true] %s67
      %73 = dma.hbm_to_vmem [thread:$0]  %s10, 1024, %s68, [#allocation6], 64, 64, 4
    $region45: #{codebert_classifier_forward.1} parent=1 // pred_fallthru
      _
    // Predicated region
    $region46: #{codebert_classifier_forward.1} parent=1 // pred_check
      _
    $region47: #{codebert_classifier_forward.1} parent=1 // pred_check_branch
      %75 = sbr.rel (0) target = $region49
    $region48: #{codebert_classifier_forward.1} parent=1 // pred_region
      %s77 = ssub.s32 1024, 1024
      %78 = vsyncadd [#allocation9], %s77
      %s79 = sshll.u32 [#allocation8], 4
      %s80 = int_to_ptr.vmem [resolvable:$true] %s79
      %85 = dma.hbm_to_vmem [thread:$0]  %s11, 1024, %s80, [#allocation9], 64, 64, 4
    $region49: #{codebert_classifier_forward.1} parent=1 // pred_fallthru
      _
    // Predicated region
    $region50: #{codebert_classifier_forward.1} parent=1 // pred_check
      _
    $region51: #{codebert_classifier_forward.1} parent=1 // pred_check_branch
      %87 = sbr.rel (0) target = $region53
    $region52: #{codebert_classifier_forward.1} parent=1 // pred_region
      _
    $region53: #{codebert_classifier_forward.1} parent=1 // pred_fallthru
      _
    // Predicated region
    $region54: #{codebert_classifier_forward.1} parent=1 // pred_check
      _
    $region55: #{codebert_classifier_forward.1} parent=1 // pred_check_branch
      %89 = sbr.rel (0) target = $region57
    $region56: #{codebert_classifier_forward.1} parent=1 // pred_region
      %90 = dma.done [#allocation3], 6144
    $region57: #{codebert_classifier_forward.1} parent=1 // pred_fallthru
      _
    // Predicated region
    $region58: #{codebert_classifier_forward.1} parent=1 // pred_check
      _
    $region59: #{codebert_classifier_forward.1} parent=1 // pred_check_branch
      %92 = sbr.rel (0) target = $region61
    $region60: #{codebert_classifier_forward.1} parent=1 // pred_region
      %93 = dma.done [#allocation6], 4096
    $region61: #{codebert_classifier_forward.1} parent=1 // pred_fallthru
      _
    // Predicated region
    $region62: #{codebert_classifier_forward.1} parent=1 // pred_check
      _
    $region63: #{codebert_classifier_forward.1} parent=1 // pred_check_branch
      %95 = sbr.rel (0) target = $region65
    $region64: #{codebert_classifier_forward.1} parent=1 // pred_region
      %96 = dma.done [#allocation6], 1024
    $region65: #{codebert_classifier_forward.1} parent=1 // pred_fallthru
      _
    // Predicated region
    $region66: #{codebert_classifier_forward.1} parent=1 // pred_check
      _
    $region67: #{codebert_classifier_forward.1} parent=1 // pred_check_branch
      %98 = sbr.rel (0) target = $region69
    $region68: #{codebert_classifier_forward.1} parent=1 // pred_region
      %99 = dma.done [#allocation9], 1024
    $region69: #{codebert_classifier_forward.1} parent=1 // pred_fallthru
      _
    %v101 = vld [vmem:[%s0] sm:$0xff]
    %v102 = vld [vmem:[%s0 + $0x8] sm:$0xff]
    %v103 = vld [vmem:[%s2] sm:$0x1]
    %v104 = vld [vmem:[%s2 + $0x1] sm:$0x1]
    %105 = vadd.xlane.f32.xlu0 %v101
    %v106 = vpop.xlane.xlu0 %105
    %107 = vadd.xlane.f32.xlu0 %v102
    %v108 = vpop.xlane.xlu0 %107
    %v109 = vrcp.pop 128.0
    %v110 = vmul.f32 %v106, %v109
    %v111 = vmul.f32 %v108, %v109
    %v112 = vmul.f32 %v101, %v101
    %v113 = vmul.f32 %v102, %v102
    %114 = vadd.xlane.f32.xlu0 %v112
    %v115 = vpop.xlane.xlu0 %114
    %116 = vadd.xlane.f32.xlu0 %v113
    %v117 = vpop.xlane.xlu0 %116
    %v118 = vmul.f32 %v115, %v109
    %v119 = vmul.f32 %v117, %v109
    %v120 = vmul.f32 %v110, %v110
    %v121 = vmul.f32 %v111, %v111
    %v122 = vsub.f32 %v118, %v120
    %v123 = vsub.f32 %v119, %v121
    %v124 = vsub.f32 %v101, %v110
    %v125 = vsub.f32 %v102, %v111
    %v126 = vadd.f32 %v122, 1e-05
    %v127 = vadd.f32 %v123, 1e-05
    %v128 = vrsqrt.pop %v126
    %v129 = vrsqrt.pop %v127
    %v130 = vmul.f32 %v124, %v128
    %v131 = vmul.f32 %v125, %v129
    %v132 = vlaneseq
    %v133 = vshrl.u32 %v132, 7
    %v134 = vsub.s32 0, %v133
    %v135 = vrot.slane %v103, %v134
    %v136 = vmul.f32 %v130, %v135
    %v137 = vmul.f32 %v131, %v135
    %v138 = vlaneseq
    %v139 = vshrl.u32 %v138, 7
    %v140 = vsub.s32 0, %v139
    %v141 = vrot.slane %v104, %v140
    %v142 = vadd.f32 %v136, %v141
    %v143 = vadd.f32 %v137, %v141
    %v144 = vld [vmem:[%s1] sm:$0xff]
    %v145 = vld [vmem:[%s1 + $0x8] sm:$0xff]
    %v146 = vld [vmem:[%s9] sm:$0x3f]
    %v147 = vpack.c.bf16 %v143, %v142
    %v148 = vld [vmem:[#allocation2] sm:$0xff]
    %v149 = vld [vmem:[#allocation2 + $0x8] sm:$0xf]
    %v150 = vld [vmem:[#allocation2 + $0xc] sm:$0xff]
    %v151 = vld [vmem:[#allocation2 + $0x14] sm:$0xf]
    %v152 = vld [vmem:[#allocation2 + $0x18] sm:$0xff]
    %v153 = vld [vmem:[#allocation2 + $0x20] sm:$0xf]
    %v154 = vld [vmem:[#allocation2 + $0x24] sm:$0xff]
    %v155 = vld [vmem:[#allocation2 + $0x2c] sm:$0xf]
    %v156 = vld [vmem:[#allocation2 + $0x30] sm:$0xff]
    %v157 = vld [vmem:[#allocation2 + $0x38] sm:$0xf]
    %v158 = vld [vmem:[#allocation2 + $0x3c] sm:$0xff]
    %v159 = vld [vmem:[#allocation2 + $0x44] sm:$0xf]
    %v160 = vld [vmem:[#allocation2 + $0x48] sm:$0xff]
    %v161 = vld [vmem:[#allocation2 + $0x50] sm:$0xf]
    %v162 = vld [vmem:[#allocation2 + $0x54] sm:$0xff]
    %v163 = vld [vmem:[#allocation2 + $0x5c] sm:$0xf]
    %v164 = vld [vmem:[#allocation2 + $0x60] sm:$0xff]
    %v165 = vld [vmem:[#allocation2 + $0x68] sm:$0xf]
    %v166 = vld [vmem:[#allocation2 + $0x6c] sm:$0xff]
    %v167 = vld [vmem:[#allocation2 + $0x74] sm:$0xf]
    %v168 = vld [vmem:[#allocation2 + $0x78] sm:$0xff]
    %v169 = vld [vmem:[#allocation2 + $0x80] sm:$0xf]
    %v170 = vld [vmem:[#allocation2 + $0x84] sm:$0xff]
    %v171 = vld [vmem:[#allocation2 + $0x8c] sm:$0xf]
    %v172 = vld [vmem:[#allocation2 + $0x90] sm:$0xff]
    %v173 = vld [vmem:[#allocation2 + $0x98] sm:$0xf]
    %v174 = vld [vmem:[#allocation2 + $0x9c] sm:$0xff]
    %v175 = vld [vmem:[#allocation2 + $0xa4] sm:$0xf]
    %v176 = vld [vmem:[#allocation2 + $0xa8] sm:$0xff]
    %v177 = vld [vmem:[#allocation2 + $0xb0] sm:$0xf]
    %v178 = vld [vmem:[#allocation2 + $0xb4] sm:$0xff]
    %v179 = vld [vmem:[#allocation2 + $0xbc] sm:$0xf]
    %v180 = vld [vmem:[%s4] sm:$0x7]
    %v182 = vlaneseq
    %v183 = vshrl.u32 %v182, 7
    %v184 = vsub.s32 0, %v183
    %v185 = vrot.slane %v180, %v184
    %v186 = vlaneseq
    %v187 = vshrl.u32 %v186, 7
    %v188 = vsub.s32 1, %v187
    %v189 = vrot.slane %v180, %v188
    %v190 = vlaneseq
    %v191 = vshrl.u32 %v190, 7
    %v192 = vsub.s32 2, %v191
    %v193 = vrot.slane %v180, %v192
    %v229 = vunpack.c.l.b16 %v148
    %v230 = vunpack.c.h.b16 %v148
    %v231 = vunpack.c.l.b16 %v149
    %v232 = vunpack.c.l.b16 %v150
    %v233 = vunpack.c.h.b16 %v150
    %v234 = vunpack.c.l.b16 %v151
    %v235 = vunpack.c.l.b16 %v152
    %v236 = vunpack.c.h.b16 %v152
    %v237 = vunpack.c.l.b16 %v153
    %v238 = vunpack.c.l.b16 %v154
    %v239 = vunpack.c.h.b16 %v154
    %v240 = vunpack.c.l.b16 %v155
    %v241 = vunpack.c.l.b16 %v156
    %v242 = vunpack.c.h.b16 %v156
    %v243 = vunpack.c.l.b16 %v157
    %v244 = vunpack.c.l.b16 %v158
    %v245 = vunpack.c.h.b16 %v158
    %v246 = vunpack.c.l.b16 %v159
    %v247 = vunpack.c.l.b16 %v160
    %v248 = vunpack.c.h.b16 %v160
    %v249 = vunpack.c.l.b16 %v161
    %v250 = vunpack.c.l.b16 %v162
    %v251 = vunpack.c.h.b16 %v162
    %v252 = vunpack.c.l.b16 %v163
    %v253 = vunpack.c.l.b16 %v164
    %v254 = vunpack.c.h.b16 %v164
    %v255 = vunpack.c.l.b16 %v165
    %v256 = vunpack.c.l.b16 %v166
    %v257 = vunpack.c.h.b16 %v166
    %v258 = vunpack.c.l.b16 %v167
    %v259 = vunpack.c.l.b16 %v168
    %v260 = vunpack.c.h.b16 %v168
    %v261 = vunpack.c.l.b16 %v169
    %v262 = vunpack.c.l.b16 %v170
    %v263 = vunpack.c.h.b16 %v170
    %v264 = vunpack.c.l.b16 %v171
    %v265 = vunpack.c.l.b16 %v172
    %v266 = vunpack.c.h.b16 %v172
    %v267 = vunpack.c.l.b16 %v173
    %v268 = vunpack.c.l.b16 %v174
    %v269 = vunpack.c.h.b16 %v174
    %v270 = vunpack.c.l.b16 %v175
    %v271 = vunpack.c.l.b16 %v176
    %v272 = vunpack.c.h.b16 %v176
    %v273 = vunpack.c.l.b16 %v177
    %v274 = vunpack.c.l.b16 %v178
    %v275 = vunpack.c.h.b16 %v178
    %v276 = vunpack.c.l.b16 %v179
    %v277 = vpack.c.b16 %v232, %v229
    %v278 = vpack.c.b16 %v233, %v230
    %v279 = vpack.c.b16 %v234, %v231
    %v280 = vpack.c.b16 %v238, %v235
    %v281 = vpack.c.b16 %v239, %v236
    %v282 = vpack.c.b16 %v240, %v237
    %v283 = vpack.c.b16 %v244, %v241
    %v284 = vpack.c.b16 %v245, %v242
    %v285 = vpack.c.b16 %v246, %v243
    %v286 = vpack.c.b16 %v250, %v247
    %v287 = vpack.c.b16 %v251, %v248
    %v288 = vpack.c.b16 %v252, %v249
    %v289 = vpack.c.b16 %v256, %v253
    %v290 = vpack.c.b16 %v257, %v254
    %v291 = vpack.c.b16 %v258, %v255
    %v292 = vpack.c.b16 %v262, %v259
    %v293 = vpack.c.b16 %v263, %v260
    %v294 = vpack.c.b16 %v264, %v261
    %v295 = vpack.c.b16 %v268, %v265
    %v296 = vpack.c.b16 %v269, %v266
    %v297 = vpack.c.b16 %v270, %v267
    %v298 = vpack.c.b16 %v274, %v271
    %v299 = vpack.c.b16 %v275, %v272
    %v300 = vpack.c.b16 %v276, %v273
    %325 = vmatprep.subr.bf16.mxu0 %v299
    %326 = vmatpush1.bf16.msra.mxu0 %v298
    %327 = vmatprep.subr.bf16.mxu0 %v296
    %328 = vmatpush1.bf16.msra.mxu0 %v295
    %329 = vmatprep.subr.bf16.mxu0 %v293
    %330 = vmatpush1.bf16.msra.mxu0 %v292
    %331 = vmatprep.subr.bf16.mxu0 %v290
    %332 = vmatpush1.bf16.msra.mxu0 %v289
    %333 = vmatprep.subr.bf16.mxu0 %v287
    %334 = vmatpush1.bf16.msra.mxu0 %v286
    %335 = vmatprep.subr.bf16.mxu0 %v284
    %336 = vmatpush1.bf16.msra.mxu0 %v283
    %337 = vmatprep.subr.bf16.mxu0 %v281
    %338 = vmatpush1.bf16.msra.mxu0 %v280
    %339 = vmatprep.subr.bf16.mxu0 %v278
    %340 = vmatpush1.bf16.msra.mxu0 %v277
    %341 = vmatprep.subr.bf16.mxu0 0
    %342 = vmatpush2.bf16.msra.mxu0 0
    %343 = vmatprep.subr.bf16.mxu0 0
    %344 = vmatpush2.bf16.msra.mxu0 0
    %345 = vmatprep.subr.bf16.mxu0 0
    %346 = vmatpush2.bf16.msra.mxu0 0
    %347 = vmatprep.subr.bf16.mxu0 0
    %348 = vmatpush2.bf16.msra.mxu0 0
    %349 = vmatprep.subr.bf16.mxu0 0
    %350 = vmatpush2.bf16.msra.mxu0 0
    %351 = vmatprep.subr.bf16.mxu0 0
    %352 = vmatpush2.bf16.msra.mxu0 0
    %353 = vmatprep.subr.bf16.mxu0 0
    %354 = vmatpush2.bf16.msra.mxu0 0
    %355 = vmatprep.subr.bf16.mxu0 0
    %356 = vmatpush2.bf16.msra.mxu0 0
    %357 = vmatprep.mubr.bf16.mxu0 0
    %358 = vmatmul.mubr.bf16.gmra.mxu0 %v147
    %v359 = vpop.f32.mrf.mxu0
    %v360 = vadd.f32 %v185, %v359
    %v361 = vpop.f32.mrf.mxu0
    %v362 = vadd.f32 %v189, %v361
    %v363 = vpop.f32.mrf.mxu0
    %v364 = vadd.f32 %v185, %v363
    %v365 = vpop.f32.mrf.mxu0
    %v366 = vadd.f32 %v189, %v365
    %367 = vdwg.mxu0
    %368 = vmatprep.subr.bf16.mxu0 0
    %369 = vmatpush1.bf16.msra.mxu0 %v300
    %370 = vmatprep.subr.bf16.mxu0 0
    %371 = vmatpush1.bf16.msra.mxu0 %v297
    %372 = vmatprep.subr.bf16.mxu0 0
    %373 = vmatpush1.bf16.msra.mxu0 %v294
    %374 = vmatprep.subr.bf16.mxu0 0
    %375 = vmatpush1.bf16.msra.mxu0 %v291
    %376 = vmatprep.subr.bf16.mxu0 0
    %377 = vmatpush1.bf16.msra.mxu0 %v288
    %378 = vmatprep.subr.bf16.mxu0 0
    %379 = vmatpush1.bf16.msra.mxu0 %v285
    %380 = vmatprep.subr.bf16.mxu0 0
    %381 = vmatpush1.bf16.msra.mxu0 %v282
    %382 = vmatprep.subr.bf16.mxu0 0
    %383 = vmatpush1.bf16.msra.mxu0 %v279
    %384 = vmatprep.subr.bf16.mxu0 0
    %385 = vmatpush2.bf16.msra.mxu0 0
    %386 = vmatprep.subr.bf16.mxu0 0
    %387 = vmatpush2.bf16.msra.mxu0 0
    %388 = vmatprep.subr.bf16.mxu0 0
    %389 = vmatpush2.bf16.msra.mxu0 0
    %390 = vmatprep.subr.bf16.mxu0 0
    %391 = vmatpush2.bf16.msra.mxu0 0
    %392 = vmatprep.subr.bf16.mxu0 0
    %393 = vmatpush2.bf16.msra.mxu0 0
    %394 = vmatprep.subr.bf16.mxu0 0
    %395 = vmatpush2.bf16.msra.mxu0 0
    %396 = vmatprep.subr.bf16.mxu0 0
    %397 = vmatpush2.bf16.msra.mxu0 0
    %398 = vmatprep.subr.bf16.mxu0 0
    %399 = vmatpush2.bf16.msra.mxu0 0
    %400 = vmatprep.mubr.bf16.mxu0 0
    %401 = vmatmul.mubr.bf16.gmra.mxu0 %v147
    %v402 = vpop.f32.mrf.mxu0
    %v403 = vadd.f32 %v193, %v402
    %v404 = vpop.f32.mrf.mxu0
    %v405 = vpop.f32.mrf.mxu0
    %v406 = vadd.f32 %v193, %v405
    %v407 = vpop.f32.mrf.mxu0
    %408 = vdwg.mxu0
    %v409 = vpack.c.bf16 %v364, %v360
    %411 = vrot.lane.b32.xlu0 %v409, 96
    %v412 = vpop.permute.xlu0 %411
    %413 = vrot.lane.b32.xlu0 %v409, 64
    %v414 = vpop.permute.xlu0 %413
    %415 = vrot.lane.b32.xlu0 %v409, 32
    %v416 = vpop.permute.xlu0 %415
    %v419 = vpack.i.b16 %v412, %v409
    %v421 = vshrl.u32 %v409, 16
    %v422 = vshrl.u32 %v412, 16
    %v423 = vpack.i.b16 %v422, %v421
    %v427 = vpack.i.b16 %v416, %v414
    %v429 = vshrl.u32 %v414, 16
    %v430 = vshrl.u32 %v416, 16
    %v431 = vpack.i.b16 %v430, %v429
    %v434 = vpack.i.b16 0, 0
    %v436 = vshrl.u32 0, 16
    %v437 = vpack.i.b16 %v436, %v436
    %v439 = vcombine.high %v419, %v434
    %v441 = vunpack.c.l.s4 1983009808
    %v442 = vunpack.c.0.s8 %v441
    %v443 = vlaneseq
    %v444 = vshrl.u32 %v443, 7
    %v445 = vsub.s32 %v442, %v444
    %v446 = vrot.slane %v419, %v445
    %v448 = vunpack.c.l.s4 1983009808
    %v449 = vunpack.c.0.s8 %v448
    %v450 = vlaneseq
    %v451 = vshrl.u32 %v450, 7
    %v452 = vsub.s32 %v449, %v451
    %v453 = vrot.slane %v439, %v452
    %v454 = vcombine.high %v427, %v434
    %v456 = vunpack.c.l.s4 1983009808
    %v457 = vunpack.c.0.s8 %v456
    %v458 = vlaneseq
    %v459 = vshrl.u32 %v458, 7
    %v460 = vsub.s32 %v457, %v459
    %v461 = vrot.slane %v427, %v460
    %v463 = vunpack.c.l.s4 1983009808
    %v464 = vunpack.c.0.s8 %v463
    %v465 = vlaneseq
    %v466 = vshrl.u32 %v465, 7
    %v467 = vsub.s32 %v464, %v466
    %v468 = vrot.slane %v454, %v467
    %v469 = vcombine.low %v446, %v461
    %v470 = vcombine.high %v446, %v461
    %v472 = vunpack.c.l.s4 1934713408
    %v473 = vunpack.c.0.s8 %v472
    %v474 = vlaneseq
    %v475 = vshrl.u32 %v474, 7
    %v476 = vsub.s32 %v473, %v475
    %v477 = vrot.slane %v469, %v476
    %v479 = vunpack.c.l.s4 1934713408
    %v480 = vunpack.c.0.s8 %v479
    %v481 = vlaneseq
    %v482 = vshrl.u32 %v481, 7
    %v483 = vsub.s32 %v480, %v482
    %v484 = vrot.slane %v470, %v483
    %v485 = vcombine.low %v453, %v468
    %v486 = vcombine.high %v453, %v468
    %v488 = vunpack.c.l.s4 1934713408
    %v489 = vunpack.c.0.s8 %v488
    %v490 = vlaneseq
    %v491 = vshrl.u32 %v490, 7
    %v492 = vsub.s32 %v489, %v491
    %v493 = vrot.slane %v485, %v492
    %v495 = vunpack.c.l.s4 1934713408
    %v496 = vunpack.c.0.s8 %v495
    %v497 = vlaneseq
    %v498 = vshrl.u32 %v497, 7
    %v499 = vsub.s32 %v496, %v498
    %v500 = vrot.slane %v486, %v499
    %v501 = vcombine.high %v477, 0
    %v502 = vcombine.high %v484, 0
    %v503 = vcombine.high %v493, 0
    %v504 = vcombine.high %v500, 0
    %v505 = vcombine.high %v423, %v437
    %v507 = vunpack.c.l.s4 1983009808
    %v508 = vunpack.c.0.s8 %v507
    %v509 = vlaneseq
    %v510 = vshrl.u32 %v509, 7
    %v511 = vsub.s32 %v508, %v510
    %v512 = vrot.slane %v423, %v511
    %v514 = vunpack.c.l.s4 1983009808
    %v515 = vunpack.c.0.s8 %v514
    %v516 = vlaneseq
    %v517 = vshrl.u32 %v516, 7
    %v518 = vsub.s32 %v515, %v517
    %v519 = vrot.slane %v505, %v518
    %v520 = vcombine.high %v431, %v437
    %v522 = vunpack.c.l.s4 1983009808
    %v523 = vunpack.c.0.s8 %v522
    %v524 = vlaneseq
    %v525 = vshrl.u32 %v524, 7
    %v526 = vsub.s32 %v523, %v525
    %v527 = vrot.slane %v431, %v526
    %v529 = vunpack.c.l.s4 1983009808
    %v530 = vunpack.c.0.s8 %v529
    %v531 = vlaneseq
    %v532 = vshrl.u32 %v531, 7
    %v533 = vsub.s32 %v530, %v532
    %v534 = vrot.slane %v520, %v533
    %v535 = vcombine.low %v512, %v527
    %v536 = vcombine.high %v512, %v527
    %v538 = vunpack.c.l.s4 1934713408
    %v539 = vunpack.c.0.s8 %v538
    %v540 = vlaneseq
    %v541 = vshrl.u32 %v540, 7
    %v542 = vsub.s32 %v539, %v541
    %v543 = vrot.slane %v535, %v542
    %v545 = vunpack.c.l.s4 1934713408
    %v546 = vunpack.c.0.s8 %v545
    %v547 = vlaneseq
    %v548 = vshrl.u32 %v547, 7
    %v549 = vsub.s32 %v546, %v548
    %v550 = vrot.slane %v536, %v549
    %v551 = vcombine.low %v519, %v534
    %v552 = vcombine.high %v519, %v534
    %v554 = vunpack.c.l.s4 1934713408
    %v555 = vunpack.c.0.s8 %v554
    %v556 = vlaneseq
    %v557 = vshrl.u32 %v556, 7
    %v558 = vsub.s32 %v555, %v557
    %v559 = vrot.slane %v551, %v558
    %v561 = vunpack.c.l.s4 1934713408
    %v562 = vunpack.c.0.s8 %v561
    %v563 = vlaneseq
    %v564 = vshrl.u32 %v563, 7
    %v565 = vsub.s32 %v562, %v564
    %v566 = vrot.slane %v552, %v565
    %v567 = vcombine.high %v543, 0
    %v568 = vcombine.high %v550, 0
    %v569 = vcombine.high %v559, 0
    %v570 = vcombine.high %v566, 0
    %v571 = vcombine.low %v477, %v484
    %v573 = vunpack.c.l.s4 1983009808
    %v574 = vunpack.c.0.s8 %v573
    %v575 = vlaneseq
    %v576 = vshrl.u32 %v575, 7
    %v577 = vsub.s32 %v574, %v576
    %v578 = vrot.slane %v571, %v577
    %v579 = vcombine.low %v501, %v502
    %v581 = vunpack.c.l.s4 1983009808
    %v582 = vunpack.c.0.s8 %v581
    %v583 = vlaneseq
    %v584 = vshrl.u32 %v583, 7
    %v585 = vsub.s32 %v582, %v584
    %v586 = vrot.slane %v579, %v585
    %v587 = vcombine.low %v493, %v500
    %v589 = vunpack.c.l.s4 1983009808
    %v590 = vunpack.c.0.s8 %v589
    %v591 = vlaneseq
    %v592 = vshrl.u32 %v591, 7
    %v593 = vsub.s32 %v590, %v592
    %v594 = vrot.slane %v587, %v593
    %v595 = vcombine.low %v503, %v504
    %v597 = vunpack.c.l.s4 1983009808
    %v598 = vunpack.c.0.s8 %v597
    %v599 = vlaneseq
    %v600 = vshrl.u32 %v599, 7
    %v601 = vsub.s32 %v598, %v600
    %v602 = vrot.slane %v595, %v601
    %v603 = vcombine.low %v578, %v586
    %v605 = vunpack.c.l.s4 1934713408
    %v606 = vunpack.c.0.s8 %v605
    %v607 = vlaneseq
    %v608 = vshrl.u32 %v607, 7
    %v609 = vsub.s32 %v606, %v608
    %v610 = vrot.slane %v603, %v609
    %v611 = vcombine.low %v594, %v602
    %v613 = vunpack.c.l.s4 1934713408
    %v614 = vunpack.c.0.s8 %v613
    %v615 = vlaneseq
    %v616 = vshrl.u32 %v615, 7
    %v617 = vsub.s32 %v614, %v616
    %v618 = vrot.slane %v611, %v617
    %v619 = vcombine.low %v610, %v618
    %v620 = vcombine.high %v610, %v618
    %v621 = vcombine.low %v543, %v550
    %v623 = vunpack.c.l.s4 1983009808
    %v624 = vunpack.c.0.s8 %v623
    %v625 = vlaneseq
    %v626 = vshrl.u32 %v625, 7
    %v627 = vsub.s32 %v624, %v626
    %v628 = vrot.slane %v621, %v627
    %v629 = vcombine.low %v567, %v568
    %v631 = vunpack.c.l.s4 1983009808
    %v632 = vunpack.c.0.s8 %v631
    %v633 = vlaneseq
    %v634 = vshrl.u32 %v633, 7
    %v635 = vsub.s32 %v632, %v634
    %v636 = vrot.slane %v629, %v635
    %v637 = vcombine.low %v559, %v566
    %v639 = vunpack.c.l.s4 1983009808
    %v640 = vunpack.c.0.s8 %v639
    %v641 = vlaneseq
    %v642 = vshrl.u32 %v641, 7
    %v643 = vsub.s32 %v640, %v642
    %v644 = vrot.slane %v637, %v643
    %v645 = vcombine.low %v569, %v570
    %v647 = vunpack.c.l.s4 1983009808
    %v648 = vunpack.c.0.s8 %v647
    %v649 = vlaneseq
    %v650 = vshrl.u32 %v649, 7
    %v651 = vsub.s32 %v648, %v650
    %v652 = vrot.slane %v645, %v651
    %v653 = vcombine.low %v628, %v636
    %v655 = vunpack.c.l.s4 1934713408
    %v656 = vunpack.c.0.s8 %v655
    %v657 = vlaneseq
    %v658 = vshrl.u32 %v657, 7
    %v659 = vsub.s32 %v656, %v658
    %v660 = vrot.slane %v653, %v659
    %v661 = vcombine.low %v644, %v652
    %v663 = vunpack.c.l.s4 1934713408
    %v664 = vunpack.c.0.s8 %v663
    %v665 = vlaneseq
    %v666 = vshrl.u32 %v665, 7
    %v667 = vsub.s32 %v664, %v666
    %v668 = vrot.slane %v661, %v667
    %v669 = vcombine.low %v660, %v668
    %v670 = vcombine.high %v660, %v668
    %v673 = vpack.i.b16 %v669, %v619
    %v674 = vshrl.u32 %v619, 16
    %v675 = vshrl.u32 %v669, 16
    %v676 = vpack.i.b16 %v675, %v674
    %v679 = vpack.i.b16 %v670, %v620
    %v680 = vshrl.u32 %v620, 16
    %v681 = vshrl.u32 %v670, 16
    %v682 = vpack.i.b16 %v681, %v680
    %v683 = vpack.c.bf16 %v366, %v362
    %685 = vrot.lane.b32.xlu0 %v683, 96
    %v686 = vpop.permute.xlu0 %685
    %687 = vrot.lane.b32.xlu0 %v683, 64
    %v688 = vpop.permute.xlu0 %687
    %689 = vrot.lane.b32.xlu0 %v683, 32
    %v690 = vpop.permute.xlu0 %689
    %v693 = vpack.i.b16 %v686, %v683
    %v695 = vshrl.u32 %v683, 16
    %v696 = vshrl.u32 %v686, 16
    %v697 = vpack.i.b16 %v696, %v695
    %v701 = vpack.i.b16 %v690, %v688
    %v703 = vshrl.u32 %v688, 16
    %v704 = vshrl.u32 %v690, 16
    %v705 = vpack.i.b16 %v704, %v703
    %v707 = vcombine.high %v693, %v434
    %v709 = vunpack.c.l.s4 1983009808
    %v710 = vunpack.c.0.s8 %v709
    %v711 = vlaneseq
    %v712 = vshrl.u32 %v711, 7
    %v713 = vsub.s32 %v710, %v712
    %v714 = vrot.slane %v693, %v713
    %v716 = vunpack.c.l.s4 1983009808
    %v717 = vunpack.c.0.s8 %v716
    %v718 = vlaneseq
    %v719 = vshrl.u32 %v718, 7
    %v720 = vsub.s32 %v717, %v719
    %v721 = vrot.slane %v707, %v720
    %v722 = vcombine.high %v701, %v434
    %v724 = vunpack.c.l.s4 1983009808
    %v725 = vunpack.c.0.s8 %v724
    %v726 = vlaneseq
    %v727 = vshrl.u32 %v726, 7
    %v728 = vsub.s32 %v725, %v727
    %v729 = vrot.slane %v701, %v728
    %v731 = vunpack.c.l.s4 1983009808
    %v732 = vunpack.c.0.s8 %v731
    %v733 = vlaneseq
    %v734 = vshrl.u32 %v733, 7
    %v735 = vsub.s32 %v732, %v734
    %v736 = vrot.slane %v722, %v735
    %v737 = vcombine.low %v714, %v729
    %v738 = vcombine.high %v714, %v729
    %v740 = vunpack.c.l.s4 1934713408
    %v741 = vunpack.c.0.s8 %v740
    %v742 = vlaneseq
    %v743 = vshrl.u32 %v742, 7
    %v744 = vsub.s32 %v741, %v743
    %v745 = vrot.slane %v737, %v744
    %v747 = vunpack.c.l.s4 1934713408
    %v748 = vunpack.c.0.s8 %v747
    %v749 = vlaneseq
    %v750 = vshrl.u32 %v749, 7
    %v751 = vsub.s32 %v748, %v750
    %v752 = vrot.slane %v738, %v751
    %v753 = vcombine.low %v721, %v736
    %v754 = vcombine.high %v721, %v736
    %v756 = vunpack.c.l.s4 1934713408
    %v757 = vunpack.c.0.s8 %v756
    %v758 = vlaneseq
    %v759 = vshrl.u32 %v758, 7
    %v760 = vsub.s32 %v757, %v759
    %v761 = vrot.slane %v753, %v760
    %v763 = vunpack.c.l.s4 1934713408
    %v764 = vunpack.c.0.s8 %v763
    %v765 = vlaneseq
    %v766 = vshrl.u32 %v765, 7
    %v767 = vsub.s32 %v764, %v766
    %v768 = vrot.slane %v754, %v767
    %v769 = vcombine.high %v745, 0
    %v770 = vcombine.high %v752, 0
    %v771 = vcombine.high %v761, 0
    %v772 = vcombine.high %v768, 0
    %v773 = vcombine.high %v697, %v437
    %v775 = vunpack.c.l.s4 1983009808
    %v776 = vunpack.c.0.s8 %v775
    %v777 = vlaneseq
    %v778 = vshrl.u32 %v777, 7
    %v779 = vsub.s32 %v776, %v778
    %v780 = vrot.slane %v697, %v779
    %v782 = vunpack.c.l.s4 1983009808
    %v783 = vunpack.c.0.s8 %v782
    %v784 = vlaneseq
    %v785 = vshrl.u32 %v784, 7
    %v786 = vsub.s32 %v783, %v785
    %v787 = vrot.slane %v773, %v786
    %v788 = vcombine.high %v705, %v437
    %v790 = vunpack.c.l.s4 1983009808
    %v791 = vunpack.c.0.s8 %v790
    %v792 = vlaneseq
    %v793 = vshrl.u32 %v792, 7
    %v794 = vsub.s32 %v791, %v793
    %v795 = vrot.slane %v705, %v794
    %v797 = vunpack.c.l.s4 1983009808
    %v798 = vunpack.c.0.s8 %v797
    %v799 = vlaneseq
    %v800 = vshrl.u32 %v799, 7
    %v801 = vsub.s32 %v798, %v800
    %v802 = vrot.slane %v788, %v801
    %v803 = vcombine.low %v780, %v795
    %v804 = vcombine.high %v780, %v795
    %v806 = vunpack.c.l.s4 1934713408
    %v807 = vunpack.c.0.s8 %v806
    %v808 = vlaneseq
    %v809 = vshrl.u32 %v808, 7
    %v810 = vsub.s32 %v807, %v809
    %v811 = vrot.slane %v803, %v810
    %v813 = vunpack.c.l.s4 1934713408
    %v814 = vunpack.c.0.s8 %v813
    %v815 = vlaneseq
    %v816 = vshrl.u32 %v815, 7
    %v817 = vsub.s32 %v814, %v816
    %v818 = vrot.slane %v804, %v817
    %v819 = vcombine.low %v787, %v802
    %v820 = vcombine.high %v787, %v802
    %v822 = vunpack.c.l.s4 1934713408
    %v823 = vunpack.c.0.s8 %v822
    %v824 = vlaneseq
    %v825 = vshrl.u32 %v824, 7
    %v826 = vsub.s32 %v823, %v825
    %v827 = vrot.slane %v819, %v826
    %v829 = vunpack.c.l.s4 1934713408
    %v830 = vunpack.c.0.s8 %v829
    %v831 = vlaneseq
    %v832 = vshrl.u32 %v831, 7
    %v833 = vsub.s32 %v830, %v832
    %v834 = vrot.slane %v820, %v833
    %v835 = vcombine.high %v811, 0
    %v836 = vcombine.high %v818, 0
    %v837 = vcombine.high %v827, 0
    %v838 = vcombine.high %v834, 0
    %v839 = vcombine.low %v745, %v752
    %v841 = vunpack.c.l.s4 1983009808
    %v842 = vunpack.c.0.s8 %v841
    %v843 = vlaneseq
    %v844 = vshrl.u32 %v843, 7
    %v845 = vsub.s32 %v842, %v844
    %v846 = vrot.slane %v839, %v845
    %v847 = vcombine.low %v769, %v770
    %v849 = vunpack.c.l.s4 1983009808
    %v850 = vunpack.c.0.s8 %v849
    %v851 = vlaneseq
    %v852 = vshrl.u32 %v851, 7
    %v853 = vsub.s32 %v850, %v852
    %v854 = vrot.slane %v847, %v853
    %v855 = vcombine.low %v761, %v768
    %v857 = vunpack.c.l.s4 1983009808
    %v858 = vunpack.c.0.s8 %v857
    %v859 = vlaneseq
    %v860 = vshrl.u32 %v859, 7
    %v861 = vsub.s32 %v858, %v860
    %v862 = vrot.slane %v855, %v861
    %v863 = vcombine.low %v771, %v772
    %v865 = vunpack.c.l.s4 1983009808
    %v866 = vunpack.c.0.s8 %v865
    %v867 = vlaneseq
    %v868 = vshrl.u32 %v867, 7
    %v869 = vsub.s32 %v866, %v868
    %v870 = vrot.slane %v863, %v869
    %v871 = vcombine.low %v846, %v854
    %v873 = vunpack.c.l.s4 1934713408
    %v874 = vunpack.c.0.s8 %v873
    %v875 = vlaneseq
    %v876 = vshrl.u32 %v875, 7
    %v877 = vsub.s32 %v874, %v876
    %v878 = vrot.slane %v871, %v877
    %v879 = vcombine.low %v862, %v870
    %v881 = vunpack.c.l.s4 1934713408
    %v882 = vunpack.c.0.s8 %v881
    %v883 = vlaneseq
    %v884 = vshrl.u32 %v883, 7
    %v885 = vsub.s32 %v882, %v884
    %v886 = vrot.slane %v879, %v885
    %v887 = vcombine.low %v878, %v886
    %v888 = vcombine.high %v878, %v886
    %v889 = vcombine.low %v811, %v818
    %v891 = vunpack.c.l.s4 1983009808
    %v892 = vunpack.c.0.s8 %v891
    %v893 = vlaneseq
    %v894 = vshrl.u32 %v893, 7
    %v895 = vsub.s32 %v892, %v894
    %v896 = vrot.slane %v889, %v895
    %v897 = vcombine.low %v835, %v836
    %v899 = vunpack.c.l.s4 1983009808
    %v900 = vunpack.c.0.s8 %v899
    %v901 = vlaneseq
    %v902 = vshrl.u32 %v901, 7
    %v903 = vsub.s32 %v900, %v902
    %v904 = vrot.slane %v897, %v903
    %v905 = vcombine.low %v827, %v834
    %v907 = vunpack.c.l.s4 1983009808
    %v908 = vunpack.c.0.s8 %v907
    %v909 = vlaneseq
    %v910 = vshrl.u32 %v909, 7
    %v911 = vsub.s32 %v908, %v910
    %v912 = vrot.slane %v905, %v911
    %v913 = vcombine.low %v837, %v838
    %v915 = vunpack.c.l.s4 1983009808
    %v916 = vunpack.c.0.s8 %v915
    %v917 = vlaneseq
    %v918 = vshrl.u32 %v917, 7
    %v919 = vsub.s32 %v916, %v918
    %v920 = vrot.slane %v913, %v919
    %v921 = vcombine.low %v896, %v904
    %v923 = vunpack.c.l.s4 1934713408
    %v924 = vunpack.c.0.s8 %v923
    %v925 = vlaneseq
    %v926 = vshrl.u32 %v925, 7
    %v927 = vsub.s32 %v924, %v926
    %v928 = vrot.slane %v921, %v927
    %v929 = vcombine.low %v912, %v920
    %v931 = vunpack.c.l.s4 1934713408
    %v932 = vunpack.c.0.s8 %v931
    %v933 = vlaneseq
    %v934 = vshrl.u32 %v933, 7
    %v935 = vsub.s32 %v932, %v934
    %v936 = vrot.slane %v929, %v935
    %v937 = vcombine.low %v928, %v936
    %v938 = vcombine.high %v928, %v936
    %v941 = vpack.i.b16 %v937, %v887
    %v942 = vshrl.u32 %v887, 16
    %v943 = vshrl.u32 %v937, 16
    %v944 = vpack.i.b16 %v943, %v942
    %v947 = vpack.i.b16 %v938, %v888
    %v948 = vshrl.u32 %v888, 16
    %v949 = vshrl.u32 %v938, 16
    %v950 = vpack.i.b16 %v949, %v948
    %v951 = vpack.c.bf16 %v406, %v403
    %953 = vrot.lane.b32.xlu0 %v951, 96
    %v954 = vpop.permute.xlu0 %953
    %955 = vrot.lane.b32.xlu0 %v951, 64
    %v956 = vpop.permute.xlu0 %955
    %957 = vrot.lane.b32.xlu0 %v951, 32
    %v958 = vpop.permute.xlu0 %957
    %v961 = vpack.i.b16 %v954, %v951
    %v963 = vshrl.u32 %v951, 16
    %v964 = vshrl.u32 %v954, 16
    %v965 = vpack.i.b16 %v964, %v963
    %v969 = vpack.i.b16 %v958, %v956
    %v971 = vshrl.u32 %v956, 16
    %v972 = vshrl.u32 %v958, 16
    %v973 = vpack.i.b16 %v972, %v971
    %v975 = vcombine.high %v961, %v434
    %v977 = vunpack.c.l.s4 1983009808
    %v978 = vunpack.c.0.s8 %v977
    %v979 = vlaneseq
    %v980 = vshrl.u32 %v979, 7
    %v981 = vsub.s32 %v978, %v980
    %v982 = vrot.slane %v961, %v981
    %v984 = vunpack.c.l.s4 1983009808
    %v985 = vunpack.c.0.s8 %v984
    %v986 = vlaneseq
    %v987 = vshrl.u32 %v986, 7
    %v988 = vsub.s32 %v985, %v987
    %v989 = vrot.slane %v975, %v988
    %v990 = vcombine.high %v969, %v434
    %v992 = vunpack.c.l.s4 1983009808
    %v993 = vunpack.c.0.s8 %v992
    %v994 = vlaneseq
    %v995 = vshrl.u32 %v994, 7
    %v996 = vsub.s32 %v993, %v995
    %v997 = vrot.slane %v969, %v996
    %v999 = vunpack.c.l.s4 1983009808
    %v1000 = vunpack.c.0.s8 %v999
    %v1001 = vlaneseq
    %v1002 = vshrl.u32 %v1001, 7
    %v1003 = vsub.s32 %v1000, %v1002
    %v1004 = vrot.slane %v990, %v1003
    %v1005 = vcombine.low %v982, %v997
    %v1006 = vcombine.high %v982, %v997
    %v1008 = vunpack.c.l.s4 1934713408
    %v1009 = vunpack.c.0.s8 %v1008
    %v1010 = vlaneseq
    %v1011 = vshrl.u32 %v1010, 7
    %v1012 = vsub.s32 %v1009, %v1011
    %v1013 = vrot.slane %v1005, %v1012
    %v1015 = vunpack.c.l.s4 1934713408
    %v1016 = vunpack.c.0.s8 %v1015
    %v1017 = vlaneseq
    %v1018 = vshrl.u32 %v1017, 7
    %v1019 = vsub.s32 %v1016, %v1018
    %v1020 = vrot.slane %v1006, %v1019
    %v1021 = vcombine.low %v989, %v1004
    %v1022 = vcombine.high %v989, %v1004
    %v1024 = vunpack.c.l.s4 1934713408
    %v1025 = vunpack.c.0.s8 %v1024
    %v1026 = vlaneseq
    %v1027 = vshrl.u32 %v1026, 7
    %v1028 = vsub.s32 %v1025, %v1027
    %v1029 = vrot.slane %v1021, %v1028
    %v1031 = vunpack.c.l.s4 1934713408
    %v1032 = vunpack.c.0.s8 %v1031
    %v1033 = vlaneseq
    %v1034 = vshrl.u32 %v1033, 7
    %v1035 = vsub.s32 %v1032, %v1034
    %v1036 = vrot.slane %v1022, %v1035
    %v1037 = vcombine.high %v1013, 0
    %v1038 = vcombine.high %v1020, 0
    %v1039 = vcombine.high %v1029, 0
    %v1040 = vcombine.high %v1036, 0
    %v1041 = vcombine.high %v965, %v437
    %v1043 = vunpack.c.l.s4 1983009808
    %v1044 = vunpack.c.0.s8 %v1043
    %v1045 = vlaneseq
    %v1046 = vshrl.u32 %v1045, 7
    %v1047 = vsub.s32 %v1044, %v1046
    %v1048 = vrot.slane %v965, %v1047
    %v1050 = vunpack.c.l.s4 1983009808
    %v1051 = vunpack.c.0.s8 %v1050
    %v1052 = vlaneseq
    %v1053 = vshrl.u32 %v1052, 7
    %v1054 = vsub.s32 %v1051, %v1053
    %v1055 = vrot.slane %v1041, %v1054
    %v1056 = vcombine.high %v973, %v437
    %v1058 = vunpack.c.l.s4 1983009808
    %v1059 = vunpack.c.0.s8 %v1058
    %v1060 = vlaneseq
    %v1061 = vshrl.u32 %v1060, 7
    %v1062 = vsub.s32 %v1059, %v1061
    %v1063 = vrot.slane %v973, %v1062
    %v1065 = vunpack.c.l.s4 1983009808
    %v1066 = vunpack.c.0.s8 %v1065
    %v1067 = vlaneseq
    %v1068 = vshrl.u32 %v1067, 7
    %v1069 = vsub.s32 %v1066, %v1068
    %v1070 = vrot.slane %v1056, %v1069
    %v1071 = vcombine.low %v1048, %v1063
    %v1072 = vcombine.high %v1048, %v1063
    %v1074 = vunpack.c.l.s4 1934713408
    %v1075 = vunpack.c.0.s8 %v1074
    %v1076 = vlaneseq
    %v1077 = vshrl.u32 %v1076, 7
    %v1078 = vsub.s32 %v1075, %v1077
    %v1079 = vrot.slane %v1071, %v1078
    %v1081 = vunpack.c.l.s4 1934713408
    %v1082 = vunpack.c.0.s8 %v1081
    %v1083 = vlaneseq
    %v1084 = vshrl.u32 %v1083, 7
    %v1085 = vsub.s32 %v1082, %v1084
    %v1086 = vrot.slane %v1072, %v1085
    %v1087 = vcombine.low %v1055, %v1070
    %v1088 = vcombine.high %v1055, %v1070
    %v1090 = vunpack.c.l.s4 1934713408
    %v1091 = vunpack.c.0.s8 %v1090
    %v1092 = vlaneseq
    %v1093 = vshrl.u32 %v1092, 7
    %v1094 = vsub.s32 %v1091, %v1093
    %v1095 = vrot.slane %v1087, %v1094
    %v1097 = vunpack.c.l.s4 1934713408
    %v1098 = vunpack.c.0.s8 %v1097
    %v1099 = vlaneseq
    %v1100 = vshrl.u32 %v1099, 7
    %v1101 = vsub.s32 %v1098, %v1100
    %v1102 = vrot.slane %v1088, %v1101
    %v1103 = vcombine.high %v1079, 0
    %v1104 = vcombine.high %v1086, 0
    %v1105 = vcombine.high %v1095, 0
    %v1106 = vcombine.high %v1102, 0
    %v1107 = vcombine.low %v1013, %v1020
    %v1109 = vunpack.c.l.s4 1983009808
    %v1110 = vunpack.c.0.s8 %v1109
    %v1111 = vlaneseq
    %v1112 = vshrl.u32 %v1111, 7
    %v1113 = vsub.s32 %v1110, %v1112
    %v1114 = vrot.slane %v1107, %v1113
    %v1115 = vcombine.low %v1037, %v1038
    %v1117 = vunpack.c.l.s4 1983009808
    %v1118 = vunpack.c.0.s8 %v1117
    %v1119 = vlaneseq
    %v1120 = vshrl.u32 %v1119, 7
    %v1121 = vsub.s32 %v1118, %v1120
    %v1122 = vrot.slane %v1115, %v1121
    %v1123 = vcombine.low %v1029, %v1036
    %v1125 = vunpack.c.l.s4 1983009808
    %v1126 = vunpack.c.0.s8 %v1125
    %v1127 = vlaneseq
    %v1128 = vshrl.u32 %v1127, 7
    %v1129 = vsub.s32 %v1126, %v1128
    %v1130 = vrot.slane %v1123, %v1129
    %v1131 = vcombine.low %v1039, %v1040
    %v1133 = vunpack.c.l.s4 1983009808
    %v1134 = vunpack.c.0.s8 %v1133
    %v1135 = vlaneseq
    %v1136 = vshrl.u32 %v1135, 7
    %v1137 = vsub.s32 %v1134, %v1136
    %v1138 = vrot.slane %v1131, %v1137
    %v1139 = vcombine.low %v1114, %v1122
    %v1141 = vunpack.c.l.s4 1934713408
    %v1142 = vunpack.c.0.s8 %v1141
    %v1143 = vlaneseq
    %v1144 = vshrl.u32 %v1143, 7
    %v1145 = vsub.s32 %v1142, %v1144
    %v1146 = vrot.slane %v1139, %v1145
    %v1147 = vcombine.low %v1130, %v1138
    %v1149 = vunpack.c.l.s4 1934713408
    %v1150 = vunpack.c.0.s8 %v1149
    %v1151 = vlaneseq
    %v1152 = vshrl.u32 %v1151, 7
    %v1153 = vsub.s32 %v1150, %v1152
    %v1154 = vrot.slane %v1147, %v1153
    %v1155 = vcombine.low %v1146, %v1154
    %v1156 = vcombine.high %v1146, %v1154
    %v1157 = vcombine.low %v1079, %v1086
    %v1159 = vunpack.c.l.s4 1983009808
    %v1160 = vunpack.c.0.s8 %v1159
    %v1161 = vlaneseq
    %v1162 = vshrl.u32 %v1161, 7
    %v1163 = vsub.s32 %v1160, %v1162
    %v1164 = vrot.slane %v1157, %v1163
    %v1165 = vcombine.low %v1103, %v1104
    %v1167 = vunpack.c.l.s4 1983009808
    %v1168 = vunpack.c.0.s8 %v1167
    %v1169 = vlaneseq
    %v1170 = vshrl.u32 %v1169, 7
    %v1171 = vsub.s32 %v1168, %v1170
    %v1172 = vrot.slane %v1165, %v1171
    %v1173 = vcombine.low %v1095, %v1102
    %v1175 = vunpack.c.l.s4 1983009808
    %v1176 = vunpack.c.0.s8 %v1175
    %v1177 = vlaneseq
    %v1178 = vshrl.u32 %v1177, 7
    %v1179 = vsub.s32 %v1176, %v1178
    %v1180 = vrot.slane %v1173, %v1179
    %v1181 = vcombine.low %v1105, %v1106
    %v1183 = vunpack.c.l.s4 1983009808
    %v1184 = vunpack.c.0.s8 %v1183
    %v1185 = vlaneseq
    %v1186 = vshrl.u32 %v1185, 7
    %v1187 = vsub.s32 %v1184, %v1186
    %v1188 = vrot.slane %v1181, %v1187
    %v1189 = vcombine.low %v1164, %v1172
    %v1191 = vunpack.c.l.s4 1934713408
    %v1192 = vunpack.c.0.s8 %v1191
    %v1193 = vlaneseq
    %v1194 = vshrl.u32 %v1193, 7
    %v1195 = vsub.s32 %v1192, %v1194
    %v1196 = vrot.slane %v1189, %v1195
    %v1197 = vcombine.low %v1180, %v1188
    %v1199 = vunpack.c.l.s4 1934713408
    %v1200 = vunpack.c.0.s8 %v1199
    %v1201 = vlaneseq
    %v1202 = vshrl.u32 %v1201, 7
    %v1203 = vsub.s32 %v1200, %v1202
    %v1204 = vrot.slane %v1197, %v1203
    %v1205 = vcombine.low %v1196, %v1204
    %v1206 = vcombine.high %v1196, %v1204
    %v1209 = vpack.i.b16 %v1205, %v1155
    %v1211 = vshrl.u32 %v1155, 16
    %v1212 = vshrl.u32 %v1205, 16
    %v1213 = vpack.i.b16 %v1212, %v1211
    %v1217 = vpack.i.b16 %v1206, %v1156
    %v1219 = vshrl.u32 %v1156, 16
    %v1220 = vshrl.u32 %v1206, 16
    %v1221 = vpack.i.b16 %v1220, %v1219
    %vm1223 = vcmask 261120
    %v1225 = vsel %vm1223, %v673, 0
    %v1228 = vsel %vm1223, %v941, 0
    %1230 = vmatprep.subr.bf16.mxu0 0
    %1231 = vmatpush1.bf16.xpose.msra.mxu0 0
    %1232 = vmatprep.subr.bf16.mxu0 0
    %1233 = vmatpush1.bf16.xpose.msra.mxu0 0
    %1234 = vmatprep.subr.bf16.mxu0 0
    %1235 = vmatpush1.bf16.xpose.msra.mxu0 0
    %1236 = vmatprep.subr.bf16.mxu0 0
    %1237 = vmatpush1.bf16.xpose.msra.mxu0 0
    %1238 = vmatprep.subr.bf16.mxu0 0
    %1239 = vmatpush1.bf16.xpose.msra.mxu0 0
    %1240 = vmatprep.subr.bf16.mxu0 0
    %1241 = vmatpush1.bf16.xpose.msra.mxu0 0
    %1242 = vmatprep.subr.bf16.mxu0 0
    %1243 = vmatpush1.bf16.xpose.msra.mxu0 0
    %1244 = vmatprep.subr.bf16.mxu0 0
    %1245 = vmatpush1.bf16.xpose.msra.mxu0 %v1228
    %1246 = vmatprep.subr.bf16.mxu0 0
    %1247 = vmatpush2.bf16.xpose.msra.mxu0 0
    %1248 = vmatprep.subr.bf16.mxu0 0
    %1249 = vmatpush2.bf16.xpose.msra.mxu0 0
    %1250 = vmatprep.subr.bf16.mxu0 0
    %1251 = vmatpush2.bf16.xpose.msra.mxu0 0
    %1252 = vmatprep.subr.bf16.mxu0 0
    %1253 = vmatpush2.bf16.xpose.msra.mxu0 0
    %1254 = vmatprep.subr.bf16.mxu0 0
    %1255 = vmatpush2.bf16.xpose.msra.mxu0 0
    %1256 = vmatprep.subr.bf16.mxu0 0
    %1257 = vmatpush2.bf16.xpose.msra.mxu0 0
    %1258 = vmatprep.subr.bf16.mxu0 0
    %1259 = vmatpush2.bf16.xpose.msra.mxu0 0
    %1260 = vmatprep.subr.bf16.mxu0 0
    %1261 = vmatpush2.bf16.xpose.msra.mxu0 0
    %1262 = vmatprep.mubr.bf16.mxu0 0
    %1263 = vmatmul.mubr.bf16.gmra.mxu0 %v1225
    %v1264 = vpop.f32.mrf.mxu0
    %v1265 = vadd.f32 %v144, %v1264
    %v1266 = vpop.f32.mrf.mxu0
    %v1267 = vpop.f32.mrf.mxu0
    %v1268 = vadd.f32 %v145, %v1267
    %v1269 = vpop.f32.mrf.mxu0
    %1270 = vdwg.mxu0
    %v1272 = vsel %vm1223, %v676, 0
    %v1275 = vsel %vm1223, %v944, 0
    %1277 = vmatprep.subr.bf16.mxu0 0
    %1278 = vmatpush1.bf16.xpose.msra.mxu0 0
    %1279 = vmatprep.subr.bf16.mxu0 0
    %1280 = vmatpush1.bf16.xpose.msra.mxu0 0
    %1281 = vmatprep.subr.bf16.mxu0 0
    %1282 = vmatpush1.bf16.xpose.msra.mxu0 0
    %1283 = vmatprep.subr.bf16.mxu0 0
    %1284 = vmatpush1.bf16.xpose.msra.mxu0 0
    %1285 = vmatprep.subr.bf16.mxu0 0
    %1286 = vmatpush1.bf16.xpose.msra.mxu0 0
    %1287 = vmatprep.subr.bf16.mxu0 0
    %1288 = vmatpush1.bf16.xpose.msra.mxu0 0
    %1289 = vmatprep.subr.bf16.mxu0 0
    %1290 = vmatpush1.bf16.xpose.msra.mxu0 0
    %1291 = vmatprep.subr.bf16.mxu0 0
    %1292 = vmatpush1.bf16.xpose.msra.mxu0 %v1275
    %1293 = vmatprep.subr.bf16.mxu0 0
    %1294 = vmatpush2.bf16.xpose.msra.mxu0 0
    %1295 = vmatprep.subr.bf16.mxu0 0
    %1296 = vmatpush2.bf16.xpose.msra.mxu0 0
    %1297 = vmatprep.subr.bf16.mxu0 0
    %1298 = vmatpush2.bf16.xpose.msra.mxu0 0
    %1299 = vmatprep.subr.bf16.mxu0 0
    %1300 = vmatpush2.bf16.xpose.msra.mxu0 0
    %1301 = vmatprep.subr.bf16.mxu0 0
    %1302 = vmatpush2.bf16.xpose.msra.mxu0 0
    %1303 = vmatprep.subr.bf16.mxu0 0
    %1304 = vmatpush2.bf16.xpose.msra.mxu0 0
    %1305 = vmatprep.subr.bf16.mxu0 0
    %1306 = vmatpush2.bf16.xpose.msra.mxu0 0
    %1307 = vmatprep.subr.bf16.mxu0 0
    %1308 = vmatpush2.bf16.xpose.msra.mxu0 0
    %1309 = vmatprep.mubr.bf16.mxu0 0
    %1310 = vmatmul.mubr.bf16.gmra.mxu0 %v1272
    %v1311 = vpop.f32.mrf.mxu0
    %v1312 = vadd.f32 %v144, %v1311
    %v1313 = vpop.f32.mrf.mxu0
    %v1314 = vpop.f32.mrf.mxu0
    %v1315 = vadd.f32 %v145, %v1314
    %v1316 = vpop.f32.mrf.mxu0
    %1317 = vdwg.mxu0
    %v1319 = vsel %vm1223, %v679, 0
    %v1322 = vsel %vm1223, %v947, 0
    %1324 = vmatprep.subr.bf16.mxu0 0
    %1325 = vmatpush1.bf16.xpose.msra.mxu0 0
    %1326 = vmatprep.subr.bf16.mxu0 0
    %1327 = vmatpush1.bf16.xpose.msra.mxu0 0
    %1328 = vmatprep.subr.bf16.mxu0 0
    %1329 = vmatpush1.bf16.xpose.msra.mxu0 0
    %1330 = vmatprep.subr.bf16.mxu0 0
    %1331 = vmatpush1.bf16.xpose.msra.mxu0 0
    %1332 = vmatprep.subr.bf16.mxu0 0
    %1333 = vmatpush1.bf16.xpose.msra.mxu0 0
    %1334 = vmatprep.subr.bf16.mxu0 0
    %1335 = vmatpush1.bf16.xpose.msra.mxu0 0
    %1336 = vmatprep.subr.bf16.mxu0 0
    %1337 = vmatpush1.bf16.xpose.msra.mxu0 0
    %1338 = vmatprep.subr.bf16.mxu0 0
    %1339 = vmatpush1.bf16.xpose.msra.mxu0 %v1322
    %1340 = vmatprep.subr.bf16.mxu0 0
    %1341 = vmatpush2.bf16.xpose.msra.mxu0 0
    %1342 = vmatprep.subr.bf16.mxu0 0
    %1343 = vmatpush2.bf16.xpose.msra.mxu0 0
    %1344 = vmatprep.subr.bf16.mxu0 0
    %1345 = vmatpush2.bf16.xpose.msra.mxu0 0
    %1346 = vmatprep.subr.bf16.mxu0 0
    %1347 = vmatpush2.bf16.xpose.msra.mxu0 0
    %1348 = vmatprep.subr.bf16.mxu0 0
    %1349 = vmatpush2.bf16.xpose.msra.mxu0 0
    %1350 = vmatprep.subr.bf16.mxu0 0
    %1351 = vmatpush2.bf16.xpose.msra.mxu0 0
    %1352 = vmatprep.subr.bf16.mxu0 0
    %1353 = vmatpush2.bf16.xpose.msra.mxu0 0
    %1354 = vmatprep.subr.bf16.mxu0 0
    %1355 = vmatpush2.bf16.xpose.msra.mxu0 0
    %1356 = vmatprep.mubr.bf16.mxu0 0
    %1357 = vmatmul.mubr.bf16.gmra.mxu0 %v1319
    %v1358 = vpop.f32.mrf.mxu0
    %v1359 = vadd.f32 %v144, %v1358
    %v1360 = vpop.f32.mrf.mxu0
    %v1361 = vpop.f32.mrf.mxu0
    %v1362 = vadd.f32 %v145, %v1361
    %v1363 = vpop.f32.mrf.mxu0
    %1364 = vdwg.mxu0
    %v1366 = vsel %vm1223, %v682, 0
    %v1369 = vsel %vm1223, %v950, 0
    %1371 = vmatprep.subr.bf16.mxu0 0
    %1372 = vmatpush1.bf16.xpose.msra.mxu0 0
    %1373 = vmatprep.subr.bf16.mxu0 0
    %1374 = vmatpush1.bf16.xpose.msra.mxu0 0
    %1375 = vmatprep.subr.bf16.mxu0 0
    %1376 = vmatpush1.bf16.xpose.msra.mxu0 0
    %1377 = vmatprep.subr.bf16.mxu0 0
    %1378 = vmatpush1.bf16.xpose.msra.mxu0 0
    %1379 = vmatprep.subr.bf16.mxu0 0
    %1380 = vmatpush1.bf16.xpose.msra.mxu0 0
    %1381 = vmatprep.subr.bf16.mxu0 0
    %1382 = vmatpush1.bf16.xpose.msra.mxu0 0
    %1383 = vmatprep.subr.bf16.mxu0 0
    %1384 = vmatpush1.bf16.xpose.msra.mxu0 0
    %1385 = vmatprep.subr.bf16.mxu0 0
    %1386 = vmatpush1.bf16.xpose.msra.mxu0 %v1369
    %1387 = vmatprep.subr.bf16.mxu0 0
    %1388 = vmatpush2.bf16.xpose.msra.mxu0 0
    %1389 = vmatprep.subr.bf16.mxu0 0
    %1390 = vmatpush2.bf16.xpose.msra.mxu0 0
    %1391 = vmatprep.subr.bf16.mxu0 0
    %1392 = vmatpush2.bf16.xpose.msra.mxu0 0
    %1393 = vmatprep.subr.bf16.mxu0 0
    %1394 = vmatpush2.bf16.xpose.msra.mxu0 0
    %1395 = vmatprep.subr.bf16.mxu0 0
    %1396 = vmatpush2.bf16.xpose.msra.mxu0 0
    %1397 = vmatprep.subr.bf16.mxu0 0
    %1398 = vmatpush2.bf16.xpose.msra.mxu0 0
    %1399 = vmatprep.subr.bf16.mxu0 0
    %1400 = vmatpush2.bf16.xpose.msra.mxu0 0
    %1401 = vmatprep.subr.bf16.mxu0 0
    %1402 = vmatpush2.bf16.xpose.msra.mxu0 0
    %1403 = vmatprep.mubr.bf16.mxu0 0
    %1404 = vmatmul.mubr.bf16.gmra.mxu0 %v1366
    %v1405 = vpop.f32.mrf.mxu0
    %v1406 = vadd.f32 %v144, %v1405
    %v1407 = vpop.f32.mrf.mxu0
    %v1408 = vpop.f32.mrf.mxu0
    %v1409 = vadd.f32 %v145, %v1408
    %v1410 = vpop.f32.mrf.mxu0
    %1411 = vdwg.mxu0
    %vm1412 = vcmask 130048
    %v1413 = vsel %vm1412, %v1265, -inf
    %1414 = vmax.xlane.f32.xlu0 %v1413
    %v1415 = vpop.xlane.xlu0 %1414
    %v1416 = vsel %vm1412, %v1268, -inf
    %1417 = vmax.xlane.f32.xlu0 %v1416
    %v1418 = vpop.xlane.xlu0 %1417
    %v1419 = vsel %vm1412, %v1312, -inf
    %1420 = vmax.xlane.f32.xlu0 %v1419
    %v1421 = vpop.xlane.xlu0 %1420
    %v1422 = vsel %vm1412, %v1315, -inf
    %1423 = vmax.xlane.f32.xlu0 %v1422
    %v1424 = vpop.xlane.xlu0 %1423
    %v1425 = vsel %vm1412, %v1359, -inf
    %1426 = vmax.xlane.f32.xlu0 %v1425
    %v1427 = vpop.xlane.xlu0 %1426
    %v1428 = vsel %vm1412, %v1362, -inf
    %1429 = vmax.xlane.f32.xlu0 %v1428
    %v1430 = vpop.xlane.xlu0 %1429
    %v1431 = vsel %vm1412, %v1406, -inf
    %1432 = vmax.xlane.f32.xlu0 %v1431
    %v1433 = vpop.xlane.xlu0 %1432
    %v1434 = vsel %vm1412, %v1409, -inf
    %1435 = vmax.xlane.f32.xlu0 %v1434
    %v1436 = vpop.xlane.xlu0 %1435
    %v1437 = vsub.f32 %v1265, %v1415
    %v1438 = vsub.f32 %v1268, %v1418
    %v1439 = vsub.f32 %v1312, %v1421
    %v1440 = vsub.f32 %v1315, %v1424
    %v1441 = vsub.f32 %v1359, %v1427
    %v1442 = vsub.f32 %v1362, %v1430
    %v1443 = vsub.f32 %v1406, %v1433
    %v1444 = vsub.f32 %v1409, %v1436
    %v1445 = vmul.f32 %v1437, 1.442695
    %v1446 = vpow.pop %v1445
    %v1447 = vmul.f32 %v1438, 1.442695
    %v1448 = vpow.pop %v1447
    %v1449 = vmul.f32 %v1439, 1.442695
    %v1450 = vpow.pop %v1449
    %v1451 = vmul.f32 %v1440, 1.442695
    %v1452 = vpow.pop %v1451
    %v1453 = vmul.f32 %v1441, 1.442695
    %v1454 = vpow.pop %v1453
    %v1455 = vmul.f32 %v1442, 1.442695
    %v1456 = vpow.pop %v1455
    %v1457 = vmul.f32 %v1443, 1.442695
    %v1458 = vpow.pop %v1457
    %v1459 = vmul.f32 %v1444, 1.442695
    %v1460 = vpow.pop %v1459
    %v1461 = vsel %vm1412, %v1446, 0.0
    %1462 = vadd.xlane.f32.xlu0 %v1461
    %v1463 = vpop.xlane.xlu0 %1462
    %v1464 = vsel %vm1412, %v1448, 0.0
    %1465 = vadd.xlane.f32.xlu0 %v1464
    %v1466 = vpop.xlane.xlu0 %1465
    %v1467 = vsel %vm1412, %v1450, 0.0
    %1468 = vadd.xlane.f32.xlu0 %v1467
    %v1469 = vpop.xlane.xlu0 %1468
    %v1470 = vsel %vm1412, %v1452, 0.0
    %1471 = vadd.xlane.f32.xlu0 %v1470
    %v1472 = vpop.xlane.xlu0 %1471
    %v1473 = vsel %vm1412, %v1454, 0.0
    %1474 = vadd.xlane.f32.xlu0 %v1473
    %v1475 = vpop.xlane.xlu0 %1474
    %v1476 = vsel %vm1412, %v1456, 0.0
    %1477 = vadd.xlane.f32.xlu0 %v1476
    %v1478 = vpop.xlane.xlu0 %1477
    %v1479 = vsel %vm1412, %v1458, 0.0
    %1480 = vadd.xlane.f32.xlu0 %v1479
    %v1481 = vpop.xlane.xlu0 %1480
    %v1482 = vsel %vm1412, %v1460, 0.0
    %1483 = vadd.xlane.f32.xlu0 %v1482
    %v1484 = vpop.xlane.xlu0 %1483
    %v1485 = vrcp.pop %v1463
    %v1486 = vrcp.pop %v1466
    %v1487 = vrcp.pop %v1469
    %v1488 = vrcp.pop %v1472
    %v1489 = vrcp.pop %v1475
    %v1490 = vrcp.pop %v1478
    %v1491 = vrcp.pop %v1481
    %v1492 = vrcp.pop %v1484
    %v1493 = vmul.f32 %v1446, %v1485
    %v1494 = vmul.f32 %v1448, %v1486
    %v1495 = vmul.f32 %v1450, %v1487
    %v1496 = vmul.f32 %v1452, %v1488
    %v1497 = vmul.f32 %v1454, %v1489
    %v1498 = vmul.f32 %v1456, %v1490
    %v1499 = vmul.f32 %v1458, %v1491
    %v1500 = vmul.f32 %v1460, %v1492
    %v1501 = vpack.c.bf16 %v1494, %v1493
    %v1502 = vpack.c.bf16 %v1496, %v1495
    %v1503 = vpack.c.bf16 %v1498, %v1497
    %v1504 = vpack.c.bf16 %v1500, %v1499
    %v1506 = vsel %vm1412, %v1501, 0
    %1508 = vmatprep.subr.bf16.mxu0 0
    %1509 = vmatpush1.bf16.msra.mxu0 0
    %1510 = vmatprep.subr.bf16.mxu0 0
    %1511 = vmatpush1.bf16.msra.mxu0 0
    %1512 = vmatprep.subr.bf16.mxu0 0
    %1513 = vmatpush1.bf16.msra.mxu0 0
    %1514 = vmatprep.subr.bf16.mxu0 0
    %1515 = vmatpush1.bf16.msra.mxu0 0
    %1516 = vmatprep.subr.bf16.mxu0 0
    %1517 = vmatpush1.bf16.msra.mxu0 0
    %1518 = vmatprep.subr.bf16.mxu0 0
    %1519 = vmatpush1.bf16.msra.mxu0 0
    %1520 = vmatprep.subr.bf16.mxu0 0
    %1521 = vmatpush1.bf16.msra.mxu0 0
    %1522 = vmatprep.subr.bf16.mxu0 0
    %1523 = vmatpush1.bf16.msra.mxu0 %v1209
    %1524 = vmatprep.subr.bf16.mxu0 0
    %1525 = vmatpush2.bf16.msra.mxu0 0
    %1526 = vmatprep.subr.bf16.mxu0 0
    %1527 = vmatpush2.bf16.msra.mxu0 0
    %1528 = vmatprep.subr.bf16.mxu0 0
    %1529 = vmatpush2.bf16.msra.mxu0 0
    %1530 = vmatprep.subr.bf16.mxu0 0
    %1531 = vmatpush2.bf16.msra.mxu0 0
    %1532 = vmatprep.subr.bf16.mxu0 0
    %1533 = vmatpush2.bf16.msra.mxu0 0
    %1534 = vmatprep.subr.bf16.mxu0 0
    %1535 = vmatpush2.bf16.msra.mxu0 0
    %1536 = vmatprep.subr.bf16.mxu0 0
    %1537 = vmatpush2.bf16.msra.mxu0 0
    %1538 = vmatprep.subr.bf16.mxu0 0
    %1539 = vmatpush2.bf16.msra.mxu0 0
    %1540 = vmatprep.mubr.bf16.mxu0 0
    %1541 = vmatmul.mubr.bf16.gmra.mxu0 %v1506
    %v1542 = vpop.f32.mrf.mxu0
    %v1543 = vadd.f32 0.0, %v1542
    %v1544 = vpop.f32.mrf.mxu0
    %v1545 = vpop.f32.mrf.mxu0
    %v1546 = vadd.f32 0.0, %v1545
    %v1547 = vpop.f32.mrf.mxu0
    %1548 = vdwg.mxu0
    %v1550 = vsel %vm1412, %v1502, 0
    %1552 = vmatprep.subr.bf16.mxu0 0
    %1553 = vmatpush1.bf16.msra.mxu0 0
    %1554 = vmatprep.subr.bf16.mxu0 0
    %1555 = vmatpush1.bf16.msra.mxu0 0
    %1556 = vmatprep.subr.bf16.mxu0 0
    %1557 = vmatpush1.bf16.msra.mxu0 0
    %1558 = vmatprep.subr.bf16.mxu0 0
    %1559 = vmatpush1.bf16.msra.mxu0 0
    %1560 = vmatprep.subr.bf16.mxu0 0
    %1561 = vmatpush1.bf16.msra.mxu0 0
    %1562 = vmatprep.subr.bf16.mxu0 0
    %1563 = vmatpush1.bf16.msra.mxu0 0
    %1564 = vmatprep.subr.bf16.mxu0 0
    %1565 = vmatpush1.bf16.msra.mxu0 0
    %1566 = vmatprep.subr.bf16.mxu0 0
    %1567 = vmatpush1.bf16.msra.mxu0 %v1213
    %1568 = vmatprep.subr.bf16.mxu0 0
    %1569 = vmatpush2.bf16.msra.mxu0 0
    %1570 = vmatprep.subr.bf16.mxu0 0
    %1571 = vmatpush2.bf16.msra.mxu0 0
    %1572 = vmatprep.subr.bf16.mxu0 0
    %1573 = vmatpush2.bf16.msra.mxu0 0
    %1574 = vmatprep.subr.bf16.mxu0 0
    %1575 = vmatpush2.bf16.msra.mxu0 0
    %1576 = vmatprep.subr.bf16.mxu0 0
    %1577 = vmatpush2.bf16.msra.mxu0 0
    %1578 = vmatprep.subr.bf16.mxu0 0
    %1579 = vmatpush2.bf16.msra.mxu0 0
    %1580 = vmatprep.subr.bf16.mxu0 0
    %1581 = vmatpush2.bf16.msra.mxu0 0
    %1582 = vmatprep.subr.bf16.mxu0 0
    %1583 = vmatpush2.bf16.msra.mxu0 0
    %1584 = vmatprep.mubr.bf16.mxu0 0
    %1585 = vmatmul.mubr.bf16.gmra.mxu0 %v1550
    %v1586 = vpop.f32.mrf.mxu0
    %v1587 = vadd.f32 0.0, %v1586
    %v1588 = vpop.f32.mrf.mxu0
    %v1589 = vpop.f32.mrf.mxu0
    %v1590 = vadd.f32 0.0, %v1589
    %v1591 = vpop.f32.mrf.mxu0
    %1592 = vdwg.mxu0
    %v1594 = vsel %vm1412, %v1503, 0
    %1596 = vmatprep.subr.bf16.mxu0 0
    %1597 = vmatpush1.bf16.msra.mxu0 0
    %1598 = vmatprep.subr.bf16.mxu0 0
    %1599 = vmatpush1.bf16.msra.mxu0 0
    %1600 = vmatprep.subr.bf16.mxu0 0
    %1601 = vmatpush1.bf16.msra.mxu0 0
    %1602 = vmatprep.subr.bf16.mxu0 0
    %1603 = vmatpush1.bf16.msra.mxu0 0
    %1604 = vmatprep.subr.bf16.mxu0 0
    %1605 = vmatpush1.bf16.msra.mxu0 0
    %1606 = vmatprep.subr.bf16.mxu0 0
    %1607 = vmatpush1.bf16.msra.mxu0 0
    %1608 = vmatprep.subr.bf16.mxu0 0
    %1609 = vmatpush1.bf16.msra.mxu0 0
    %1610 = vmatprep.subr.bf16.mxu0 0
    %1611 = vmatpush1.bf16.msra.mxu0 %v1217
    %1612 = vmatprep.subr.bf16.mxu0 0
    %1613 = vmatpush2.bf16.msra.mxu0 0
    %1614 = vmatprep.subr.bf16.mxu0 0
    %1615 = vmatpush2.bf16.msra.mxu0 0
    %1616 = vmatprep.subr.bf16.mxu0 0
    %1617 = vmatpush2.bf16.msra.mxu0 0
    %1618 = vmatprep.subr.bf16.mxu0 0
    %1619 = vmatpush2.bf16.msra.mxu0 0
    %1620 = vmatprep.subr.bf16.mxu0 0
    %1621 = vmatpush2.bf16.msra.mxu0 0
    %1622 = vmatprep.subr.bf16.mxu0 0
    %1623 = vmatpush2.bf16.msra.mxu0 0
    %1624 = vmatprep.subr.bf16.mxu0 0
    %1625 = vmatpush2.bf16.msra.mxu0 0
    %1626 = vmatprep.subr.bf16.mxu0 0
    %1627 = vmatpush2.bf16.msra.mxu0 0
    %1628 = vmatprep.mubr.bf16.mxu0 0
    %1629 = vmatmul.mubr.bf16.gmra.mxu0 %v1594
    %v1630 = vpop.f32.mrf.mxu0
    %v1631 = vadd.f32 0.0, %v1630
    %v1632 = vpop.f32.mrf.mxu0
    %v1633 = vpop.f32.mrf.mxu0
    %v1634 = vadd.f32 0.0, %v1633
    %v1635 = vpop.f32.mrf.mxu0
    %1636 = vdwg.mxu0
    %v1638 = vsel %vm1412, %v1504, 0
    %1640 = vmatprep.subr.bf16.mxu0 0
    %1641 = vmatpush1.bf16.msra.mxu0 0
    %1642 = vmatprep.subr.bf16.mxu0 0
    %1643 = vmatpush1.bf16.msra.mxu0 0
    %1644 = vmatprep.subr.bf16.mxu0 0
    %1645 = vmatpush1.bf16.msra.mxu0 0
    %1646 = vmatprep.subr.bf16.mxu0 0
    %1647 = vmatpush1.bf16.msra.mxu0 0
    %1648 = vmatprep.subr.bf16.mxu0 0
    %1649 = vmatpush1.bf16.msra.mxu0 0
    %1650 = vmatprep.subr.bf16.mxu0 0
    %1651 = vmatpush1.bf16.msra.mxu0 0
    %1652 = vmatprep.subr.bf16.mxu0 0
    %1653 = vmatpush1.bf16.msra.mxu0 0
    %1654 = vmatprep.subr.bf16.mxu0 0
    %1655 = vmatpush1.bf16.msra.mxu0 %v1221
    %1656 = vmatprep.subr.bf16.mxu0 0
    %1657 = vmatpush2.bf16.msra.mxu0 0
    %1658 = vmatprep.subr.bf16.mxu0 0
    %1659 = vmatpush2.bf16.msra.mxu0 0
    %1660 = vmatprep.subr.bf16.mxu0 0
    %1661 = vmatpush2.bf16.msra.mxu0 0
    %1662 = vmatprep.subr.bf16.mxu0 0
    %1663 = vmatpush2.bf16.msra.mxu0 0
    %1664 = vmatprep.subr.bf16.mxu0 0
    %1665 = vmatpush2.bf16.msra.mxu0 0
    %1666 = vmatprep.subr.bf16.mxu0 0
    %1667 = vmatpush2.bf16.msra.mxu0 0
    %1668 = vmatprep.subr.bf16.mxu0 0
    %1669 = vmatpush2.bf16.msra.mxu0 0
    %1670 = vmatprep.subr.bf16.mxu0 0
    %1671 = vmatpush2.bf16.msra.mxu0 0
    %1672 = vmatprep.mubr.bf16.mxu0 0
    %1673 = vmatmul.mubr.bf16.gmra.mxu0 %v1638
    %v1674 = vpop.f32.mrf.mxu0
    %v1675 = vadd.f32 0.0, %v1674
    %v1676 = vpop.f32.mrf.mxu0
    %v1677 = vpop.f32.mrf.mxu0
    %v1678 = vadd.f32 0.0, %v1677
    %v1679 = vpop.f32.mrf.mxu0
    %1680 = vdwg.mxu0
    %v1681 = vcombine.low %v1543, %v1631
    %v1682 = vcombine.high %v1543, %v1631
    %v1684 = vunpack.c.l.s4 1983009808
    %v1685 = vunpack.c.0.s8 %v1684
    %v1686 = vlaneseq
    %v1687 = vshrl.u32 %v1686, 7
    %v1688 = vsub.s32 %v1685, %v1687
    %v1689 = vrot.slane %v1681, %v1688
    %v1691 = vunpack.c.l.s4 1983009808
    %v1692 = vunpack.c.0.s8 %v1691
    %v1693 = vlaneseq
    %v1694 = vshrl.u32 %v1693, 7
    %v1695 = vsub.s32 %v1692, %v1694
    %v1696 = vrot.slane %v1682, %v1695
    %v1697 = vcombine.low %v1587, %v1675
    %v1698 = vcombine.high %v1587, %v1675
    %v1700 = vunpack.c.l.s4 1983009808
    %v1701 = vunpack.c.0.s8 %v1700
    %v1702 = vlaneseq
    %v1703 = vshrl.u32 %v1702, 7
    %v1704 = vsub.s32 %v1701, %v1703
    %v1705 = vrot.slane %v1697, %v1704
    %v1707 = vunpack.c.l.s4 1983009808
    %v1708 = vunpack.c.0.s8 %v1707
    %v1709 = vlaneseq
    %v1710 = vshrl.u32 %v1709, 7
    %v1711 = vsub.s32 %v1708, %v1710
    %v1712 = vrot.slane %v1698, %v1711
    %v1713 = vcombine.low %v1689, %v1705
    %v1714 = vcombine.high %v1689, %v1705
    %v1716 = vunpack.c.l.s4 1934713408
    %v1717 = vunpack.c.0.s8 %v1716
    %v1718 = vlaneseq
    %v1719 = vshrl.u32 %v1718, 7
    %v1720 = vsub.s32 %v1717, %v1719
    %v1721 = vrot.slane %v1713, %v1720
    %v1723 = vunpack.c.l.s4 1934713408
    %v1724 = vunpack.c.0.s8 %v1723
    %v1725 = vlaneseq
    %v1726 = vshrl.u32 %v1725, 7
    %v1727 = vsub.s32 %v1724, %v1726
    %v1728 = vrot.slane %v1714, %v1727
    %v1729 = vcombine.low %v1696, %v1712
    %v1730 = vcombine.high %v1696, %v1712
    %v1732 = vunpack.c.l.s4 1934713408
    %v1733 = vunpack.c.0.s8 %v1732
    %v1734 = vlaneseq
    %v1735 = vshrl.u32 %v1734, 7
    %v1736 = vsub.s32 %v1733, %v1735
    %v1737 = vrot.slane %v1729, %v1736
    %v1739 = vunpack.c.l.s4 1934713408
    %v1740 = vunpack.c.0.s8 %v1739
    %v1741 = vlaneseq
    %v1742 = vshrl.u32 %v1741, 7
    %v1743 = vsub.s32 %v1740, %v1742
    %v1744 = vrot.slane %v1730, %v1743
    %v1745 = vcombine.high %v1721, 0.0
    %v1746 = vcombine.high %v1728, 0.0
    %v1747 = vcombine.high %v1737, 0.0
    %v1748 = vcombine.high %v1744, 0.0
    %v1749 = vcombine.low %v1546, %v1634
    %v1750 = vcombine.high %v1546, %v1634
    %v1752 = vunpack.c.l.s4 1983009808
    %v1753 = vunpack.c.0.s8 %v1752
    %v1754 = vlaneseq
    %v1755 = vshrl.u32 %v1754, 7
    %v1756 = vsub.s32 %v1753, %v1755
    %v1757 = vrot.slane %v1749, %v1756
    %v1759 = vunpack.c.l.s4 1983009808
    %v1760 = vunpack.c.0.s8 %v1759
    %v1761 = vlaneseq
    %v1762 = vshrl.u32 %v1761, 7
    %v1763 = vsub.s32 %v1760, %v1762
    %v1764 = vrot.slane %v1750, %v1763
    %v1765 = vcombine.low %v1590, %v1678
    %v1766 = vcombine.high %v1590, %v1678
    %v1768 = vunpack.c.l.s4 1983009808
    %v1769 = vunpack.c.0.s8 %v1768
    %v1770 = vlaneseq
    %v1771 = vshrl.u32 %v1770, 7
    %v1772 = vsub.s32 %v1769, %v1771
    %v1773 = vrot.slane %v1765, %v1772
    %v1775 = vunpack.c.l.s4 1983009808
    %v1776 = vunpack.c.0.s8 %v1775
    %v1777 = vlaneseq
    %v1778 = vshrl.u32 %v1777, 7
    %v1779 = vsub.s32 %v1776, %v1778
    %v1780 = vrot.slane %v1766, %v1779
    %v1781 = vcombine.low %v1757, %v1773
    %v1782 = vcombine.high %v1757, %v1773
    %v1784 = vunpack.c.l.s4 1934713408
    %v1785 = vunpack.c.0.s8 %v1784
    %v1786 = vlaneseq
    %v1787 = vshrl.u32 %v1786, 7
    %v1788 = vsub.s32 %v1785, %v1787
    %v1789 = vrot.slane %v1781, %v1788
    %v1791 = vunpack.c.l.s4 1934713408
    %v1792 = vunpack.c.0.s8 %v1791
    %v1793 = vlaneseq
    %v1794 = vshrl.u32 %v1793, 7
    %v1795 = vsub.s32 %v1792, %v1794
    %v1796 = vrot.slane %v1782, %v1795
    %v1797 = vcombine.low %v1764, %v1780
    %v1798 = vcombine.high %v1764, %v1780
    %v1800 = vunpack.c.l.s4 1934713408
    %v1801 = vunpack.c.0.s8 %v1800
    %v1802 = vlaneseq
    %v1803 = vshrl.u32 %v1802, 7
    %v1804 = vsub.s32 %v1801, %v1803
    %v1805 = vrot.slane %v1797, %v1804
    %v1807 = vunpack.c.l.s4 1934713408
    %v1808 = vunpack.c.0.s8 %v1807
    %v1809 = vlaneseq
    %v1810 = vshrl.u32 %v1809, 7
    %v1811 = vsub.s32 %v1808, %v1810
    %v1812 = vrot.slane %v1798, %v1811
    %v1813 = vcombine.high %v1789, 0.0
    %v1814 = vcombine.high %v1796, 0.0
    %v1815 = vcombine.high %v1805, 0.0
    %v1816 = vcombine.high %v1812, 0.0
    %v1817 = vcombine.low %v1721, %v1728
    %v1819 = vunpack.c.l.s4 1983009808
    %v1820 = vunpack.c.0.s8 %v1819
    %v1821 = vlaneseq
    %v1822 = vshrl.u32 %v1821, 7
    %v1823 = vsub.s32 %v1820, %v1822
    %v1824 = vrot.slane %v1817, %v1823
    %v1825 = vcombine.low %v1745, %v1746
    %v1827 = vunpack.c.l.s4 1983009808
    %v1828 = vunpack.c.0.s8 %v1827
    %v1829 = vlaneseq
    %v1830 = vshrl.u32 %v1829, 7
    %v1831 = vsub.s32 %v1828, %v1830
    %v1832 = vrot.slane %v1825, %v1831
    %v1833 = vcombine.low %v1737, %v1744
    %v1835 = vunpack.c.l.s4 1983009808
    %v1836 = vunpack.c.0.s8 %v1835
    %v1837 = vlaneseq
    %v1838 = vshrl.u32 %v1837, 7
    %v1839 = vsub.s32 %v1836, %v1838
    %v1840 = vrot.slane %v1833, %v1839
    %v1841 = vcombine.low %v1747, %v1748
    %v1843 = vunpack.c.l.s4 1983009808
    %v1844 = vunpack.c.0.s8 %v1843
    %v1845 = vlaneseq
    %v1846 = vshrl.u32 %v1845, 7
    %v1847 = vsub.s32 %v1844, %v1846
    %v1848 = vrot.slane %v1841, %v1847
    %v1849 = vcombine.low %v1824, %v1832
    %v1850 = vcombine.high %v1824, %v1832
    %v1852 = vunpack.c.l.s4 1934713408
    %v1853 = vunpack.c.0.s8 %v1852
    %v1854 = vlaneseq
    %v1855 = vshrl.u32 %v1854, 7
    %v1856 = vsub.s32 %v1853, %v1855
    %v1857 = vrot.slane %v1849, %v1856
    %v1859 = vunpack.c.l.s4 1934713408
    %v1860 = vunpack.c.0.s8 %v1859
    %v1861 = vlaneseq
    %v1862 = vshrl.u32 %v1861, 7
    %v1863 = vsub.s32 %v1860, %v1862
    %v1864 = vrot.slane %v1850, %v1863
    %v1865 = vcombine.low %v1840, %v1848
    %v1866 = vcombine.high %v1840, %v1848
    %v1868 = vunpack.c.l.s4 1934713408
    %v1869 = vunpack.c.0.s8 %v1868
    %v1870 = vlaneseq
    %v1871 = vshrl.u32 %v1870, 7
    %v1872 = vsub.s32 %v1869, %v1871
    %v1873 = vrot.slane %v1865, %v1872
    %v1875 = vunpack.c.l.s4 1934713408
    %v1876 = vunpack.c.0.s8 %v1875
    %v1877 = vlaneseq
    %v1878 = vshrl.u32 %v1877, 7
    %v1879 = vsub.s32 %v1876, %v1878
    %v1880 = vrot.slane %v1866, %v1879
    %v1881 = vcombine.low %v1857, %v1873
    %v1882 = vcombine.high %v1857, %v1873
    %v1883 = vcombine.low %v1864, %v1880
    %v1884 = vcombine.high %v1864, %v1880
    %v1885 = vcombine.low %v1789, %v1796
    %v1887 = vunpack.c.l.s4 1983009808
    %v1888 = vunpack.c.0.s8 %v1887
    %v1889 = vlaneseq
    %v1890 = vshrl.u32 %v1889, 7
    %v1891 = vsub.s32 %v1888, %v1890
    %v1892 = vrot.slane %v1885, %v1891
    %v1893 = vcombine.low %v1813, %v1814
    %v1895 = vunpack.c.l.s4 1983009808
    %v1896 = vunpack.c.0.s8 %v1895
    %v1897 = vlaneseq
    %v1898 = vshrl.u32 %v1897, 7
    %v1899 = vsub.s32 %v1896, %v1898
    %v1900 = vrot.slane %v1893, %v1899
    %v1901 = vcombine.low %v1805, %v1812
    %v1903 = vunpack.c.l.s4 1983009808
    %v1904 = vunpack.c.0.s8 %v1903
    %v1905 = vlaneseq
    %v1906 = vshrl.u32 %v1905, 7
    %v1907 = vsub.s32 %v1904, %v1906
    %v1908 = vrot.slane %v1901, %v1907
    %v1909 = vcombine.low %v1815, %v1816
    %v1911 = vunpack.c.l.s4 1983009808
    %v1912 = vunpack.c.0.s8 %v1911
    %v1913 = vlaneseq
    %v1914 = vshrl.u32 %v1913, 7
    %v1915 = vsub.s32 %v1912, %v1914
    %v1916 = vrot.slane %v1909, %v1915
    %v1917 = vcombine.low %v1892, %v1900
    %v1918 = vcombine.high %v1892, %v1900
    %v1920 = vunpack.c.l.s4 1934713408
    %v1921 = vunpack.c.0.s8 %v1920
    %v1922 = vlaneseq
    %v1923 = vshrl.u32 %v1922, 7
    %v1924 = vsub.s32 %v1921, %v1923
    %v1925 = vrot.slane %v1917, %v1924
    %v1927 = vunpack.c.l.s4 1934713408
    %v1928 = vunpack.c.0.s8 %v1927
    %v1929 = vlaneseq
    %v1930 = vshrl.u32 %v1929, 7
    %v1931 = vsub.s32 %v1928, %v1930
    %v1932 = vrot.slane %v1918, %v1931
    %v1933 = vcombine.low %v1908, %v1916
    %v1934 = vcombine.high %v1908, %v1916
    %v1936 = vunpack.c.l.s4 1934713408
    %v1937 = vunpack.c.0.s8 %v1936
    %v1938 = vlaneseq
    %v1939 = vshrl.u32 %v1938, 7
    %v1940 = vsub.s32 %v1937, %v1939
    %v1941 = vrot.slane %v1933, %v1940
    %v1943 = vunpack.c.l.s4 1934713408
    %v1944 = vunpack.c.0.s8 %v1943
    %v1945 = vlaneseq
    %v1946 = vshrl.u32 %v1945, 7
    %v1947 = vsub.s32 %v1944, %v1946
    %v1948 = vrot.slane %v1934, %v1947
    %v1949 = vcombine.low %v1925, %v1941
    %v1950 = vcombine.high %v1925, %v1941
    %v1951 = vcombine.low %v1932, %v1948
    %v1952 = vcombine.high %v1932, %v1948
    %1955 = vrot.lane.b32.xlu0 %v1882, 32
    %v1956 = vpop.permute.xlu0 %1955
    %1957 = vrot.lane.b32.xlu0 %v1950, 32
    %v1958 = vpop.permute.xlu0 %1957
    %1963 = vrot.lane.b32.xlu0 %v1883, 64
    %v1964 = vpop.permute.xlu0 %1963
    %1965 = vrot.lane.b32.xlu0 %v1951, 64
    %v1966 = vpop.permute.xlu0 %1965
    %1971 = vrot.lane.b32.xlu0 %v1884, 96
    %v1972 = vpop.permute.xlu0 %1971
    %1973 = vrot.lane.b32.xlu0 %v1952, 96
    %v1974 = vpop.permute.xlu0 %1973
    %v1977 = vsel %vm1223, %v1881, %v1956
    %v1978 = vsel %vm1223, %v1949, %v1958
    %vm1979 = vcmask 523264
    %v1980 = vsel %vm1979, %v1977, %v1964
    %v1981 = vsel %vm1979, %v1978, %v1966
    %vm1982 = vcmask 785408
    %v1983 = vsel %vm1982, %v1980, %v1972
    %v1984 = vsel %vm1982, %v1981, %v1974
    %v1985 = vpack.c.bf16 %v1984, %v1983
    %v1986 = vld [vmem:[%s5] sm:$0xf]
    %v1987 = vld [vmem:[%s5 + $0x4] sm:$0xf]
    %v1988 = vld [vmem:[%s5 + $0x8] sm:$0xf]
    %v1989 = vld [vmem:[%s5 + $0xc] sm:$0xf]
    %v1990 = vld [vmem:[%s5 + $0x10] sm:$0xf]
    %v1991 = vld [vmem:[%s5 + $0x14] sm:$0xf]
    %v1992 = vld [vmem:[%s5 + $0x18] sm:$0xf]
    %v1993 = vld [vmem:[%s5 + $0x1c] sm:$0xf]
    %v1994 = vld [vmem:[%s5 + $0x20] sm:$0xf]
    %v1995 = vld [vmem:[%s5 + $0x24] sm:$0xf]
    %v1996 = vld [vmem:[%s5 + $0x28] sm:$0xf]
    %v1997 = vld [vmem:[%s5 + $0x2c] sm:$0xf]
    %v1998 = vld [vmem:[%s5 + $0x30] sm:$0xf]
    %v1999 = vld [vmem:[%s5 + $0x34] sm:$0xf]
    %v2000 = vld [vmem:[%s5 + $0x38] sm:$0xf]
    %v2001 = vld [vmem:[%s5 + $0x3c] sm:$0xf]
    %v2002 = vlaneseq
    %v2003 = vshrl.u32 %v2002, 7
    %v2004 = vsub.s32 0, %v2003
    %v2005 = vrot.slane %v146, %v2004
    %v2022 = vunpack.c.l.b16 %v1986
    %v2023 = vunpack.c.l.b16 %v1987
    %v2024 = vunpack.c.l.b16 %v1988
    %v2025 = vunpack.c.l.b16 %v1989
    %v2026 = vunpack.c.l.b16 %v1990
    %v2027 = vunpack.c.l.b16 %v1991
    %v2028 = vunpack.c.l.b16 %v1992
    %v2029 = vunpack.c.l.b16 %v1993
    %v2030 = vunpack.c.l.b16 %v1994
    %v2031 = vunpack.c.l.b16 %v1995
    %v2032 = vunpack.c.l.b16 %v1996
    %v2033 = vunpack.c.l.b16 %v1997
    %v2034 = vunpack.c.l.b16 %v1998
    %v2035 = vunpack.c.l.b16 %v1999
    %v2036 = vunpack.c.l.b16 %v2000
    %v2037 = vunpack.c.l.b16 %v2001
    %v2038 = vpack.c.b16 %v2023, %v2022
    %v2039 = vpack.c.b16 %v2025, %v2024
    %v2040 = vpack.c.b16 %v2027, %v2026
    %v2041 = vpack.c.b16 %v2029, %v2028
    %v2042 = vpack.c.b16 %v2031, %v2030
    %v2043 = vpack.c.b16 %v2033, %v2032
    %v2044 = vpack.c.b16 %v2035, %v2034
    %v2045 = vpack.c.b16 %v2037, %v2036
    %2054 = vmatprep.subr.bf16.mxu0 0
    %2055 = vmatpush1.bf16.msra.mxu0 %v2045
    %2056 = vmatprep.subr.bf16.mxu0 0
    %2057 = vmatpush1.bf16.msra.mxu0 %v2044
    %2058 = vmatprep.subr.bf16.mxu0 0
    %2059 = vmatpush1.bf16.msra.mxu0 %v2043
    %2060 = vmatprep.subr.bf16.mxu0 0
    %2061 = vmatpush1.bf16.msra.mxu0 %v2042
    %2062 = vmatprep.subr.bf16.mxu0 0
    %2063 = vmatpush1.bf16.msra.mxu0 %v2041
    %2064 = vmatprep.subr.bf16.mxu0 0
    %2065 = vmatpush1.bf16.msra.mxu0 %v2040
    %2066 = vmatprep.subr.bf16.mxu0 0
    %2067 = vmatpush1.bf16.msra.mxu0 %v2039
    %2068 = vmatprep.subr.bf16.mxu0 0
    %2069 = vmatpush1.bf16.msra.mxu0 %v2038
    %2070 = vmatprep.subr.bf16.mxu0 0
    %2071 = vmatpush2.bf16.msra.mxu0 0
    %2072 = vmatprep.subr.bf16.mxu0 0
    %2073 = vmatpush2.bf16.msra.mxu0 0
    %2074 = vmatprep.subr.bf16.mxu0 0
    %2075 = vmatpush2.bf16.msra.mxu0 0
    %2076 = vmatprep.subr.bf16.mxu0 0
    %2077 = vmatpush2.bf16.msra.mxu0 0
    %2078 = vmatprep.subr.bf16.mxu0 0
    %2079 = vmatpush2.bf16.msra.mxu0 0
    %2080 = vmatprep.subr.bf16.mxu0 0
    %2081 = vmatpush2.bf16.msra.mxu0 0
    %2082 = vmatprep.subr.bf16.mxu0 0
    %2083 = vmatpush2.bf16.msra.mxu0 0
    %2084 = vmatprep.subr.bf16.mxu0 0
    %2085 = vmatpush2.bf16.msra.mxu0 0
    %2086 = vmatprep.mubr.bf16.mxu0 0
    %2087 = vmatmul.mubr.bf16.gmra.mxu0 %v1985
    %v2088 = vpop.f32.mrf.mxu0
    %v2089 = vadd.f32 %v2005, %v2088
    %v2090 = vpop.f32.mrf.mxu0
    %v2091 = vpop.f32.mrf.mxu0
    %v2092 = vadd.f32 %v2005, %v2091
    %v2093 = vpop.f32.mrf.mxu0
    %2094 = vdwg.mxu0
    %v2095 = vadd.f32 %v2089, %v142
    %v2096 = vadd.f32 %v2092, %v143
    %2097 = vadd.xlane.f32.xlu0 %v2095
    %v2098 = vpop.xlane.xlu0 %2097
    %2099 = vadd.xlane.f32.xlu0 %v2096
    %v2100 = vpop.xlane.xlu0 %2099
    %v2101 = vmul.f32 %v2098, %v109
    %v2102 = vmul.f32 %v2100, %v109
    %v2103 = vmul.f32 %v2095, %v2095
    %v2104 = vmul.f32 %v2096, %v2096
    %2105 = vadd.xlane.f32.xlu0 %v2103
    %v2106 = vpop.xlane.xlu0 %2105
    %2107 = vadd.xlane.f32.xlu0 %v2104
    %v2108 = vpop.xlane.xlu0 %2107
    %v2109 = vmul.f32 %v2106, %v109
    %v2110 = vmul.f32 %v2108, %v109
    %v2111 = vmul.f32 %v2101, %v2101
    %v2112 = vmul.f32 %v2102, %v2102
    %v2113 = vsub.f32 %v2109, %v2111
    %v2114 = vsub.f32 %v2110, %v2112
    %v2115 = vsub.f32 %v2095, %v2101
    %v2116 = vsub.f32 %v2096, %v2102
    %v2117 = vadd.f32 %v2113, 1e-05
    %v2118 = vadd.f32 %v2114, 1e-05
    %v2119 = vrsqrt.pop %v2117
    %v2120 = vrsqrt.pop %v2118
    %v2121 = vmul.f32 %v2115, %v2119
    %v2122 = vmul.f32 %v2116, %v2120
    %v2123 = vlaneseq
    %v2124 = vshrl.u32 %v2123, 7
    %v2125 = vsub.s32 1, %v2124
    %v2126 = vrot.slane %v146, %v2125
    %v2127 = vmul.f32 %v2121, %v2126
    %v2128 = vmul.f32 %v2122, %v2126
    %v2129 = vlaneseq
    %v2130 = vshrl.u32 %v2129, 7
    %v2131 = vsub.s32 2, %v2130
    %v2132 = vrot.slane %v146, %v2131
    %v2133 = vadd.f32 %v2127, %v2132
    %v2134 = vadd.f32 %v2128, %v2132
    %v2135 = vpack.c.bf16 %v2134, %v2133
    %v2136 = vld [vmem:[%s6] sm:$0xff]
    %v2137 = vld [vmem:[%s6 + $0x8] sm:$0xff]
    %v2138 = vld [vmem:[%s6 + $0x10] sm:$0xff]
    %v2139 = vld [vmem:[%s6 + $0x18] sm:$0xff]
    %v2140 = vld [vmem:[%s6 + $0x20] sm:$0xff]
    %v2141 = vld [vmem:[%s6 + $0x28] sm:$0xff]
    %v2142 = vld [vmem:[%s6 + $0x30] sm:$0xff]
    %v2143 = vld [vmem:[%s6 + $0x38] sm:$0xff]
    %v2144 = vld [vmem:[%s6 + $0x40] sm:$0xff]
    %v2145 = vld [vmem:[%s6 + $0x48] sm:$0xff]
    %v2146 = vld [vmem:[%s6 + $0x50] sm:$0xff]
    %v2147 = vld [vmem:[%s6 + $0x58] sm:$0xff]
    %v2148 = vld [vmem:[%s6 + $0x60] sm:$0xff]
    %v2149 = vld [vmem:[%s6 + $0x68] sm:$0xff]
    %v2150 = vld [vmem:[%s6 + $0x70] sm:$0xff]
    %v2151 = vld [vmem:[%s6 + $0x78] sm:$0xff]
    %v2152 = vld [vmem:[%s7] sm:$0x3]
    %v2154 = vlaneseq
    %v2155 = vshrl.u32 %v2154, 7
    %v2156 = vsub.s32 0, %v2155
    %v2157 = vrot.slane %v2152, %v2156
    %v2158 = vlaneseq
    %v2159 = vshrl.u32 %v2158, 7
    %v2160 = vsub.s32 1, %v2159
    %v2161 = vrot.slane %v2152, %v2160
    %v2180 = vunpack.c.l.b16 %v2136
    %v2181 = vunpack.c.h.b16 %v2136
    %v2182 = vunpack.c.l.b16 %v2137
    %v2183 = vunpack.c.h.b16 %v2137
    %v2184 = vunpack.c.l.b16 %v2138
    %v2185 = vunpack.c.h.b16 %v2138
    %v2186 = vunpack.c.l.b16 %v2139
    %v2187 = vunpack.c.h.b16 %v2139
    %v2188 = vunpack.c.l.b16 %v2140
    %v2189 = vunpack.c.h.b16 %v2140
    %v2190 = vunpack.c.l.b16 %v2141
    %v2191 = vunpack.c.h.b16 %v2141
    %v2192 = vunpack.c.l.b16 %v2142
    %v2193 = vunpack.c.h.b16 %v2142
    %v2194 = vunpack.c.l.b16 %v2143
    %v2195 = vunpack.c.h.b16 %v2143
    %v2196 = vunpack.c.l.b16 %v2144
    %v2197 = vunpack.c.h.b16 %v2144
    %v2198 = vunpack.c.l.b16 %v2145
    %v2199 = vunpack.c.h.b16 %v2145
    %v2200 = vunpack.c.l.b16 %v2146
    %v2201 = vunpack.c.h.b16 %v2146
    %v2202 = vunpack.c.l.b16 %v2147
    %v2203 = vunpack.c.h.b16 %v2147
    %v2204 = vunpack.c.l.b16 %v2148
    %v2205 = vunpack.c.h.b16 %v2148
    %v2206 = vunpack.c.l.b16 %v2149
    %v2207 = vunpack.c.h.b16 %v2149
    %v2208 = vunpack.c.l.b16 %v2150
    %v2209 = vunpack.c.h.b16 %v2150
    %v2210 = vunpack.c.l.b16 %v2151
    %v2211 = vunpack.c.h.b16 %v2151
    %v2212 = vpack.c.b16 %v2182, %v2180
    %v2213 = vpack.c.b16 %v2183, %v2181
    %v2214 = vpack.c.b16 %v2186, %v2184
    %v2215 = vpack.c.b16 %v2187, %v2185
    %v2216 = vpack.c.b16 %v2190, %v2188
    %v2217 = vpack.c.b16 %v2191, %v2189
    %v2218 = vpack.c.b16 %v2194, %v2192
    %v2219 = vpack.c.b16 %v2195, %v2193
    %v2220 = vpack.c.b16 %v2198, %v2196
    %v2221 = vpack.c.b16 %v2199, %v2197
    %v2222 = vpack.c.b16 %v2202, %v2200
    %v2223 = vpack.c.b16 %v2203, %v2201
    %v2224 = vpack.c.b16 %v2206, %v2204
    %v2225 = vpack.c.b16 %v2207, %v2205
    %v2226 = vpack.c.b16 %v2210, %v2208
    %v2227 = vpack.c.b16 %v2211, %v2209
    %2244 = vmatprep.subr.bf16.mxu0 %v2227
    %2245 = vmatpush1.bf16.msra.mxu0 %v2226
    %2246 = vmatprep.subr.bf16.mxu0 %v2225
    %2247 = vmatpush1.bf16.msra.mxu0 %v2224
    %2248 = vmatprep.subr.bf16.mxu0 %v2223
    %2249 = vmatpush1.bf16.msra.mxu0 %v2222
    %2250 = vmatprep.subr.bf16.mxu0 %v2221
    %2251 = vmatpush1.bf16.msra.mxu0 %v2220
    %2252 = vmatprep.subr.bf16.mxu0 %v2219
    %2253 = vmatpush1.bf16.msra.mxu0 %v2218
    %2254 = vmatprep.subr.bf16.mxu0 %v2217
    %2255 = vmatpush1.bf16.msra.mxu0 %v2216
    %2256 = vmatprep.subr.bf16.mxu0 %v2215
    %2257 = vmatpush1.bf16.msra.mxu0 %v2214
    %2258 = vmatprep.subr.bf16.mxu0 %v2213
    %2259 = vmatpush1.bf16.msra.mxu0 %v2212
    %2260 = vmatprep.subr.bf16.mxu0 0
    %2261 = vmatpush2.bf16.msra.mxu0 0
    %2262 = vmatprep.subr.bf16.mxu0 0
    %2263 = vmatpush2.bf16.msra.mxu0 0
    %2264 = vmatprep.subr.bf16.mxu0 0
    %2265 = vmatpush2.bf16.msra.mxu0 0
    %2266 = vmatprep.subr.bf16.mxu0 0
    %2267 = vmatpush2.bf16.msra.mxu0 0
    %2268 = vmatprep.subr.bf16.mxu0 0
    %2269 = vmatpush2.bf16.msra.mxu0 0
    %2270 = vmatprep.subr.bf16.mxu0 0
    %2271 = vmatpush2.bf16.msra.mxu0 0
    %2272 = vmatprep.subr.bf16.mxu0 0
    %2273 = vmatpush2.bf16.msra.mxu0 0
    %2274 = vmatprep.subr.bf16.mxu0 0
    %2275 = vmatpush2.bf16.msra.mxu0 0
    %2276 = vmatprep.mubr.bf16.mxu0 0
    %2277 = vmatmul.mubr.bf16.gmra.mxu0 %v2135
    %v2278 = vpop.f32.mrf.mxu0
    %v2279 = vadd.f32 %v2157, %v2278
    %v2280 = vpop.f32.mrf.mxu0
    %v2281 = vadd.f32 %v2161, %v2280
    %v2282 = vpop.f32.mrf.mxu0
    %v2283 = vadd.f32 %v2157, %v2282
    %v2284 = vpop.f32.mrf.mxu0
    %v2285 = vadd.f32 %v2161, %v2284
    %2286 = vdwg.mxu0
    %v2287 = vmul.f32 %v2279, %v2279
    %v2288 = vmul.f32 %v2281, %v2281
    %v2289 = vmul.f32 %v2283, %v2283
    %v2290 = vmul.f32 %v2285, %v2285
    %v2291 = vmul.f32 %v2279, %v2287
    %v2292 = vmul.f32 %v2281, %v2288
    %v2293 = vmul.f32 %v2283, %v2289
    %v2294 = vmul.f32 %v2285, %v2290
    %v2295 = vmul.f32 %v2291, 0.044715
    %v2296 = vmul.f32 %v2292, 0.044715
    %v2297 = vmul.f32 %v2293, 0.044715
    %v2298 = vmul.f32 %v2294, 0.044715
    %v2299 = vadd.f32 %v2279, %v2295
    %v2300 = vadd.f32 %v2281, %v2296
    %v2301 = vadd.f32 %v2283, %v2297
    %v2302 = vadd.f32 %v2285, %v2298
    %v2303 = vmul.f32 %v2299, 0.7978846
    %v2304 = vmul.f32 %v2300, 0.7978846
    %v2305 = vmul.f32 %v2301, 0.7978846
    %v2306 = vmul.f32 %v2302, 0.7978846
    %v2307 = vtanh.pop %v2303
    %v2308 = vtanh.pop %v2304
    %v2309 = vtanh.pop %v2305
    %v2310 = vtanh.pop %v2306
    %v2311 = vadd.f32 %v2307, 1.0
    %v2312 = vadd.f32 %v2308, 1.0
    %v2313 = vadd.f32 %v2309, 1.0
    %v2314 = vadd.f32 %v2310, 1.0
    %v2315 = vmul.f32 %v2311, 0.5
    %v2316 = vmul.f32 %v2312, 0.5
    %v2317 = vmul.f32 %v2313, 0.5
    %v2318 = vmul.f32 %v2314, 0.5
    %v2319 = vmul.f32 %v2279, %v2315
    %v2320 = vmul.f32 %v2281, %v2316
    %v2321 = vmul.f32 %v2283, %v2317
    %v2322 = vmul.f32 %v2285, %v2318
    %v2323 = vpack.c.bf16 %v2321, %v2319
    %v2324 = vpack.c.bf16 %v2322, %v2320
    %v2325 = vld [vmem:[#allocation5] sm:$0xf]
    %v2326 = vld [vmem:[#allocation5 + $0x4] sm:$0xf]
    %v2327 = vld [vmem:[#allocation5 + $0x8] sm:$0xf]
    %v2328 = vld [vmem:[#allocation5 + $0xc] sm:$0xf]
    %v2329 = vld [vmem:[#allocation5 + $0x10] sm:$0xf]
    %v2330 = vld [vmem:[#allocation5 + $0x14] sm:$0xf]
    %v2331 = vld [vmem:[#allocation5 + $0x18] sm:$0xf]
    %v2332 = vld [vmem:[#allocation5 + $0x1c] sm:$0xf]
    %v2333 = vld [vmem:[#allocation5 + $0x20] sm:$0xf]
    %v2334 = vld [vmem:[#allocation5 + $0x24] sm:$0xf]
    %v2335 = vld [vmem:[#allocation5 + $0x28] sm:$0xf]
    %v2336 = vld [vmem:[#allocation5 + $0x2c] sm:$0xf]
    %v2337 = vld [vmem:[#allocation5 + $0x30] sm:$0xf]
    %v2338 = vld [vmem:[#allocation5 + $0x34] sm:$0xf]
    %v2339 = vld [vmem:[#allocation5 + $0x38] sm:$0xf]
    %v2340 = vld [vmem:[#allocation5 + $0x3c] sm:$0xf]
    %v2341 = vld [vmem:[#allocation5 + $0x40] sm:$0xf]
    %v2342 = vld [vmem:[#allocation5 + $0x44] sm:$0xf]
    %v2343 = vld [vmem:[#allocation5 + $0x48] sm:$0xf]
    %v2344 = vld [vmem:[#allocation5 + $0x4c] sm:$0xf]
    %v2345 = vld [vmem:[#allocation5 + $0x50] sm:$0xf]
    %v2346 = vld [vmem:[#allocation5 + $0x54] sm:$0xf]
    %v2347 = vld [vmem:[#allocation5 + $0x58] sm:$0xf]
    %v2348 = vld [vmem:[#allocation5 + $0x5c] sm:$0xf]
    %v2349 = vld [vmem:[#allocation5 + $0x60] sm:$0xf]
    %v2350 = vld [vmem:[#allocation5 + $0x64] sm:$0xf]
    %v2351 = vld [vmem:[#allocation5 + $0x68] sm:$0xf]
    %v2352 = vld [vmem:[#allocation5 + $0x6c] sm:$0xf]
    %v2353 = vld [vmem:[#allocation5 + $0x70] sm:$0xf]
    %v2354 = vld [vmem:[#allocation5 + $0x74] sm:$0xf]
    %v2355 = vld [vmem:[#allocation5 + $0x78] sm:$0xf]
    %v2356 = vld [vmem:[#allocation5 + $0x7c] sm:$0xf]
    %v2357 = vlaneseq
    %v2358 = vshrl.u32 %v2357, 7
    %v2359 = vsub.s32 3, %v2358
    %v2360 = vrot.slane %v146, %v2359
    %v2393 = vunpack.c.l.b16 %v2325
    %v2394 = vunpack.c.l.b16 %v2326
    %v2395 = vunpack.c.l.b16 %v2327
    %v2396 = vunpack.c.l.b16 %v2328
    %v2397 = vunpack.c.l.b16 %v2329
    %v2398 = vunpack.c.l.b16 %v2330
    %v2399 = vunpack.c.l.b16 %v2331
    %v2400 = vunpack.c.l.b16 %v2332
    %v2401 = vunpack.c.l.b16 %v2333
    %v2402 = vunpack.c.l.b16 %v2334
    %v2403 = vunpack.c.l.b16 %v2335
    %v2404 = vunpack.c.l.b16 %v2336
    %v2405 = vunpack.c.l.b16 %v2337
    %v2406 = vunpack.c.l.b16 %v2338
    %v2407 = vunpack.c.l.b16 %v2339
    %v2408 = vunpack.c.l.b16 %v2340
    %v2409 = vunpack.c.l.b16 %v2341
    %v2410 = vunpack.c.l.b16 %v2342
    %v2411 = vunpack.c.l.b16 %v2343
    %v2412 = vunpack.c.l.b16 %v2344
    %v2413 = vunpack.c.l.b16 %v2345
    %v2414 = vunpack.c.l.b16 %v2346
    %v2415 = vunpack.c.l.b16 %v2347
    %v2416 = vunpack.c.l.b16 %v2348
    %v2417 = vunpack.c.l.b16 %v2349
    %v2418 = vunpack.c.l.b16 %v2350
    %v2419 = vunpack.c.l.b16 %v2351
    %v2420 = vunpack.c.l.b16 %v2352
    %v2421 = vunpack.c.l.b16 %v2353
    %v2422 = vunpack.c.l.b16 %v2354
    %v2423 = vunpack.c.l.b16 %v2355
    %v2424 = vunpack.c.l.b16 %v2356
    %v2425 = vpack.c.b16 %v2394, %v2393
    %v2426 = vpack.c.b16 %v2396, %v2395
    %v2427 = vpack.c.b16 %v2398, %v2397
    %v2428 = vpack.c.b16 %v2400, %v2399
    %v2429 = vpack.c.b16 %v2402, %v2401
    %v2430 = vpack.c.b16 %v2404, %v2403
    %v2431 = vpack.c.b16 %v2406, %v2405
    %v2432 = vpack.c.b16 %v2408, %v2407
    %v2433 = vpack.c.b16 %v2410, %v2409
    %v2434 = vpack.c.b16 %v2412, %v2411
    %v2435 = vpack.c.b16 %v2414, %v2413
    %v2436 = vpack.c.b16 %v2416, %v2415
    %v2437 = vpack.c.b16 %v2418, %v2417
    %v2438 = vpack.c.b16 %v2420, %v2419
    %v2439 = vpack.c.b16 %v2422, %v2421
    %v2440 = vpack.c.b16 %v2424, %v2423
    %2457 = vmatprep.subr.bf16.mxu0 0
    %2458 = vmatpush1.bf16.msra.mxu0 %v2432
    %2459 = vmatprep.subr.bf16.mxu0 0
    %2460 = vmatpush1.bf16.msra.mxu0 %v2431
    %2461 = vmatprep.subr.bf16.mxu0 0
    %2462 = vmatpush1.bf16.msra.mxu0 %v2430
    %2463 = vmatprep.subr.bf16.mxu0 0
    %2464 = vmatpush1.bf16.msra.mxu0 %v2429
    %2465 = vmatprep.subr.bf16.mxu0 0
    %2466 = vmatpush1.bf16.msra.mxu0 %v2428
    %2467 = vmatprep.subr.bf16.mxu0 0
    %2468 = vmatpush1.bf16.msra.mxu0 %v2427
    %2469 = vmatprep.subr.bf16.mxu0 0
    %2470 = vmatpush1.bf16.msra.mxu0 %v2426
    %2471 = vmatprep.subr.bf16.mxu0 0
    %2472 = vmatpush1.bf16.msra.mxu0 %v2425
    %2473 = vmatprep.subr.bf16.mxu0 0
    %2474 = vmatpush2.bf16.msra.mxu0 %v2440
    %2475 = vmatprep.subr.bf16.mxu0 0
    %2476 = vmatpush2.bf16.msra.mxu0 %v2439
    %2477 = vmatprep.subr.bf16.mxu0 0
    %2478 = vmatpush2.bf16.msra.mxu0 %v2438
    %2479 = vmatprep.subr.bf16.mxu0 0
    %2480 = vmatpush2.bf16.msra.mxu0 %v2437
    %2481 = vmatprep.subr.bf16.mxu0 0
    %2482 = vmatpush2.bf16.msra.mxu0 %v2436
    %2483 = vmatprep.subr.bf16.mxu0 0
    %2484 = vmatpush2.bf16.msra.mxu0 %v2435
    %2485 = vmatprep.subr.bf16.mxu0 0
    %2486 = vmatpush2.bf16.msra.mxu0 %v2434
    %2487 = vmatprep.subr.bf16.mxu0 0
    %2488 = vmatpush2.bf16.msra.mxu0 %v2433
    %2489 = vmatprep.mubr.bf16.mxu0 %v2324
    %2490 = vmatmul.mubr.bf16.gmra.mxu0 %v2323
    %v2491 = vpop.f32.mrf.mxu0
    %v2492 = vadd.f32 %v2360, %v2491
    %v2493 = vpop.f32.mrf.mxu0
    %v2494 = vpop.f32.mrf.mxu0
    %v2495 = vadd.f32 %v2360, %v2494
    %v2496 = vpop.f32.mrf.mxu0
    %2497 = vdwg.mxu0
    %v2498 = vadd.f32 %v2492, %v2133
    %v2499 = vadd.f32 %v2495, %v2134
    %2500 = vadd.xlane.f32.xlu0 %v2498
    %v2501 = vpop.xlane.xlu0 %2500
    %2502 = vadd.xlane.f32.xlu0 %v2499
    %v2503 = vpop.xlane.xlu0 %2502
    %v2504 = vmul.f32 %v2501, %v109
    %v2505 = vmul.f32 %v2503, %v109
    %v2506 = vmul.f32 %v2498, %v2498
    %v2507 = vmul.f32 %v2499, %v2499
    %2508 = vadd.xlane.f32.xlu0 %v2506
    %v2509 = vpop.xlane.xlu0 %2508
    %2510 = vadd.xlane.f32.xlu0 %v2507
    %v2511 = vpop.xlane.xlu0 %2510
    %v2512 = vmul.f32 %v2509, %v109
    %v2513 = vmul.f32 %v2511, %v109
    %v2514 = vmul.f32 %v2504, %v2504
    %v2515 = vmul.f32 %v2505, %v2505
    %v2516 = vsub.f32 %v2512, %v2514
    %v2517 = vsub.f32 %v2513, %v2515
    %v2518 = vsub.f32 %v2498, %v2504
    %v2519 = vsub.f32 %v2499, %v2505
    %v2520 = vadd.f32 %v2516, 1e-05
    %v2521 = vadd.f32 %v2517, 1e-05
    %v2522 = vrsqrt.pop %v2520
    %v2523 = vrsqrt.pop %v2521
    %v2524 = vmul.f32 %v2518, %v2522
    %v2525 = vmul.f32 %v2519, %v2523
    %v2526 = vlaneseq
    %v2527 = vshrl.u32 %v2526, 7
    %v2528 = vsub.s32 4, %v2527
    %v2529 = vrot.slane %v146, %v2528
    %v2530 = vmul.f32 %v2524, %v2529
    %v2531 = vmul.f32 %v2525, %v2529
    %v2532 = vlaneseq
    %v2533 = vshrl.u32 %v2532, 7
    %v2534 = vsub.s32 5, %v2533
    %v2535 = vrot.slane %v146, %v2534
    %v2536 = vadd.f32 %v2530, %v2535
    %v2537 = vadd.f32 %v2531, %v2535
    %s2538 = scalar_lea.vmem %s9, 8
    %v2539 = vld [vmem:[%s2538] sm:$0x3f]
    %v2540 = vpack.c.bf16 %v2537, %v2536
    %s2541 = scalar_lea.vmem [#allocation2], 192
    %v2542 = vld [vmem:[%s2541] sm:$0xff]
    %v2543 = vld [vmem:[%s2541 + $0x8] sm:$0xf]
    %v2544 = vld [vmem:[%s2541 + $0xc] sm:$0xff]
    %v2545 = vld [vmem:[%s2541 + $0x14] sm:$0xf]
    %v2546 = vld [vmem:[%s2541 + $0x18] sm:$0xff]
    %v2547 = vld [vmem:[%s2541 + $0x20] sm:$0xf]
    %v2548 = vld [vmem:[%s2541 + $0x24] sm:$0xff]
    %v2549 = vld [vmem:[%s2541 + $0x2c] sm:$0xf]
    %v2550 = vld [vmem:[%s2541 + $0x30] sm:$0xff]
    %v2551 = vld [vmem:[%s2541 + $0x38] sm:$0xf]
    %v2552 = vld [vmem:[%s2541 + $0x3c] sm:$0xff]
    %v2553 = vld [vmem:[%s2541 + $0x44] sm:$0xf]
    %v2554 = vld [vmem:[%s2541 + $0x48] sm:$0xff]
    %v2555 = vld [vmem:[%s2541 + $0x50] sm:$0xf]
    %v2556 = vld [vmem:[%s2541 + $0x54] sm:$0xff]
    %v2557 = vld [vmem:[%s2541 + $0x5c] sm:$0xf]
    %v2558 = vld [vmem:[%s2541 + $0x60] sm:$0xff]
    %v2559 = vld [vmem:[%s2541 + $0x68] sm:$0xf]
    %v2560 = vld [vmem:[%s2541 + $0x6c] sm:$0xff]
    %v2561 = vld [vmem:[%s2541 + $0x74] sm:$0xf]
    %v2562 = vld [vmem:[%s2541 + $0x78] sm:$0xff]
    %v2563 = vld [vmem:[%s2541 + $0x80] sm:$0xf]
    %v2564 = vld [vmem:[%s2541 + $0x84] sm:$0xff]
    %v2565 = vld [vmem:[%s2541 + $0x8c] sm:$0xf]
    %v2566 = vld [vmem:[%s2541 + $0x90] sm:$0xff]
    %v2567 = vld [vmem:[%s2541 + $0x98] sm:$0xf]
    %v2568 = vld [vmem:[%s2541 + $0x9c] sm:$0xff]
    %v2569 = vld [vmem:[%s2541 + $0xa4] sm:$0xf]
    %v2570 = vld [vmem:[%s2541 + $0xa8] sm:$0xff]
    %v2571 = vld [vmem:[%s2541 + $0xb0] sm:$0xf]
    %v2572 = vld [vmem:[%s2541 + $0xb4] sm:$0xff]
    %v2573 = vld [vmem:[%s2541 + $0xbc] sm:$0xf]
    %s2574 = scalar_lea.vmem %s4, 3
    %v2575 = vld [vmem:[%s2574] sm:$0x7]
    %v2577 = vlaneseq
    %v2578 = vshrl.u32 %v2577, 7
    %v2579 = vsub.s32 0, %v2578
    %v2580 = vrot.slane %v2575, %v2579
    %v2581 = vlaneseq
    %v2582 = vshrl.u32 %v2581, 7
    %v2583 = vsub.s32 1, %v2582
    %v2584 = vrot.slane %v2575, %v2583
    %v2585 = vlaneseq
    %v2586 = vshrl.u32 %v2585, 7
    %v2587 = vsub.s32 2, %v2586
    %v2588 = vrot.slane %v2575, %v2587
    %v2624 = vunpack.c.l.b16 %v2542
    %v2625 = vunpack.c.h.b16 %v2542
    %v2626 = vunpack.c.l.b16 %v2543
    %v2627 = vunpack.c.l.b16 %v2544
    %v2628 = vunpack.c.h.b16 %v2544
    %v2629 = vunpack.c.l.b16 %v2545
    %v2630 = vunpack.c.l.b16 %v2546
    %v2631 = vunpack.c.h.b16 %v2546
    %v2632 = vunpack.c.l.b16 %v2547
    %v2633 = vunpack.c.l.b16 %v2548
    %v2634 = vunpack.c.h.b16 %v2548
    %v2635 = vunpack.c.l.b16 %v2549
    %v2636 = vunpack.c.l.b16 %v2550
    %v2637 = vunpack.c.h.b16 %v2550
    %v2638 = vunpack.c.l.b16 %v2551
    %v2639 = vunpack.c.l.b16 %v2552
    %v2640 = vunpack.c.h.b16 %v2552
    %v2641 = vunpack.c.l.b16 %v2553
    %v2642 = vunpack.c.l.b16 %v2554
    %v2643 = vunpack.c.h.b16 %v2554
    %v2644 = vunpack.c.l.b16 %v2555
    %v2645 = vunpack.c.l.b16 %v2556
    %v2646 = vunpack.c.h.b16 %v2556
    %v2647 = vunpack.c.l.b16 %v2557
    %v2648 = vunpack.c.l.b16 %v2558
    %v2649 = vunpack.c.h.b16 %v2558
    %v2650 = vunpack.c.l.b16 %v2559
    %v2651 = vunpack.c.l.b16 %v2560
    %v2652 = vunpack.c.h.b16 %v2560
    %v2653 = vunpack.c.l.b16 %v2561
    %v2654 = vunpack.c.l.b16 %v2562
    %v2655 = vunpack.c.h.b16 %v2562
    %v2656 = vunpack.c.l.b16 %v2563
    %v2657 = vunpack.c.l.b16 %v2564
    %v2658 = vunpack.c.h.b16 %v2564
    %v2659 = vunpack.c.l.b16 %v2565
    %v2660 = vunpack.c.l.b16 %v2566
    %v2661 = vunpack.c.h.b16 %v2566
    %v2662 = vunpack.c.l.b16 %v2567
    %v2663 = vunpack.c.l.b16 %v2568
    %v2664 = vunpack.c.h.b16 %v2568
    %v2665 = vunpack.c.l.b16 %v2569
    %v2666 = vunpack.c.l.b16 %v2570
    %v2667 = vunpack.c.h.b16 %v2570
    %v2668 = vunpack.c.l.b16 %v2571
    %v2669 = vunpack.c.l.b16 %v2572
    %v2670 = vunpack.c.h.b16 %v2572
    %v2671 = vunpack.c.l.b16 %v2573
    %v2672 = vpack.c.b16 %v2627, %v2624
    %v2673 = vpack.c.b16 %v2628, %v2625
    %v2674 = vpack.c.b16 %v2629, %v2626
    %v2675 = vpack.c.b16 %v2633, %v2630
    %v2676 = vpack.c.b16 %v2634, %v2631
    %v2677 = vpack.c.b16 %v2635, %v2632
    %v2678 = vpack.c.b16 %v2639, %v2636
    %v2679 = vpack.c.b16 %v2640, %v2637
    %v2680 = vpack.c.b16 %v2641, %v2638
    %v2681 = vpack.c.b16 %v2645, %v2642
    %v2682 = vpack.c.b16 %v2646, %v2643
    %v2683 = vpack.c.b16 %v2647, %v2644
    %v2684 = vpack.c.b16 %v2651, %v2648
    %v2685 = vpack.c.b16 %v2652, %v2649
    %v2686 = vpack.c.b16 %v2653, %v2650
    %v2687 = vpack.c.b16 %v2657, %v2654
    %v2688 = vpack.c.b16 %v2658, %v2655
    %v2689 = vpack.c.b16 %v2659, %v2656
    %v2690 = vpack.c.b16 %v2663, %v2660
    %v2691 = vpack.c.b16 %v2664, %v2661
    %v2692 = vpack.c.b16 %v2665, %v2662
    %v2693 = vpack.c.b16 %v2669, %v2666
    %v2694 = vpack.c.b16 %v2670, %v2667
    %v2695 = vpack.c.b16 %v2671, %v2668
    %2720 = vmatprep.subr.bf16.mxu0 %v2694
    %2721 = vmatpush1.bf16.msra.mxu0 %v2693
    %2722 = vmatprep.subr.bf16.mxu0 %v2691
    %2723 = vmatpush1.bf16.msra.mxu0 %v2690
    %2724 = vmatprep.subr.bf16.mxu0 %v2688
    %2725 = vmatpush1.bf16.msra.mxu0 %v2687
    %2726 = vmatprep.subr.bf16.mxu0 %v2685
    %2727 = vmatpush1.bf16.msra.mxu0 %v2684
    %2728 = vmatprep.subr.bf16.mxu0 %v2682
    %2729 = vmatpush1.bf16.msra.mxu0 %v2681
    %2730 = vmatprep.subr.bf16.mxu0 %v2679
    %2731 = vmatpush1.bf16.msra.mxu0 %v2678
    %2732 = vmatprep.subr.bf16.mxu0 %v2676
    %2733 = vmatpush1.bf16.msra.mxu0 %v2675
    %2734 = vmatprep.subr.bf16.mxu0 %v2673
    %2735 = vmatpush1.bf16.msra.mxu0 %v2672
    %2736 = vmatprep.subr.bf16.mxu0 0
    %2737 = vmatpush2.bf16.msra.mxu0 0
    %2738 = vmatprep.subr.bf16.mxu0 0
    %2739 = vmatpush2.bf16.msra.mxu0 0
    %2740 = vmatprep.subr.bf16.mxu0 0
    %2741 = vmatpush2.bf16.msra.mxu0 0
    %2742 = vmatprep.subr.bf16.mxu0 0
    %2743 = vmatpush2.bf16.msra.mxu0 0
    %2744 = vmatprep.subr.bf16.mxu0 0
    %2745 = vmatpush2.bf16.msra.mxu0 0
    %2746 = vmatprep.subr.bf16.mxu0 0
    %2747 = vmatpush2.bf16.msra.mxu0 0
    %2748 = vmatprep.subr.bf16.mxu0 0
    %2749 = vmatpush2.bf16.msra.mxu0 0
    %2750 = vmatprep.subr.bf16.mxu0 0
    %2751 = vmatpush2.bf16.msra.mxu0 0
    %2752 = vmatprep.mubr.bf16.mxu0 0
    %2753 = vmatmul.mubr.bf16.gmra.mxu0 %v2540
    %v2754 = vpop.f32.mrf.mxu0
    %v2755 = vadd.f32 %v2580, %v2754
    %v2756 = vpop.f32.mrf.mxu0
    %v2757 = vadd.f32 %v2584, %v2756
    %v2758 = vpop.f32.mrf.mxu0
    %v2759 = vadd.f32 %v2580, %v2758
    %v2760 = vpop.f32.mrf.mxu0
    %v2761 = vadd.f32 %v2584, %v2760
    %2762 = vdwg.mxu0
    %2763 = vmatprep.subr.bf16.mxu0 0
    %2764 = vmatpush1.bf16.msra.mxu0 %v2695
    %2765 = vmatprep.subr.bf16.mxu0 0
    %2766 = vmatpush1.bf16.msra.mxu0 %v2692
    %2767 = vmatprep.subr.bf16.mxu0 0
    %2768 = vmatpush1.bf16.msra.mxu0 %v2689
    %2769 = vmatprep.subr.bf16.mxu0 0
    %2770 = vmatpush1.bf16.msra.mxu0 %v2686
    %2771 = vmatprep.subr.bf16.mxu0 0
    %2772 = vmatpush1.bf16.msra.mxu0 %v2683
    %2773 = vmatprep.subr.bf16.mxu0 0
    %2774 = vmatpush1.bf16.msra.mxu0 %v2680
    %2775 = vmatprep.subr.bf16.mxu0 0
    %2776 = vmatpush1.bf16.msra.mxu0 %v2677
    %2777 = vmatprep.subr.bf16.mxu0 0
    %2778 = vmatpush1.bf16.msra.mxu0 %v2674
    %2779 = vmatprep.subr.bf16.mxu0 0
    %2780 = vmatpush2.bf16.msra.mxu0 0
    %2781 = vmatprep.subr.bf16.mxu0 0
    %2782 = vmatpush2.bf16.msra.mxu0 0
    %2783 = vmatprep.subr.bf16.mxu0 0
    %2784 = vmatpush2.bf16.msra.mxu0 0
    %2785 = vmatprep.subr.bf16.mxu0 0
    %2786 = vmatpush2.bf16.msra.mxu0 0
    %2787 = vmatprep.subr.bf16.mxu0 0
    %2788 = vmatpush2.bf16.msra.mxu0 0
    %2789 = vmatprep.subr.bf16.mxu0 0
    %2790 = vmatpush2.bf16.msra.mxu0 0
    %2791 = vmatprep.subr.bf16.mxu0 0
    %2792 = vmatpush2.bf16.msra.mxu0 0
    %2793 = vmatprep.subr.bf16.mxu0 0
    %2794 = vmatpush2.bf16.msra.mxu0 0
    %2795 = vmatprep.mubr.bf16.mxu0 0
    %2796 = vmatmul.mubr.bf16.gmra.mxu0 %v2540
    %v2797 = vpop.f32.mrf.mxu0
    %v2798 = vadd.f32 %v2588, %v2797
    %v2799 = vpop.f32.mrf.mxu0
    %v2800 = vpop.f32.mrf.mxu0
    %v2801 = vadd.f32 %v2588, %v2800
    %v2802 = vpop.f32.mrf.mxu0
    %2803 = vdwg.mxu0
    %v2804 = vpack.c.bf16 %v2759, %v2755
    %2806 = vrot.lane.b32.xlu0 %v2804, 96
    %v2807 = vpop.permute.xlu0 %2806
    %2808 = vrot.lane.b32.xlu0 %v2804, 64
    %v2809 = vpop.permute.xlu0 %2808
    %2810 = vrot.lane.b32.xlu0 %v2804, 32
    %v2811 = vpop.permute.xlu0 %2810
    %v2814 = vpack.i.b16 %v2807, %v2804
    %v2816 = vshrl.u32 %v2804, 16
    %v2817 = vshrl.u32 %v2807, 16
    %v2818 = vpack.i.b16 %v2817, %v2816
    %v2822 = vpack.i.b16 %v2811, %v2809
    %v2824 = vshrl.u32 %v2809, 16
    %v2825 = vshrl.u32 %v2811, 16
    %v2826 = vpack.i.b16 %v2825, %v2824
    %v2828 = vcombine.high %v2814, %v434
    %v2830 = vunpack.c.l.s4 1983009808
    %v2831 = vunpack.c.0.s8 %v2830
    %v2832 = vlaneseq
    %v2833 = vshrl.u32 %v2832, 7
    %v2834 = vsub.s32 %v2831, %v2833
    %v2835 = vrot.slane %v2814, %v2834
    %v2837 = vunpack.c.l.s4 1983009808
    %v2838 = vunpack.c.0.s8 %v2837
    %v2839 = vlaneseq
    %v2840 = vshrl.u32 %v2839, 7
    %v2841 = vsub.s32 %v2838, %v2840
    %v2842 = vrot.slane %v2828, %v2841
    %v2843 = vcombine.high %v2822, %v434
    %v2845 = vunpack.c.l.s4 1983009808
    %v2846 = vunpack.c.0.s8 %v2845
    %v2847 = vlaneseq
    %v2848 = vshrl.u32 %v2847, 7
    %v2849 = vsub.s32 %v2846, %v2848
    %v2850 = vrot.slane %v2822, %v2849
    %v2852 = vunpack.c.l.s4 1983009808
    %v2853 = vunpack.c.0.s8 %v2852
    %v2854 = vlaneseq
    %v2855 = vshrl.u32 %v2854, 7
    %v2856 = vsub.s32 %v2853, %v2855
    %v2857 = vrot.slane %v2843, %v2856
    %v2858 = vcombine.low %v2835, %v2850
    %v2859 = vcombine.high %v2835, %v2850
    %v2861 = vunpack.c.l.s4 1934713408
    %v2862 = vunpack.c.0.s8 %v2861
    %v2863 = vlaneseq
    %v2864 = vshrl.u32 %v2863, 7
    %v2865 = vsub.s32 %v2862, %v2864
    %v2866 = vrot.slane %v2858, %v2865
    %v2868 = vunpack.c.l.s4 1934713408
    %v2869 = vunpack.c.0.s8 %v2868
    %v2870 = vlaneseq
    %v2871 = vshrl.u32 %v2870, 7
    %v2872 = vsub.s32 %v2869, %v2871
    %v2873 = vrot.slane %v2859, %v2872
    %v2874 = vcombine.low %v2842, %v2857
    %v2875 = vcombine.high %v2842, %v2857
    %v2877 = vunpack.c.l.s4 1934713408
    %v2878 = vunpack.c.0.s8 %v2877
    %v2879 = vlaneseq
    %v2880 = vshrl.u32 %v2879, 7
    %v2881 = vsub.s32 %v2878, %v2880
    %v2882 = vrot.slane %v2874, %v2881
    %v2884 = vunpack.c.l.s4 1934713408
    %v2885 = vunpack.c.0.s8 %v2884
    %v2886 = vlaneseq
    %v2887 = vshrl.u32 %v2886, 7
    %v2888 = vsub.s32 %v2885, %v2887
    %v2889 = vrot.slane %v2875, %v2888
    %v2890 = vcombine.high %v2866, 0
    %v2891 = vcombine.high %v2873, 0
    %v2892 = vcombine.high %v2882, 0
    %v2893 = vcombine.high %v2889, 0
    %v2894 = vcombine.high %v2818, %v437
    %v2896 = vunpack.c.l.s4 1983009808
    %v2897 = vunpack.c.0.s8 %v2896
    %v2898 = vlaneseq
    %v2899 = vshrl.u32 %v2898, 7
    %v2900 = vsub.s32 %v2897, %v2899
    %v2901 = vrot.slane %v2818, %v2900
    %v2903 = vunpack.c.l.s4 1983009808
    %v2904 = vunpack.c.0.s8 %v2903
    %v2905 = vlaneseq
    %v2906 = vshrl.u32 %v2905, 7
    %v2907 = vsub.s32 %v2904, %v2906
    %v2908 = vrot.slane %v2894, %v2907
    %v2909 = vcombine.high %v2826, %v437
    %v2911 = vunpack.c.l.s4 1983009808
    %v2912 = vunpack.c.0.s8 %v2911
    %v2913 = vlaneseq
    %v2914 = vshrl.u32 %v2913, 7
    %v2915 = vsub.s32 %v2912, %v2914
    %v2916 = vrot.slane %v2826, %v2915
    %v2918 = vunpack.c.l.s4 1983009808
    %v2919 = vunpack.c.0.s8 %v2918
    %v2920 = vlaneseq
    %v2921 = vshrl.u32 %v2920, 7
    %v2922 = vsub.s32 %v2919, %v2921
    %v2923 = vrot.slane %v2909, %v2922
    %v2924 = vcombine.low %v2901, %v2916
    %v2925 = vcombine.high %v2901, %v2916
    %v2927 = vunpack.c.l.s4 1934713408
    %v2928 = vunpack.c.0.s8 %v2927
    %v2929 = vlaneseq
    %v2930 = vshrl.u32 %v2929, 7
    %v2931 = vsub.s32 %v2928, %v2930
    %v2932 = vrot.slane %v2924, %v2931
    %v2934 = vunpack.c.l.s4 1934713408
    %v2935 = vunpack.c.0.s8 %v2934
    %v2936 = vlaneseq
    %v2937 = vshrl.u32 %v2936, 7
    %v2938 = vsub.s32 %v2935, %v2937
    %v2939 = vrot.slane %v2925, %v2938
    %v2940 = vcombine.low %v2908, %v2923
    %v2941 = vcombine.high %v2908, %v2923
    %v2943 = vunpack.c.l.s4 1934713408
    %v2944 = vunpack.c.0.s8 %v2943
    %v2945 = vlaneseq
    %v2946 = vshrl.u32 %v2945, 7
    %v2947 = vsub.s32 %v2944, %v2946
    %v2948 = vrot.slane %v2940, %v2947
    %v2950 = vunpack.c.l.s4 1934713408
    %v2951 = vunpack.c.0.s8 %v2950
    %v2952 = vlaneseq
    %v2953 = vshrl.u32 %v2952, 7
    %v2954 = vsub.s32 %v2951, %v2953
    %v2955 = vrot.slane %v2941, %v2954
    %v2956 = vcombine.high %v2932, 0
    %v2957 = vcombine.high %v2939, 0
    %v2958 = vcombine.high %v2948, 0
    %v2959 = vcombine.high %v2955, 0
    %v2960 = vcombine.low %v2866, %v2873
    %v2962 = vunpack.c.l.s4 1983009808
    %v2963 = vunpack.c.0.s8 %v2962
    %v2964 = vlaneseq
    %v2965 = vshrl.u32 %v2964, 7
    %v2966 = vsub.s32 %v2963, %v2965
    %v2967 = vrot.slane %v2960, %v2966
    %v2968 = vcombine.low %v2890, %v2891
    %v2970 = vunpack.c.l.s4 1983009808
    %v2971 = vunpack.c.0.s8 %v2970
    %v2972 = vlaneseq
    %v2973 = vshrl.u32 %v2972, 7
    %v2974 = vsub.s32 %v2971, %v2973
    %v2975 = vrot.slane %v2968, %v2974
    %v2976 = vcombine.low %v2882, %v2889
    %v2978 = vunpack.c.l.s4 1983009808
    %v2979 = vunpack.c.0.s8 %v2978
    %v2980 = vlaneseq
    %v2981 = vshrl.u32 %v2980, 7
    %v2982 = vsub.s32 %v2979, %v2981
    %v2983 = vrot.slane %v2976, %v2982
    %v2984 = vcombine.low %v2892, %v2893
    %v2986 = vunpack.c.l.s4 1983009808
    %v2987 = vunpack.c.0.s8 %v2986
    %v2988 = vlaneseq
    %v2989 = vshrl.u32 %v2988, 7
    %v2990 = vsub.s32 %v2987, %v2989
    %v2991 = vrot.slane %v2984, %v2990
    %v2992 = vcombine.low %v2967, %v2975
    %v2994 = vunpack.c.l.s4 1934713408
    %v2995 = vunpack.c.0.s8 %v2994
    %v2996 = vlaneseq
    %v2997 = vshrl.u32 %v2996, 7
    %v2998 = vsub.s32 %v2995, %v2997
    %v2999 = vrot.slane %v2992, %v2998
    %v3000 = vcombine.low %v2983, %v2991
    %v3002 = vunpack.c.l.s4 1934713408
    %v3003 = vunpack.c.0.s8 %v3002
    %v3004 = vlaneseq
    %v3005 = vshrl.u32 %v3004, 7
    %v3006 = vsub.s32 %v3003, %v3005
    %v3007 = vrot.slane %v3000, %v3006
    %v3008 = vcombine.low %v2999, %v3007
    %v3009 = vcombine.high %v2999, %v3007
    %v3010 = vcombine.low %v2932, %v2939
    %v3012 = vunpack.c.l.s4 1983009808
    %v3013 = vunpack.c.0.s8 %v3012
    %v3014 = vlaneseq
    %v3015 = vshrl.u32 %v3014, 7
    %v3016 = vsub.s32 %v3013, %v3015
    %v3017 = vrot.slane %v3010, %v3016
    %v3018 = vcombine.low %v2956, %v2957
    %v3020 = vunpack.c.l.s4 1983009808
    %v3021 = vunpack.c.0.s8 %v3020
    %v3022 = vlaneseq
    %v3023 = vshrl.u32 %v3022, 7
    %v3024 = vsub.s32 %v3021, %v3023
    %v3025 = vrot.slane %v3018, %v3024
    %v3026 = vcombine.low %v2948, %v2955
    %v3028 = vunpack.c.l.s4 1983009808
    %v3029 = vunpack.c.0.s8 %v3028
    %v3030 = vlaneseq
    %v3031 = vshrl.u32 %v3030, 7
    %v3032 = vsub.s32 %v3029, %v3031
    %v3033 = vrot.slane %v3026, %v3032
    %v3034 = vcombine.low %v2958, %v2959
    %v3036 = vunpack.c.l.s4 1983009808
    %v3037 = vunpack.c.0.s8 %v3036
    %v3038 = vlaneseq
    %v3039 = vshrl.u32 %v3038, 7
    %v3040 = vsub.s32 %v3037, %v3039
    %v3041 = vrot.slane %v3034, %v3040
    %v3042 = vcombine.low %v3017, %v3025
    %v3044 = vunpack.c.l.s4 1934713408
    %v3045 = vunpack.c.0.s8 %v3044
    %v3046 = vlaneseq
    %v3047 = vshrl.u32 %v3046, 7
    %v3048 = vsub.s32 %v3045, %v3047
    %v3049 = vrot.slane %v3042, %v3048
    %v3050 = vcombine.low %v3033, %v3041
    %v3052 = vunpack.c.l.s4 1934713408
    %v3053 = vunpack.c.0.s8 %v3052
    %v3054 = vlaneseq
    %v3055 = vshrl.u32 %v3054, 7
    %v3056 = vsub.s32 %v3053, %v3055
    %v3057 = vrot.slane %v3050, %v3056
    %v3058 = vcombine.low %v3049, %v3057
    %v3059 = vcombine.high %v3049, %v3057
    %v3062 = vpack.i.b16 %v3058, %v3008
    %v3063 = vshrl.u32 %v3008, 16
    %v3064 = vshrl.u32 %v3058, 16
    %v3065 = vpack.i.b16 %v3064, %v3063
    %v3068 = vpack.i.b16 %v3059, %v3009
    %v3069 = vshrl.u32 %v3009, 16
    %v3070 = vshrl.u32 %v3059, 16
    %v3071 = vpack.i.b16 %v3070, %v3069
    %v3072 = vpack.c.bf16 %v2761, %v2757
    %3074 = vrot.lane.b32.xlu0 %v3072, 96
    %v3075 = vpop.permute.xlu0 %3074
    %3076 = vrot.lane.b32.xlu0 %v3072, 64
    %v3077 = vpop.permute.xlu0 %3076
    %3078 = vrot.lane.b32.xlu0 %v3072, 32
    %v3079 = vpop.permute.xlu0 %3078
    %v3082 = vpack.i.b16 %v3075, %v3072
    %v3084 = vshrl.u32 %v3072, 16
    %v3085 = vshrl.u32 %v3075, 16
    %v3086 = vpack.i.b16 %v3085, %v3084
    %v3090 = vpack.i.b16 %v3079, %v3077
    %v3092 = vshrl.u32 %v3077, 16
    %v3093 = vshrl.u32 %v3079, 16
    %v3094 = vpack.i.b16 %v3093, %v3092
    %v3096 = vcombine.high %v3082, %v434
    %v3098 = vunpack.c.l.s4 1983009808
    %v3099 = vunpack.c.0.s8 %v3098
    %v3100 = vlaneseq
    %v3101 = vshrl.u32 %v3100, 7
    %v3102 = vsub.s32 %v3099, %v3101
    %v3103 = vrot.slane %v3082, %v3102
    %v3105 = vunpack.c.l.s4 1983009808
    %v3106 = vunpack.c.0.s8 %v3105
    %v3107 = vlaneseq
    %v3108 = vshrl.u32 %v3107, 7
    %v3109 = vsub.s32 %v3106, %v3108
    %v3110 = vrot.slane %v3096, %v3109
    %v3111 = vcombine.high %v3090, %v434
    %v3113 = vunpack.c.l.s4 1983009808
    %v3114 = vunpack.c.0.s8 %v3113
    %v3115 = vlaneseq
    %v3116 = vshrl.u32 %v3115, 7
    %v3117 = vsub.s32 %v3114, %v3116
    %v3118 = vrot.slane %v3090, %v3117
    %v3120 = vunpack.c.l.s4 1983009808
    %v3121 = vunpack.c.0.s8 %v3120
    %v3122 = vlaneseq
    %v3123 = vshrl.u32 %v3122, 7
    %v3124 = vsub.s32 %v3121, %v3123
    %v3125 = vrot.slane %v3111, %v3124
    %v3126 = vcombine.low %v3103, %v3118
    %v3127 = vcombine.high %v3103, %v3118
    %v3129 = vunpack.c.l.s4 1934713408
    %v3130 = vunpack.c.0.s8 %v3129
    %v3131 = vlaneseq
    %v3132 = vshrl.u32 %v3131, 7
    %v3133 = vsub.s32 %v3130, %v3132
    %v3134 = vrot.slane %v3126, %v3133
    %v3136 = vunpack.c.l.s4 1934713408
    %v3137 = vunpack.c.0.s8 %v3136
    %v3138 = vlaneseq
    %v3139 = vshrl.u32 %v3138, 7
    %v3140 = vsub.s32 %v3137, %v3139
    %v3141 = vrot.slane %v3127, %v3140
    %v3142 = vcombine.low %v3110, %v3125
    %v3143 = vcombine.high %v3110, %v3125
    %v3145 = vunpack.c.l.s4 1934713408
    %v3146 = vunpack.c.0.s8 %v3145
    %v3147 = vlaneseq
    %v3148 = vshrl.u32 %v3147, 7
    %v3149 = vsub.s32 %v3146, %v3148
    %v3150 = vrot.slane %v3142, %v3149
    %v3152 = vunpack.c.l.s4 1934713408
    %v3153 = vunpack.c.0.s8 %v3152
    %v3154 = vlaneseq
    %v3155 = vshrl.u32 %v3154, 7
    %v3156 = vsub.s32 %v3153, %v3155
    %v3157 = vrot.slane %v3143, %v3156
    %v3158 = vcombine.high %v3134, 0
    %v3159 = vcombine.high %v3141, 0
    %v3160 = vcombine.high %v3150, 0
    %v3161 = vcombine.high %v3157, 0
    %v3162 = vcombine.high %v3086, %v437
    %v3164 = vunpack.c.l.s4 1983009808
    %v3165 = vunpack.c.0.s8 %v3164
    %v3166 = vlaneseq
    %v3167 = vshrl.u32 %v3166, 7
    %v3168 = vsub.s32 %v3165, %v3167
    %v3169 = vrot.slane %v3086, %v3168
    %v3171 = vunpack.c.l.s4 1983009808
    %v3172 = vunpack.c.0.s8 %v3171
    %v3173 = vlaneseq
    %v3174 = vshrl.u32 %v3173, 7
    %v3175 = vsub.s32 %v3172, %v3174
    %v3176 = vrot.slane %v3162, %v3175
    %v3177 = vcombine.high %v3094, %v437
    %v3179 = vunpack.c.l.s4 1983009808
    %v3180 = vunpack.c.0.s8 %v3179
    %v3181 = vlaneseq
    %v3182 = vshrl.u32 %v3181, 7
    %v3183 = vsub.s32 %v3180, %v3182
    %v3184 = vrot.slane %v3094, %v3183
    %v3186 = vunpack.c.l.s4 1983009808
    %v3187 = vunpack.c.0.s8 %v3186
    %v3188 = vlaneseq
    %v3189 = vshrl.u32 %v3188, 7
    %v3190 = vsub.s32 %v3187, %v3189
    %v3191 = vrot.slane %v3177, %v3190
    %v3192 = vcombine.low %v3169, %v3184
    %v3193 = vcombine.high %v3169, %v3184
    %v3195 = vunpack.c.l.s4 1934713408
    %v3196 = vunpack.c.0.s8 %v3195
    %v3197 = vlaneseq
    %v3198 = vshrl.u32 %v3197, 7
    %v3199 = vsub.s32 %v3196, %v3198
    %v3200 = vrot.slane %v3192, %v3199
    %v3202 = vunpack.c.l.s4 1934713408
    %v3203 = vunpack.c.0.s8 %v3202
    %v3204 = vlaneseq
    %v3205 = vshrl.u32 %v3204, 7
    %v3206 = vsub.s32 %v3203, %v3205
    %v3207 = vrot.slane %v3193, %v3206
    %v3208 = vcombine.low %v3176, %v3191
    %v3209 = vcombine.high %v3176, %v3191
    %v3211 = vunpack.c.l.s4 1934713408
    %v3212 = vunpack.c.0.s8 %v3211
    %v3213 = vlaneseq
    %v3214 = vshrl.u32 %v3213, 7
    %v3215 = vsub.s32 %v3212, %v3214
    %v3216 = vrot.slane %v3208, %v3215
    %v3218 = vunpack.c.l.s4 1934713408
    %v3219 = vunpack.c.0.s8 %v3218
    %v3220 = vlaneseq
    %v3221 = vshrl.u32 %v3220, 7
    %v3222 = vsub.s32 %v3219, %v3221
    %v3223 = vrot.slane %v3209, %v3222
    %v3224 = vcombine.high %v3200, 0
    %v3225 = vcombine.high %v3207, 0
    %v3226 = vcombine.high %v3216, 0
    %v3227 = vcombine.high %v3223, 0
    %v3228 = vcombine.low %v3134, %v3141
    %v3230 = vunpack.c.l.s4 1983009808
    %v3231 = vunpack.c.0.s8 %v3230
    %v3232 = vlaneseq
    %v3233 = vshrl.u32 %v3232, 7
    %v3234 = vsub.s32 %v3231, %v3233
    %v3235 = vrot.slane %v3228, %v3234
    %v3236 = vcombine.low %v3158, %v3159
    %v3238 = vunpack.c.l.s4 1983009808
    %v3239 = vunpack.c.0.s8 %v3238
    %v3240 = vlaneseq
    %v3241 = vshrl.u32 %v3240, 7
    %v3242 = vsub.s32 %v3239, %v3241
    %v3243 = vrot.slane %v3236, %v3242
    %v3244 = vcombine.low %v3150, %v3157
    %v3246 = vunpack.c.l.s4 1983009808
    %v3247 = vunpack.c.0.s8 %v3246
    %v3248 = vlaneseq
    %v3249 = vshrl.u32 %v3248, 7
    %v3250 = vsub.s32 %v3247, %v3249
    %v3251 = vrot.slane %v3244, %v3250
    %v3252 = vcombine.low %v3160, %v3161
    %v3254 = vunpack.c.l.s4 1983009808
    %v3255 = vunpack.c.0.s8 %v3254
    %v3256 = vlaneseq
    %v3257 = vshrl.u32 %v3256, 7
    %v3258 = vsub.s32 %v3255, %v3257
    %v3259 = vrot.slane %v3252, %v3258
    %v3260 = vcombine.low %v3235, %v3243
    %v3262 = vunpack.c.l.s4 1934713408
    %v3263 = vunpack.c.0.s8 %v3262
    %v3264 = vlaneseq
    %v3265 = vshrl.u32 %v3264, 7
    %v3266 = vsub.s32 %v3263, %v3265
    %v3267 = vrot.slane %v3260, %v3266
    %v3268 = vcombine.low %v3251, %v3259
    %v3270 = vunpack.c.l.s4 1934713408
    %v3271 = vunpack.c.0.s8 %v3270
    %v3272 = vlaneseq
    %v3273 = vshrl.u32 %v3272, 7
    %v3274 = vsub.s32 %v3271, %v3273
    %v3275 = vrot.slane %v3268, %v3274
    %v3276 = vcombine.low %v3267, %v3275
    %v3277 = vcombine.high %v3267, %v3275
    %v3278 = vcombine.low %v3200, %v3207
    %v3280 = vunpack.c.l.s4 1983009808
    %v3281 = vunpack.c.0.s8 %v3280
    %v3282 = vlaneseq
    %v3283 = vshrl.u32 %v3282, 7
    %v3284 = vsub.s32 %v3281, %v3283
    %v3285 = vrot.slane %v3278, %v3284
    %v3286 = vcombine.low %v3224, %v3225
    %v3288 = vunpack.c.l.s4 1983009808
    %v3289 = vunpack.c.0.s8 %v3288
    %v3290 = vlaneseq
    %v3291 = vshrl.u32 %v3290, 7
    %v3292 = vsub.s32 %v3289, %v3291
    %v3293 = vrot.slane %v3286, %v3292
    %v3294 = vcombine.low %v3216, %v3223
    %v3296 = vunpack.c.l.s4 1983009808
    %v3297 = vunpack.c.0.s8 %v3296
    %v3298 = vlaneseq
    %v3299 = vshrl.u32 %v3298, 7
    %v3300 = vsub.s32 %v3297, %v3299
    %v3301 = vrot.slane %v3294, %v3300
    %v3302 = vcombine.low %v3226, %v3227
    %v3304 = vunpack.c.l.s4 1983009808
    %v3305 = vunpack.c.0.s8 %v3304
    %v3306 = vlaneseq
    %v3307 = vshrl.u32 %v3306, 7
    %v3308 = vsub.s32 %v3305, %v3307
    %v3309 = vrot.slane %v3302, %v3308
    %v3310 = vcombine.low %v3285, %v3293
    %v3312 = vunpack.c.l.s4 1934713408
    %v3313 = vunpack.c.0.s8 %v3312
    %v3314 = vlaneseq
    %v3315 = vshrl.u32 %v3314, 7
    %v3316 = vsub.s32 %v3313, %v3315
    %v3317 = vrot.slane %v3310, %v3316
    %v3318 = vcombine.low %v3301, %v3309
    %v3320 = vunpack.c.l.s4 1934713408
    %v3321 = vunpack.c.0.s8 %v3320
    %v3322 = vlaneseq
    %v3323 = vshrl.u32 %v3322, 7
    %v3324 = vsub.s32 %v3321, %v3323
    %v3325 = vrot.slane %v3318, %v3324
    %v3326 = vcombine.low %v3317, %v3325
    %v3327 = vcombine.high %v3317, %v3325
    %v3330 = vpack.i.b16 %v3326, %v3276
    %v3331 = vshrl.u32 %v3276, 16
    %v3332 = vshrl.u32 %v3326, 16
    %v3333 = vpack.i.b16 %v3332, %v3331
    %v3336 = vpack.i.b16 %v3327, %v3277
    %v3337 = vshrl.u32 %v3277, 16
    %v3338 = vshrl.u32 %v3327, 16
    %v3339 = vpack.i.b16 %v3338, %v3337
    %v3340 = vpack.c.bf16 %v2801, %v2798
    %3342 = vrot.lane.b32.xlu0 %v3340, 96
    %v3343 = vpop.permute.xlu0 %3342
    %3344 = vrot.lane.b32.xlu0 %v3340, 64
    %v3345 = vpop.permute.xlu0 %3344
    %3346 = vrot.lane.b32.xlu0 %v3340, 32
    %v3347 = vpop.permute.xlu0 %3346
    %v3350 = vpack.i.b16 %v3343, %v3340
    %v3352 = vshrl.u32 %v3340, 16
    %v3353 = vshrl.u32 %v3343, 16
    %v3354 = vpack.i.b16 %v3353, %v3352
    %v3358 = vpack.i.b16 %v3347, %v3345
    %v3360 = vshrl.u32 %v3345, 16
    %v3361 = vshrl.u32 %v3347, 16
    %v3362 = vpack.i.b16 %v3361, %v3360
    %v3364 = vcombine.high %v3350, %v434
    %v3366 = vunpack.c.l.s4 1983009808
    %v3367 = vunpack.c.0.s8 %v3366
    %v3368 = vlaneseq
    %v3369 = vshrl.u32 %v3368, 7
    %v3370 = vsub.s32 %v3367, %v3369
    %v3371 = vrot.slane %v3350, %v3370
    %v3373 = vunpack.c.l.s4 1983009808
    %v3374 = vunpack.c.0.s8 %v3373
    %v3375 = vlaneseq
    %v3376 = vshrl.u32 %v3375, 7
    %v3377 = vsub.s32 %v3374, %v3376
    %v3378 = vrot.slane %v3364, %v3377
    %v3379 = vcombine.high %v3358, %v434
    %v3381 = vunpack.c.l.s4 1983009808
    %v3382 = vunpack.c.0.s8 %v3381
    %v3383 = vlaneseq
    %v3384 = vshrl.u32 %v3383, 7
    %v3385 = vsub.s32 %v3382, %v3384
    %v3386 = vrot.slane %v3358, %v3385
    %v3388 = vunpack.c.l.s4 1983009808
    %v3389 = vunpack.c.0.s8 %v3388
    %v3390 = vlaneseq
    %v3391 = vshrl.u32 %v3390, 7
    %v3392 = vsub.s32 %v3389, %v3391
    %v3393 = vrot.slane %v3379, %v3392
    %v3394 = vcombine.low %v3371, %v3386
    %v3395 = vcombine.high %v3371, %v3386
    %v3397 = vunpack.c.l.s4 1934713408
    %v3398 = vunpack.c.0.s8 %v3397
    %v3399 = vlaneseq
    %v3400 = vshrl.u32 %v3399, 7
    %v3401 = vsub.s32 %v3398, %v3400
    %v3402 = vrot.slane %v3394, %v3401
    %v3404 = vunpack.c.l.s4 1934713408
    %v3405 = vunpack.c.0.s8 %v3404
    %v3406 = vlaneseq
    %v3407 = vshrl.u32 %v3406, 7
    %v3408 = vsub.s32 %v3405, %v3407
    %v3409 = vrot.slane %v3395, %v3408
    %v3410 = vcombine.low %v3378, %v3393
    %v3411 = vcombine.high %v3378, %v3393
    %v3413 = vunpack.c.l.s4 1934713408
    %v3414 = vunpack.c.0.s8 %v3413
    %v3415 = vlaneseq
    %v3416 = vshrl.u32 %v3415, 7
    %v3417 = vsub.s32 %v3414, %v3416
    %v3418 = vrot.slane %v3410, %v3417
    %v3420 = vunpack.c.l.s4 1934713408
    %v3421 = vunpack.c.0.s8 %v3420
    %v3422 = vlaneseq
    %v3423 = vshrl.u32 %v3422, 7
    %v3424 = vsub.s32 %v3421, %v3423
    %v3425 = vrot.slane %v3411, %v3424
    %v3426 = vcombine.high %v3402, 0
    %v3427 = vcombine.high %v3409, 0
    %v3428 = vcombine.high %v3418, 0
    %v3429 = vcombine.high %v3425, 0
    %v3430 = vcombine.high %v3354, %v437
    %v3432 = vunpack.c.l.s4 1983009808
    %v3433 = vunpack.c.0.s8 %v3432
    %v3434 = vlaneseq
    %v3435 = vshrl.u32 %v3434, 7
    %v3436 = vsub.s32 %v3433, %v3435
    %v3437 = vrot.slane %v3354, %v3436
    %v3439 = vunpack.c.l.s4 1983009808
    %v3440 = vunpack.c.0.s8 %v3439
    %v3441 = vlaneseq
    %v3442 = vshrl.u32 %v3441, 7
    %v3443 = vsub.s32 %v3440, %v3442
    %v3444 = vrot.slane %v3430, %v3443
    %v3445 = vcombine.high %v3362, %v437
    %v3447 = vunpack.c.l.s4 1983009808
    %v3448 = vunpack.c.0.s8 %v3447
    %v3449 = vlaneseq
    %v3450 = vshrl.u32 %v3449, 7
    %v3451 = vsub.s32 %v3448, %v3450
    %v3452 = vrot.slane %v3362, %v3451
    %v3454 = vunpack.c.l.s4 1983009808
    %v3455 = vunpack.c.0.s8 %v3454
    %v3456 = vlaneseq
    %v3457 = vshrl.u32 %v3456, 7
    %v3458 = vsub.s32 %v3455, %v3457
    %v3459 = vrot.slane %v3445, %v3458
    %v3460 = vcombine.low %v3437, %v3452
    %v3461 = vcombine.high %v3437, %v3452
    %v3463 = vunpack.c.l.s4 1934713408
    %v3464 = vunpack.c.0.s8 %v3463
    %v3465 = vlaneseq
    %v3466 = vshrl.u32 %v3465, 7
    %v3467 = vsub.s32 %v3464, %v3466
    %v3468 = vrot.slane %v3460, %v3467
    %v3470 = vunpack.c.l.s4 1934713408
    %v3471 = vunpack.c.0.s8 %v3470
    %v3472 = vlaneseq
    %v3473 = vshrl.u32 %v3472, 7
    %v3474 = vsub.s32 %v3471, %v3473
    %v3475 = vrot.slane %v3461, %v3474
    %v3476 = vcombine.low %v3444, %v3459
    %v3477 = vcombine.high %v3444, %v3459
    %v3479 = vunpack.c.l.s4 1934713408
    %v3480 = vunpack.c.0.s8 %v3479
    %v3481 = vlaneseq
    %v3482 = vshrl.u32 %v3481, 7
    %v3483 = vsub.s32 %v3480, %v3482
    %v3484 = vrot.slane %v3476, %v3483
    %v3486 = vunpack.c.l.s4 1934713408
    %v3487 = vunpack.c.0.s8 %v3486
    %v3488 = vlaneseq
    %v3489 = vshrl.u32 %v3488, 7
    %v3490 = vsub.s32 %v3487, %v3489
    %v3491 = vrot.slane %v3477, %v3490
    %v3492 = vcombine.high %v3468, 0
    %v3493 = vcombine.high %v3475, 0
    %v3494 = vcombine.high %v3484, 0
    %v3495 = vcombine.high %v3491, 0
    %v3496 = vcombine.low %v3402, %v3409
    %v3498 = vunpack.c.l.s4 1983009808
    %v3499 = vunpack.c.0.s8 %v3498
    %v3500 = vlaneseq
    %v3501 = vshrl.u32 %v3500, 7
    %v3502 = vsub.s32 %v3499, %v3501
    %v3503 = vrot.slane %v3496, %v3502
    %v3504 = vcombine.low %v3426, %v3427
    %v3506 = vunpack.c.l.s4 1983009808
    %v3507 = vunpack.c.0.s8 %v3506
    %v3508 = vlaneseq
    %v3509 = vshrl.u32 %v3508, 7
    %v3510 = vsub.s32 %v3507, %v3509
    %v3511 = vrot.slane %v3504, %v3510
    %v3512 = vcombine.low %v3418, %v3425
    %v3514 = vunpack.c.l.s4 1983009808
    %v3515 = vunpack.c.0.s8 %v3514
    %v3516 = vlaneseq
    %v3517 = vshrl.u32 %v3516, 7
    %v3518 = vsub.s32 %v3515, %v3517
    %v3519 = vrot.slane %v3512, %v3518
    %v3520 = vcombine.low %v3428, %v3429
    %v3522 = vunpack.c.l.s4 1983009808
    %v3523 = vunpack.c.0.s8 %v3522
    %v3524 = vlaneseq
    %v3525 = vshrl.u32 %v3524, 7
    %v3526 = vsub.s32 %v3523, %v3525
    %v3527 = vrot.slane %v3520, %v3526
    %v3528 = vcombine.low %v3503, %v3511
    %v3530 = vunpack.c.l.s4 1934713408
    %v3531 = vunpack.c.0.s8 %v3530
    %v3532 = vlaneseq
    %v3533 = vshrl.u32 %v3532, 7
    %v3534 = vsub.s32 %v3531, %v3533
    %v3535 = vrot.slane %v3528, %v3534
    %v3536 = vcombine.low %v3519, %v3527
    %v3538 = vunpack.c.l.s4 1934713408
    %v3539 = vunpack.c.0.s8 %v3538
    %v3540 = vlaneseq
    %v3541 = vshrl.u32 %v3540, 7
    %v3542 = vsub.s32 %v3539, %v3541
    %v3543 = vrot.slane %v3536, %v3542
    %v3544 = vcombine.low %v3535, %v3543
    %v3545 = vcombine.high %v3535, %v3543
    %v3546 = vcombine.low %v3468, %v3475
    %v3548 = vunpack.c.l.s4 1983009808
    %v3549 = vunpack.c.0.s8 %v3548
    %v3550 = vlaneseq
    %v3551 = vshrl.u32 %v3550, 7
    %v3552 = vsub.s32 %v3549, %v3551
    %v3553 = vrot.slane %v3546, %v3552
    %v3554 = vcombine.low %v3492, %v3493
    %v3556 = vunpack.c.l.s4 1983009808
    %v3557 = vunpack.c.0.s8 %v3556
    %v3558 = vlaneseq
    %v3559 = vshrl.u32 %v3558, 7
    %v3560 = vsub.s32 %v3557, %v3559
    %v3561 = vrot.slane %v3554, %v3560
    %v3562 = vcombine.low %v3484, %v3491
    %v3564 = vunpack.c.l.s4 1983009808
    %v3565 = vunpack.c.0.s8 %v3564
    %v3566 = vlaneseq
    %v3567 = vshrl.u32 %v3566, 7
    %v3568 = vsub.s32 %v3565, %v3567
    %v3569 = vrot.slane %v3562, %v3568
    %v3570 = vcombine.low %v3494, %v3495
    %v3572 = vunpack.c.l.s4 1983009808
    %v3573 = vunpack.c.0.s8 %v3572
    %v3574 = vlaneseq
    %v3575 = vshrl.u32 %v3574, 7
    %v3576 = vsub.s32 %v3573, %v3575
    %v3577 = vrot.slane %v3570, %v3576
    %v3578 = vcombine.low %v3553, %v3561
    %v3580 = vunpack.c.l.s4 1934713408
    %v3581 = vunpack.c.0.s8 %v3580
    %v3582 = vlaneseq
    %v3583 = vshrl.u32 %v3582, 7
    %v3584 = vsub.s32 %v3581, %v3583
    %v3585 = vrot.slane %v3578, %v3584
    %v3586 = vcombine.low %v3569, %v3577
    %v3588 = vunpack.c.l.s4 1934713408
    %v3589 = vunpack.c.0.s8 %v3588
    %v3590 = vlaneseq
    %v3591 = vshrl.u32 %v3590, 7
    %v3592 = vsub.s32 %v3589, %v3591
    %v3593 = vrot.slane %v3586, %v3592
    %v3594 = vcombine.low %v3585, %v3593
    %v3595 = vcombine.high %v3585, %v3593
    %v3598 = vpack.i.b16 %v3594, %v3544
    %v3600 = vshrl.u32 %v3544, 16
    %v3601 = vshrl.u32 %v3594, 16
    %v3602 = vpack.i.b16 %v3601, %v3600
    %v3606 = vpack.i.b16 %v3595, %v3545
    %v3608 = vshrl.u32 %v3545, 16
    %v3609 = vshrl.u32 %v3595, 16
    %v3610 = vpack.i.b16 %v3609, %v3608
    %v3613 = vsel %vm1223, %v3062, 0
    %v3616 = vsel %vm1223, %v3330, 0
    %3618 = vmatprep.subr.bf16.mxu0 0
    %3619 = vmatpush1.bf16.xpose.msra.mxu0 0
    %3620 = vmatprep.subr.bf16.mxu0 0
    %3621 = vmatpush1.bf16.xpose.msra.mxu0 0
    %3622 = vmatprep.subr.bf16.mxu0 0
    %3623 = vmatpush1.bf16.xpose.msra.mxu0 0
    %3624 = vmatprep.subr.bf16.mxu0 0
    %3625 = vmatpush1.bf16.xpose.msra.mxu0 0
    %3626 = vmatprep.subr.bf16.mxu0 0
    %3627 = vmatpush1.bf16.xpose.msra.mxu0 0
    %3628 = vmatprep.subr.bf16.mxu0 0
    %3629 = vmatpush1.bf16.xpose.msra.mxu0 0
    %3630 = vmatprep.subr.bf16.mxu0 0
    %3631 = vmatpush1.bf16.xpose.msra.mxu0 0
    %3632 = vmatprep.subr.bf16.mxu0 0
    %3633 = vmatpush1.bf16.xpose.msra.mxu0 %v3616
    %3634 = vmatprep.subr.bf16.mxu0 0
    %3635 = vmatpush2.bf16.xpose.msra.mxu0 0
    %3636 = vmatprep.subr.bf16.mxu0 0
    %3637 = vmatpush2.bf16.xpose.msra.mxu0 0
    %3638 = vmatprep.subr.bf16.mxu0 0
    %3639 = vmatpush2.bf16.xpose.msra.mxu0 0
    %3640 = vmatprep.subr.bf16.mxu0 0
    %3641 = vmatpush2.bf16.xpose.msra.mxu0 0
    %3642 = vmatprep.subr.bf16.mxu0 0
    %3643 = vmatpush2.bf16.xpose.msra.mxu0 0
    %3644 = vmatprep.subr.bf16.mxu0 0
    %3645 = vmatpush2.bf16.xpose.msra.mxu0 0
    %3646 = vmatprep.subr.bf16.mxu0 0
    %3647 = vmatpush2.bf16.xpose.msra.mxu0 0
    %3648 = vmatprep.subr.bf16.mxu0 0
    %3649 = vmatpush2.bf16.xpose.msra.mxu0 0
    %3650 = vmatprep.mubr.bf16.mxu0 0
    %3651 = vmatmul.mubr.bf16.gmra.mxu0 %v3613
    %v3652 = vpop.f32.mrf.mxu0
    %v3653 = vadd.f32 %v144, %v3652
    %v3654 = vpop.f32.mrf.mxu0
    %v3655 = vpop.f32.mrf.mxu0
    %v3656 = vadd.f32 %v145, %v3655
    %v3657 = vpop.f32.mrf.mxu0
    %3658 = vdwg.mxu0
    %v3660 = vsel %vm1223, %v3065, 0
    %v3663 = vsel %vm1223, %v3333, 0
    %3665 = vmatprep.subr.bf16.mxu0 0
    %3666 = vmatpush1.bf16.xpose.msra.mxu0 0
    %3667 = vmatprep.subr.bf16.mxu0 0
    %3668 = vmatpush1.bf16.xpose.msra.mxu0 0
    %3669 = vmatprep.subr.bf16.mxu0 0
    %3670 = vmatpush1.bf16.xpose.msra.mxu0 0
    %3671 = vmatprep.subr.bf16.mxu0 0
    %3672 = vmatpush1.bf16.xpose.msra.mxu0 0
    %3673 = vmatprep.subr.bf16.mxu0 0
    %3674 = vmatpush1.bf16.xpose.msra.mxu0 0
    %3675 = vmatprep.subr.bf16.mxu0 0
    %3676 = vmatpush1.bf16.xpose.msra.mxu0 0
    %3677 = vmatprep.subr.bf16.mxu0 0
    %3678 = vmatpush1.bf16.xpose.msra.mxu0 0
    %3679 = vmatprep.subr.bf16.mxu0 0
    %3680 = vmatpush1.bf16.xpose.msra.mxu0 %v3663
    %3681 = vmatprep.subr.bf16.mxu0 0
    %3682 = vmatpush2.bf16.xpose.msra.mxu0 0
    %3683 = vmatprep.subr.bf16.mxu0 0
    %3684 = vmatpush2.bf16.xpose.msra.mxu0 0
    %3685 = vmatprep.subr.bf16.mxu0 0
    %3686 = vmatpush2.bf16.xpose.msra.mxu0 0
    %3687 = vmatprep.subr.bf16.mxu0 0
    %3688 = vmatpush2.bf16.xpose.msra.mxu0 0
    %3689 = vmatprep.subr.bf16.mxu0 0
    %3690 = vmatpush2.bf16.xpose.msra.mxu0 0
    %3691 = vmatprep.subr.bf16.mxu0 0
    %3692 = vmatpush2.bf16.xpose.msra.mxu0 0
    %3693 = vmatprep.subr.bf16.mxu0 0
    %3694 = vmatpush2.bf16.xpose.msra.mxu0 0
    %3695 = vmatprep.subr.bf16.mxu0 0
    %3696 = vmatpush2.bf16.xpose.msra.mxu0 0
    %3697 = vmatprep.mubr.bf16.mxu0 0
    %3698 = vmatmul.mubr.bf16.gmra.mxu0 %v3660
    %v3699 = vpop.f32.mrf.mxu0
    %v3700 = vadd.f32 %v144, %v3699
    %v3701 = vpop.f32.mrf.mxu0
    %v3702 = vpop.f32.mrf.mxu0
    %v3703 = vadd.f32 %v145, %v3702
    %v3704 = vpop.f32.mrf.mxu0
    %3705 = vdwg.mxu0
    %v3707 = vsel %vm1223, %v3068, 0
    %v3710 = vsel %vm1223, %v3336, 0
    %3712 = vmatprep.subr.bf16.mxu0 0
    %3713 = vmatpush1.bf16.xpose.msra.mxu0 0
    %3714 = vmatprep.subr.bf16.mxu0 0
    %3715 = vmatpush1.bf16.xpose.msra.mxu0 0
    %3716 = vmatprep.subr.bf16.mxu0 0
    %3717 = vmatpush1.bf16.xpose.msra.mxu0 0
    %3718 = vmatprep.subr.bf16.mxu0 0
    %3719 = vmatpush1.bf16.xpose.msra.mxu0 0
    %3720 = vmatprep.subr.bf16.mxu0 0
    %3721 = vmatpush1.bf16.xpose.msra.mxu0 0
    %3722 = vmatprep.subr.bf16.mxu0 0
    %3723 = vmatpush1.bf16.xpose.msra.mxu0 0
    %3724 = vmatprep.subr.bf16.mxu0 0
    %3725 = vmatpush1.bf16.xpose.msra.mxu0 0
    %3726 = vmatprep.subr.bf16.mxu0 0
    %3727 = vmatpush1.bf16.xpose.msra.mxu0 %v3710
    %3728 = vmatprep.subr.bf16.mxu0 0
    %3729 = vmatpush2.bf16.xpose.msra.mxu0 0
    %3730 = vmatprep.subr.bf16.mxu0 0
    %3731 = vmatpush2.bf16.xpose.msra.mxu0 0
    %3732 = vmatprep.subr.bf16.mxu0 0
    %3733 = vmatpush2.bf16.xpose.msra.mxu0 0
    %3734 = vmatprep.subr.bf16.mxu0 0
    %3735 = vmatpush2.bf16.xpose.msra.mxu0 0
    %3736 = vmatprep.subr.bf16.mxu0 0
    %3737 = vmatpush2.bf16.xpose.msra.mxu0 0
    %3738 = vmatprep.subr.bf16.mxu0 0
    %3739 = vmatpush2.bf16.xpose.msra.mxu0 0
    %3740 = vmatprep.subr.bf16.mxu0 0
    %3741 = vmatpush2.bf16.xpose.msra.mxu0 0
    %3742 = vmatprep.subr.bf16.mxu0 0
    %3743 = vmatpush2.bf16.xpose.msra.mxu0 0
    %3744 = vmatprep.mubr.bf16.mxu0 0
    %3745 = vmatmul.mubr.bf16.gmra.mxu0 %v3707
    %v3746 = vpop.f32.mrf.mxu0
    %v3747 = vadd.f32 %v144, %v3746
    %v3748 = vpop.f32.mrf.mxu0
    %v3749 = vpop.f32.mrf.mxu0
    %v3750 = vadd.f32 %v145, %v3749
    %v3751 = vpop.f32.mrf.mxu0
    %3752 = vdwg.mxu0
    %v3754 = vsel %vm1223, %v3071, 0
    %v3757 = vsel %vm1223, %v3339, 0
    %3759 = vmatprep.subr.bf16.mxu0 0
    %3760 = vmatpush1.bf16.xpose.msra.mxu0 0
    %3761 = vmatprep.subr.bf16.mxu0 0
    %3762 = vmatpush1.bf16.xpose.msra.mxu0 0
    %3763 = vmatprep.subr.bf16.mxu0 0
    %3764 = vmatpush1.bf16.xpose.msra.mxu0 0
    %3765 = vmatprep.subr.bf16.mxu0 0
    %3766 = vmatpush1.bf16.xpose.msra.mxu0 0
    %3767 = vmatprep.subr.bf16.mxu0 0
    %3768 = vmatpush1.bf16.xpose.msra.mxu0 0
    %3769 = vmatprep.subr.bf16.mxu0 0
    %3770 = vmatpush1.bf16.xpose.msra.mxu0 0
    %3771 = vmatprep.subr.bf16.mxu0 0
    %3772 = vmatpush1.bf16.xpose.msra.mxu0 0
    %3773 = vmatprep.subr.bf16.mxu0 0
    %3774 = vmatpush1.bf16.xpose.msra.mxu0 %v3757
    %3775 = vmatprep.subr.bf16.mxu0 0
    %3776 = vmatpush2.bf16.xpose.msra.mxu0 0
    %3777 = vmatprep.subr.bf16.mxu0 0
    %3778 = vmatpush2.bf16.xpose.msra.mxu0 0
    %3779 = vmatprep.subr.bf16.mxu0 0
    %3780 = vmatpush2.bf16.xpose.msra.mxu0 0
    %3781 = vmatprep.subr.bf16.mxu0 0
    %3782 = vmatpush2.bf16.xpose.msra.mxu0 0
    %3783 = vmatprep.subr.bf16.mxu0 0
    %3784 = vmatpush2.bf16.xpose.msra.mxu0 0
    %3785 = vmatprep.subr.bf16.mxu0 0
    %3786 = vmatpush2.bf16.xpose.msra.mxu0 0
    %3787 = vmatprep.subr.bf16.mxu0 0
    %3788 = vmatpush2.bf16.xpose.msra.mxu0 0
    %3789 = vmatprep.subr.bf16.mxu0 0
    %3790 = vmatpush2.bf16.xpose.msra.mxu0 0
    %3791 = vmatprep.mubr.bf16.mxu0 0
    %3792 = vmatmul.mubr.bf16.gmra.mxu0 %v3754
    %v3793 = vpop.f32.mrf.mxu0
    %v3794 = vadd.f32 %v144, %v3793
    %v3795 = vpop.f32.mrf.mxu0
    %v3796 = vpop.f32.mrf.mxu0
    %v3797 = vadd.f32 %v145, %v3796
    %v3798 = vpop.f32.mrf.mxu0
    %3799 = vdwg.mxu0
    %v3800 = vsel %vm1412, %v3653, -inf
    %3801 = vmax.xlane.f32.xlu0 %v3800
    %v3802 = vpop.xlane.xlu0 %3801
    %v3803 = vsel %vm1412, %v3656, -inf
    %3804 = vmax.xlane.f32.xlu0 %v3803
    %v3805 = vpop.xlane.xlu0 %3804
    %v3806 = vsel %vm1412, %v3700, -inf
    %3807 = vmax.xlane.f32.xlu0 %v3806
    %v3808 = vpop.xlane.xlu0 %3807
    %v3809 = vsel %vm1412, %v3703, -inf
    %3810 = vmax.xlane.f32.xlu0 %v3809
    %v3811 = vpop.xlane.xlu0 %3810
    %v3812 = vsel %vm1412, %v3747, -inf
    %3813 = vmax.xlane.f32.xlu0 %v3812
    %v3814 = vpop.xlane.xlu0 %3813
    %v3815 = vsel %vm1412, %v3750, -inf
    %3816 = vmax.xlane.f32.xlu0 %v3815
    %v3817 = vpop.xlane.xlu0 %3816
    %v3818 = vsel %vm1412, %v3794, -inf
    %3819 = vmax.xlane.f32.xlu0 %v3818
    %v3820 = vpop.xlane.xlu0 %3819
    %v3821 = vsel %vm1412, %v3797, -inf
    %3822 = vmax.xlane.f32.xlu0 %v3821
    %v3823 = vpop.xlane.xlu0 %3822
    %v3824 = vsub.f32 %v3653, %v3802
    %v3825 = vsub.f32 %v3656, %v3805
    %v3826 = vsub.f32 %v3700, %v3808
    %v3827 = vsub.f32 %v3703, %v3811
    %v3828 = vsub.f32 %v3747, %v3814
    %v3829 = vsub.f32 %v3750, %v3817
    %v3830 = vsub.f32 %v3794, %v3820
    %v3831 = vsub.f32 %v3797, %v3823
    %v3832 = vmul.f32 %v3824, 1.442695
    %v3833 = vpow.pop %v3832
    %v3834 = vmul.f32 %v3825, 1.442695
    %v3835 = vpow.pop %v3834
    %v3836 = vmul.f32 %v3826, 1.442695
    %v3837 = vpow.pop %v3836
    %v3838 = vmul.f32 %v3827, 1.442695
    %v3839 = vpow.pop %v3838
    %v3840 = vmul.f32 %v3828, 1.442695
    %v3841 = vpow.pop %v3840
    %v3842 = vmul.f32 %v3829, 1.442695
    %v3843 = vpow.pop %v3842
    %v3844 = vmul.f32 %v3830, 1.442695
    %v3845 = vpow.pop %v3844
    %v3846 = vmul.f32 %v3831, 1.442695
    %v3847 = vpow.pop %v3846
    %v3848 = vsel %vm1412, %v3833, 0.0
    %3849 = vadd.xlane.f32.xlu0 %v3848
    %v3850 = vpop.xlane.xlu0 %3849
    %v3851 = vsel %vm1412, %v3835, 0.0
    %3852 = vadd.xlane.f32.xlu0 %v3851
    %v3853 = vpop.xlane.xlu0 %3852
    %v3854 = vsel %vm1412, %v3837, 0.0
    %3855 = vadd.xlane.f32.xlu0 %v3854
    %v3856 = vpop.xlane.xlu0 %3855
    %v3857 = vsel %vm1412, %v3839, 0.0
    %3858 = vadd.xlane.f32.xlu0 %v3857
    %v3859 = vpop.xlane.xlu0 %3858
    %v3860 = vsel %vm1412, %v3841, 0.0
    %3861 = vadd.xlane.f32.xlu0 %v3860
    %v3862 = vpop.xlane.xlu0 %3861
    %v3863 = vsel %vm1412, %v3843, 0.0
    %3864 = vadd.xlane.f32.xlu0 %v3863
    %v3865 = vpop.xlane.xlu0 %3864
    %v3866 = vsel %vm1412, %v3845, 0.0
    %3867 = vadd.xlane.f32.xlu0 %v3866
    %v3868 = vpop.xlane.xlu0 %3867
    %v3869 = vsel %vm1412, %v3847, 0.0
    %3870 = vadd.xlane.f32.xlu0 %v3869
    %v3871 = vpop.xlane.xlu0 %3870
    %v3872 = vrcp.pop %v3850
    %v3873 = vrcp.pop %v3853
    %v3874 = vrcp.pop %v3856
    %v3875 = vrcp.pop %v3859
    %v3876 = vrcp.pop %v3862
    %v3877 = vrcp.pop %v3865
    %v3878 = vrcp.pop %v3868
    %v3879 = vrcp.pop %v3871
    %v3880 = vmul.f32 %v3833, %v3872
    %v3881 = vmul.f32 %v3835, %v3873
    %v3882 = vmul.f32 %v3837, %v3874
    %v3883 = vmul.f32 %v3839, %v3875
    %v3884 = vmul.f32 %v3841, %v3876
    %v3885 = vmul.f32 %v3843, %v3877
    %v3886 = vmul.f32 %v3845, %v3878
    %v3887 = vmul.f32 %v3847, %v3879
    %v3888 = vpack.c.bf16 %v3881, %v3880
    %v3889 = vpack.c.bf16 %v3883, %v3882
    %v3890 = vpack.c.bf16 %v3885, %v3884
    %v3891 = vpack.c.bf16 %v3887, %v3886
    %v3893 = vsel %vm1412, %v3888, 0
    %3895 = vmatprep.subr.bf16.mxu0 0
    %3896 = vmatpush1.bf16.msra.mxu0 0
    %3897 = vmatprep.subr.bf16.mxu0 0
    %3898 = vmatpush1.bf16.msra.mxu0 0
    %3899 = vmatprep.subr.bf16.mxu0 0
    %3900 = vmatpush1.bf16.msra.mxu0 0
    %3901 = vmatprep.subr.bf16.mxu0 0
    %3902 = vmatpush1.bf16.msra.mxu0 0
    %3903 = vmatprep.subr.bf16.mxu0 0
    %3904 = vmatpush1.bf16.msra.mxu0 0
    %3905 = vmatprep.subr.bf16.mxu0 0
    %3906 = vmatpush1.bf16.msra.mxu0 0
    %3907 = vmatprep.subr.bf16.mxu0 0
    %3908 = vmatpush1.bf16.msra.mxu0 0
    %3909 = vmatprep.subr.bf16.mxu0 0
    %3910 = vmatpush1.bf16.msra.mxu0 %v3598
    %3911 = vmatprep.subr.bf16.mxu0 0
    %3912 = vmatpush2.bf16.msra.mxu0 0
    %3913 = vmatprep.subr.bf16.mxu0 0
    %3914 = vmatpush2.bf16.msra.mxu0 0
    %3915 = vmatprep.subr.bf16.mxu0 0
    %3916 = vmatpush2.bf16.msra.mxu0 0
    %3917 = vmatprep.subr.bf16.mxu0 0
    %3918 = vmatpush2.bf16.msra.mxu0 0
    %3919 = vmatprep.subr.bf16.mxu0 0
    %3920 = vmatpush2.bf16.msra.mxu0 0
    %3921 = vmatprep.subr.bf16.mxu0 0
    %3922 = vmatpush2.bf16.msra.mxu0 0
    %3923 = vmatprep.subr.bf16.mxu0 0
    %3924 = vmatpush2.bf16.msra.mxu0 0
    %3925 = vmatprep.subr.bf16.mxu0 0
    %3926 = vmatpush2.bf16.msra.mxu0 0
    %3927 = vmatprep.mubr.bf16.mxu0 0
    %3928 = vmatmul.mubr.bf16.gmra.mxu0 %v3893
    %v3929 = vpop.f32.mrf.mxu0
    %v3930 = vadd.f32 0.0, %v3929
    %v3931 = vpop.f32.mrf.mxu0
    %v3932 = vpop.f32.mrf.mxu0
    %v3933 = vadd.f32 0.0, %v3932
    %v3934 = vpop.f32.mrf.mxu0
    %3935 = vdwg.mxu0
    %v3937 = vsel %vm1412, %v3889, 0
    %3939 = vmatprep.subr.bf16.mxu0 0
    %3940 = vmatpush1.bf16.msra.mxu0 0
    %3941 = vmatprep.subr.bf16.mxu0 0
    %3942 = vmatpush1.bf16.msra.mxu0 0
    %3943 = vmatprep.subr.bf16.mxu0 0
    %3944 = vmatpush1.bf16.msra.mxu0 0
    %3945 = vmatprep.subr.bf16.mxu0 0
    %3946 = vmatpush1.bf16.msra.mxu0 0
    %3947 = vmatprep.subr.bf16.mxu0 0
    %3948 = vmatpush1.bf16.msra.mxu0 0
    %3949 = vmatprep.subr.bf16.mxu0 0
    %3950 = vmatpush1.bf16.msra.mxu0 0
    %3951 = vmatprep.subr.bf16.mxu0 0
    %3952 = vmatpush1.bf16.msra.mxu0 0
    %3953 = vmatprep.subr.bf16.mxu0 0
    %3954 = vmatpush1.bf16.msra.mxu0 %v3602
    %3955 = vmatprep.subr.bf16.mxu0 0
    %3956 = vmatpush2.bf16.msra.mxu0 0
    %3957 = vmatprep.subr.bf16.mxu0 0
    %3958 = vmatpush2.bf16.msra.mxu0 0
    %3959 = vmatprep.subr.bf16.mxu0 0
    %3960 = vmatpush2.bf16.msra.mxu0 0
    %3961 = vmatprep.subr.bf16.mxu0 0
    %3962 = vmatpush2.bf16.msra.mxu0 0
    %3963 = vmatprep.subr.bf16.mxu0 0
    %3964 = vmatpush2.bf16.msra.mxu0 0
    %3965 = vmatprep.subr.bf16.mxu0 0
    %3966 = vmatpush2.bf16.msra.mxu0 0
    %3967 = vmatprep.subr.bf16.mxu0 0
    %3968 = vmatpush2.bf16.msra.mxu0 0
    %3969 = vmatprep.subr.bf16.mxu0 0
    %3970 = vmatpush2.bf16.msra.mxu0 0
    %3971 = vmatprep.mubr.bf16.mxu0 0
    %3972 = vmatmul.mubr.bf16.gmra.mxu0 %v3937
    %v3973 = vpop.f32.mrf.mxu0
    %v3974 = vadd.f32 0.0, %v3973
    %v3975 = vpop.f32.mrf.mxu0
    %v3976 = vpop.f32.mrf.mxu0
    %v3977 = vadd.f32 0.0, %v3976
    %v3978 = vpop.f32.mrf.mxu0
    %3979 = vdwg.mxu0
    %v3981 = vsel %vm1412, %v3890, 0
    %3983 = vmatprep.subr.bf16.mxu0 0
    %3984 = vmatpush1.bf16.msra.mxu0 0
    %3985 = vmatprep.subr.bf16.mxu0 0
    %3986 = vmatpush1.bf16.msra.mxu0 0
    %3987 = vmatprep.subr.bf16.mxu0 0
    %3988 = vmatpush1.bf16.msra.mxu0 0
    %3989 = vmatprep.subr.bf16.mxu0 0
    %3990 = vmatpush1.bf16.msra.mxu0 0
    %3991 = vmatprep.subr.bf16.mxu0 0
    %3992 = vmatpush1.bf16.msra.mxu0 0
    %3993 = vmatprep.subr.bf16.mxu0 0
    %3994 = vmatpush1.bf16.msra.mxu0 0
    %3995 = vmatprep.subr.bf16.mxu0 0
    %3996 = vmatpush1.bf16.msra.mxu0 0
    %3997 = vmatprep.subr.bf16.mxu0 0
    %3998 = vmatpush1.bf16.msra.mxu0 %v3606
    %3999 = vmatprep.subr.bf16.mxu0 0
    %4000 = vmatpush2.bf16.msra.mxu0 0
    %4001 = vmatprep.subr.bf16.mxu0 0
    %4002 = vmatpush2.bf16.msra.mxu0 0
    %4003 = vmatprep.subr.bf16.mxu0 0
    %4004 = vmatpush2.bf16.msra.mxu0 0
    %4005 = vmatprep.subr.bf16.mxu0 0
    %4006 = vmatpush2.bf16.msra.mxu0 0
    %4007 = vmatprep.subr.bf16.mxu0 0
    %4008 = vmatpush2.bf16.msra.mxu0 0
    %4009 = vmatprep.subr.bf16.mxu0 0
    %4010 = vmatpush2.bf16.msra.mxu0 0
    %4011 = vmatprep.subr.bf16.mxu0 0
    %4012 = vmatpush2.bf16.msra.mxu0 0
    %4013 = vmatprep.subr.bf16.mxu0 0
    %4014 = vmatpush2.bf16.msra.mxu0 0
    %4015 = vmatprep.mubr.bf16.mxu0 0
    %4016 = vmatmul.mubr.bf16.gmra.mxu0 %v3981
    %v4017 = vpop.f32.mrf.mxu0
    %v4018 = vadd.f32 0.0, %v4017
    %v4019 = vpop.f32.mrf.mxu0
    %v4020 = vpop.f32.mrf.mxu0
    %v4021 = vadd.f32 0.0, %v4020
    %v4022 = vpop.f32.mrf.mxu0
    %4023 = vdwg.mxu0
    %v4025 = vsel %vm1412, %v3891, 0
    %4027 = vmatprep.subr.bf16.mxu0 0
    %4028 = vmatpush1.bf16.msra.mxu0 0
    %4029 = vmatprep.subr.bf16.mxu0 0
    %4030 = vmatpush1.bf16.msra.mxu0 0
    %4031 = vmatprep.subr.bf16.mxu0 0
    %4032 = vmatpush1.bf16.msra.mxu0 0
    %4033 = vmatprep.subr.bf16.mxu0 0
    %4034 = vmatpush1.bf16.msra.mxu0 0
    %4035 = vmatprep.subr.bf16.mxu0 0
    %4036 = vmatpush1.bf16.msra.mxu0 0
    %4037 = vmatprep.subr.bf16.mxu0 0
    %4038 = vmatpush1.bf16.msra.mxu0 0
    %4039 = vmatprep.subr.bf16.mxu0 0
    %4040 = vmatpush1.bf16.msra.mxu0 0
    %4041 = vmatprep.subr.bf16.mxu0 0
    %4042 = vmatpush1.bf16.msra.mxu0 %v3610
    %4043 = vmatprep.subr.bf16.mxu0 0
    %4044 = vmatpush2.bf16.msra.mxu0 0
    %4045 = vmatprep.subr.bf16.mxu0 0
    %4046 = vmatpush2.bf16.msra.mxu0 0
    %4047 = vmatprep.subr.bf16.mxu0 0
    %4048 = vmatpush2.bf16.msra.mxu0 0
    %4049 = vmatprep.subr.bf16.mxu0 0
    %4050 = vmatpush2.bf16.msra.mxu0 0
    %4051 = vmatprep.subr.bf16.mxu0 0
    %4052 = vmatpush2.bf16.msra.mxu0 0
    %4053 = vmatprep.subr.bf16.mxu0 0
    %4054 = vmatpush2.bf16.msra.mxu0 0
    %4055 = vmatprep.subr.bf16.mxu0 0
    %4056 = vmatpush2.bf16.msra.mxu0 0
    %4057 = vmatprep.subr.bf16.mxu0 0
    %4058 = vmatpush2.bf16.msra.mxu0 0
    %4059 = vmatprep.mubr.bf16.mxu0 0
    %4060 = vmatmul.mubr.bf16.gmra.mxu0 %v4025
    %v4061 = vpop.f32.mrf.mxu0
    %v4062 = vadd.f32 0.0, %v4061
    %v4063 = vpop.f32.mrf.mxu0
    %v4064 = vpop.f32.mrf.mxu0
    %v4065 = vadd.f32 0.0, %v4064
    %v4066 = vpop.f32.mrf.mxu0
    %4067 = vdwg.mxu0
    %v4068 = vcombine.low %v3930, %v4018
    %v4069 = vcombine.high %v3930, %v4018
    %v4071 = vunpack.c.l.s4 1983009808
    %v4072 = vunpack.c.0.s8 %v4071
    %v4073 = vlaneseq
    %v4074 = vshrl.u32 %v4073, 7
    %v4075 = vsub.s32 %v4072, %v4074
    %v4076 = vrot.slane %v4068, %v4075
    %v4078 = vunpack.c.l.s4 1983009808
    %v4079 = vunpack.c.0.s8 %v4078
    %v4080 = vlaneseq
    %v4081 = vshrl.u32 %v4080, 7
    %v4082 = vsub.s32 %v4079, %v4081
    %v4083 = vrot.slane %v4069, %v4082
    %v4084 = vcombine.low %v3974, %v4062
    %v4085 = vcombine.high %v3974, %v4062
    %v4087 = vunpack.c.l.s4 1983009808
    %v4088 = vunpack.c.0.s8 %v4087
    %v4089 = vlaneseq
    %v4090 = vshrl.u32 %v4089, 7
    %v4091 = vsub.s32 %v4088, %v4090
    %v4092 = vrot.slane %v4084, %v4091
    %v4094 = vunpack.c.l.s4 1983009808
    %v4095 = vunpack.c.0.s8 %v4094
    %v4096 = vlaneseq
    %v4097 = vshrl.u32 %v4096, 7
    %v4098 = vsub.s32 %v4095, %v4097
    %v4099 = vrot.slane %v4085, %v4098
    %v4100 = vcombine.low %v4076, %v4092
    %v4101 = vcombine.high %v4076, %v4092
    %v4103 = vunpack.c.l.s4 1934713408
    %v4104 = vunpack.c.0.s8 %v4103
    %v4105 = vlaneseq
    %v4106 = vshrl.u32 %v4105, 7
    %v4107 = vsub.s32 %v4104, %v4106
    %v4108 = vrot.slane %v4100, %v4107
    %v4110 = vunpack.c.l.s4 1934713408
    %v4111 = vunpack.c.0.s8 %v4110
    %v4112 = vlaneseq
    %v4113 = vshrl.u32 %v4112, 7
    %v4114 = vsub.s32 %v4111, %v4113
    %v4115 = vrot.slane %v4101, %v4114
    %v4116 = vcombine.low %v4083, %v4099
    %v4117 = vcombine.high %v4083, %v4099
    %v4119 = vunpack.c.l.s4 1934713408
    %v4120 = vunpack.c.0.s8 %v4119
    %v4121 = vlaneseq
    %v4122 = vshrl.u32 %v4121, 7
    %v4123 = vsub.s32 %v4120, %v4122
    %v4124 = vrot.slane %v4116, %v4123
    %v4126 = vunpack.c.l.s4 1934713408
    %v4127 = vunpack.c.0.s8 %v4126
    %v4128 = vlaneseq
    %v4129 = vshrl.u32 %v4128, 7
    %v4130 = vsub.s32 %v4127, %v4129
    %v4131 = vrot.slane %v4117, %v4130
    %v4132 = vcombine.high %v4108, 0.0
    %v4133 = vcombine.high %v4115, 0.0
    %v4134 = vcombine.high %v4124, 0.0
    %v4135 = vcombine.high %v4131, 0.0
    %v4136 = vcombine.low %v3933, %v4021
    %v4137 = vcombine.high %v3933, %v4021
    %v4139 = vunpack.c.l.s4 1983009808
    %v4140 = vunpack.c.0.s8 %v4139
    %v4141 = vlaneseq
    %v4142 = vshrl.u32 %v4141, 7
    %v4143 = vsub.s32 %v4140, %v4142
    %v4144 = vrot.slane %v4136, %v4143
    %v4146 = vunpack.c.l.s4 1983009808
    %v4147 = vunpack.c.0.s8 %v4146
    %v4148 = vlaneseq
    %v4149 = vshrl.u32 %v4148, 7
    %v4150 = vsub.s32 %v4147, %v4149
    %v4151 = vrot.slane %v4137, %v4150
    %v4152 = vcombine.low %v3977, %v4065
    %v4153 = vcombine.high %v3977, %v4065
    %v4155 = vunpack.c.l.s4 1983009808
    %v4156 = vunpack.c.0.s8 %v4155
    %v4157 = vlaneseq
    %v4158 = vshrl.u32 %v4157, 7
    %v4159 = vsub.s32 %v4156, %v4158
    %v4160 = vrot.slane %v4152, %v4159
    %v4162 = vunpack.c.l.s4 1983009808
    %v4163 = vunpack.c.0.s8 %v4162
    %v4164 = vlaneseq
    %v4165 = vshrl.u32 %v4164, 7
    %v4166 = vsub.s32 %v4163, %v4165
    %v4167 = vrot.slane %v4153, %v4166
    %v4168 = vcombine.low %v4144, %v4160
    %v4169 = vcombine.high %v4144, %v4160
    %v4171 = vunpack.c.l.s4 1934713408
    %v4172 = vunpack.c.0.s8 %v4171
    %v4173 = vlaneseq
    %v4174 = vshrl.u32 %v4173, 7
    %v4175 = vsub.s32 %v4172, %v4174
    %v4176 = vrot.slane %v4168, %v4175
    %v4178 = vunpack.c.l.s4 1934713408
    %v4179 = vunpack.c.0.s8 %v4178
    %v4180 = vlaneseq
    %v4181 = vshrl.u32 %v4180, 7
    %v4182 = vsub.s32 %v4179, %v4181
    %v4183 = vrot.slane %v4169, %v4182
    %v4184 = vcombine.low %v4151, %v4167
    %v4185 = vcombine.high %v4151, %v4167
    %v4187 = vunpack.c.l.s4 1934713408
    %v4188 = vunpack.c.0.s8 %v4187
    %v4189 = vlaneseq
    %v4190 = vshrl.u32 %v4189, 7
    %v4191 = vsub.s32 %v4188, %v4190
    %v4192 = vrot.slane %v4184, %v4191
    %v4194 = vunpack.c.l.s4 1934713408
    %v4195 = vunpack.c.0.s8 %v4194
    %v4196 = vlaneseq
    %v4197 = vshrl.u32 %v4196, 7
    %v4198 = vsub.s32 %v4195, %v4197
    %v4199 = vrot.slane %v4185, %v4198
    %v4200 = vcombine.high %v4176, 0.0
    %v4201 = vcombine.high %v4183, 0.0
    %v4202 = vcombine.high %v4192, 0.0
    %v4203 = vcombine.high %v4199, 0.0
    %v4204 = vcombine.low %v4108, %v4115
    %v4206 = vunpack.c.l.s4 1983009808
    %v4207 = vunpack.c.0.s8 %v4206
    %v4208 = vlaneseq
    %v4209 = vshrl.u32 %v4208, 7
    %v4210 = vsub.s32 %v4207, %v4209
    %v4211 = vrot.slane %v4204, %v4210
    %v4212 = vcombine.low %v4132, %v4133
    %v4214 = vunpack.c.l.s4 1983009808
    %v4215 = vunpack.c.0.s8 %v4214
    %v4216 = vlaneseq
    %v4217 = vshrl.u32 %v4216, 7
    %v4218 = vsub.s32 %v4215, %v4217
    %v4219 = vrot.slane %v4212, %v4218
    %v4220 = vcombine.low %v4124, %v4131
    %v4222 = vunpack.c.l.s4 1983009808
    %v4223 = vunpack.c.0.s8 %v4222
    %v4224 = vlaneseq
    %v4225 = vshrl.u32 %v4224, 7
    %v4226 = vsub.s32 %v4223, %v4225
    %v4227 = vrot.slane %v4220, %v4226
    %v4228 = vcombine.low %v4134, %v4135
    %v4230 = vunpack.c.l.s4 1983009808
    %v4231 = vunpack.c.0.s8 %v4230
    %v4232 = vlaneseq
    %v4233 = vshrl.u32 %v4232, 7
    %v4234 = vsub.s32 %v4231, %v4233
    %v4235 = vrot.slane %v4228, %v4234
    %v4236 = vcombine.low %v4211, %v4219
    %v4237 = vcombine.high %v4211, %v4219
    %v4239 = vunpack.c.l.s4 1934713408
    %v4240 = vunpack.c.0.s8 %v4239
    %v4241 = vlaneseq
    %v4242 = vshrl.u32 %v4241, 7
    %v4243 = vsub.s32 %v4240, %v4242
    %v4244 = vrot.slane %v4236, %v4243
    %v4246 = vunpack.c.l.s4 1934713408
    %v4247 = vunpack.c.0.s8 %v4246
    %v4248 = vlaneseq
    %v4249 = vshrl.u32 %v4248, 7
    %v4250 = vsub.s32 %v4247, %v4249
    %v4251 = vrot.slane %v4237, %v4250
    %v4252 = vcombine.low %v4227, %v4235
    %v4253 = vcombine.high %v4227, %v4235
    %v4255 = vunpack.c.l.s4 1934713408
    %v4256 = vunpack.c.0.s8 %v4255
    %v4257 = vlaneseq
    %v4258 = vshrl.u32 %v4257, 7
    %v4259 = vsub.s32 %v4256, %v4258
    %v4260 = vrot.slane %v4252, %v4259
    %v4262 = vunpack.c.l.s4 1934713408
    %v4263 = vunpack.c.0.s8 %v4262
    %v4264 = vlaneseq
    %v4265 = vshrl.u32 %v4264, 7
    %v4266 = vsub.s32 %v4263, %v4265
    %v4267 = vrot.slane %v4253, %v4266
    %v4268 = vcombine.low %v4244, %v4260
    %v4269 = vcombine.high %v4244, %v4260
    %v4270 = vcombine.low %v4251, %v4267
    %v4271 = vcombine.high %v4251, %v4267
    %v4272 = vcombine.low %v4176, %v4183
    %v4274 = vunpack.c.l.s4 1983009808
    %v4275 = vunpack.c.0.s8 %v4274
    %v4276 = vlaneseq
    %v4277 = vshrl.u32 %v4276, 7
    %v4278 = vsub.s32 %v4275, %v4277
    %v4279 = vrot.slane %v4272, %v4278
    %v4280 = vcombine.low %v4200, %v4201
    %v4282 = vunpack.c.l.s4 1983009808
    %v4283 = vunpack.c.0.s8 %v4282
    %v4284 = vlaneseq
    %v4285 = vshrl.u32 %v4284, 7
    %v4286 = vsub.s32 %v4283, %v4285
    %v4287 = vrot.slane %v4280, %v4286
    %v4288 = vcombine.low %v4192, %v4199
    %v4290 = vunpack.c.l.s4 1983009808
    %v4291 = vunpack.c.0.s8 %v4290
    %v4292 = vlaneseq
    %v4293 = vshrl.u32 %v4292, 7
    %v4294 = vsub.s32 %v4291, %v4293
    %v4295 = vrot.slane %v4288, %v4294
    %v4296 = vcombine.low %v4202, %v4203
    %v4298 = vunpack.c.l.s4 1983009808
    %v4299 = vunpack.c.0.s8 %v4298
    %v4300 = vlaneseq
    %v4301 = vshrl.u32 %v4300, 7
    %v4302 = vsub.s32 %v4299, %v4301
    %v4303 = vrot.slane %v4296, %v4302
    %v4304 = vcombine.low %v4279, %v4287
    %v4305 = vcombine.high %v4279, %v4287
    %v4307 = vunpack.c.l.s4 1934713408
    %v4308 = vunpack.c.0.s8 %v4307
    %v4309 = vlaneseq
    %v4310 = vshrl.u32 %v4309, 7
    %v4311 = vsub.s32 %v4308, %v4310
    %v4312 = vrot.slane %v4304, %v4311
    %v4314 = vunpack.c.l.s4 1934713408
    %v4315 = vunpack.c.0.s8 %v4314
    %v4316 = vlaneseq
    %v4317 = vshrl.u32 %v4316, 7
    %v4318 = vsub.s32 %v4315, %v4317
    %v4319 = vrot.slane %v4305, %v4318
    %v4320 = vcombine.low %v4295, %v4303
    %v4321 = vcombine.high %v4295, %v4303
    %v4323 = vunpack.c.l.s4 1934713408
    %v4324 = vunpack.c.0.s8 %v4323
    %v4325 = vlaneseq
    %v4326 = vshrl.u32 %v4325, 7
    %v4327 = vsub.s32 %v4324, %v4326
    %v4328 = vrot.slane %v4320, %v4327
    %v4330 = vunpack.c.l.s4 1934713408
    %v4331 = vunpack.c.0.s8 %v4330
    %v4332 = vlaneseq
    %v4333 = vshrl.u32 %v4332, 7
    %v4334 = vsub.s32 %v4331, %v4333
    %v4335 = vrot.slane %v4321, %v4334
    %v4336 = vcombine.low %v4312, %v4328
    %v4337 = vcombine.high %v4312, %v4328
    %v4338 = vcombine.low %v4319, %v4335
    %v4339 = vcombine.high %v4319, %v4335
    %4342 = vrot.lane.b32.xlu0 %v4269, 32
    %v4343 = vpop.permute.xlu0 %4342
    %4344 = vrot.lane.b32.xlu0 %v4337, 32
    %v4345 = vpop.permute.xlu0 %4344
    %4350 = vrot.lane.b32.xlu0 %v4270, 64
    %v4351 = vpop.permute.xlu0 %4350
    %4352 = vrot.lane.b32.xlu0 %v4338, 64
    %v4353 = vpop.permute.xlu0 %4352
    %4358 = vrot.lane.b32.xlu0 %v4271, 96
    %v4359 = vpop.permute.xlu0 %4358
    %4360 = vrot.lane.b32.xlu0 %v4339, 96
    %v4361 = vpop.permute.xlu0 %4360
    %v4364 = vsel %vm1223, %v4268, %v4343
    %v4365 = vsel %vm1223, %v4336, %v4345
    %v4366 = vsel %vm1979, %v4364, %v4351
    %v4367 = vsel %vm1979, %v4365, %v4353
    %v4368 = vsel %vm1982, %v4366, %v4359
    %v4369 = vsel %vm1982, %v4367, %v4361
    %v4370 = vpack.c.bf16 %v4369, %v4368
    %s4371 = scalar_lea.vmem %s5, 64
    %v4372 = vld [vmem:[%s4371] sm:$0xf]
    %v4373 = vld [vmem:[%s4371 + $0x4] sm:$0xf]
    %v4374 = vld [vmem:[%s4371 + $0x8] sm:$0xf]
    %v4375 = vld [vmem:[%s4371 + $0xc] sm:$0xf]
    %v4376 = vld [vmem:[%s4371 + $0x10] sm:$0xf]
    %v4377 = vld [vmem:[%s4371 + $0x14] sm:$0xf]
    %v4378 = vld [vmem:[%s4371 + $0x18] sm:$0xf]
    %v4379 = vld [vmem:[%s4371 + $0x1c] sm:$0xf]
    %v4380 = vld [vmem:[%s4371 + $0x20] sm:$0xf]
    %v4381 = vld [vmem:[%s4371 + $0x24] sm:$0xf]
    %v4382 = vld [vmem:[%s4371 + $0x28] sm:$0xf]
    %v4383 = vld [vmem:[%s4371 + $0x2c] sm:$0xf]
    %v4384 = vld [vmem:[%s4371 + $0x30] sm:$0xf]
    %v4385 = vld [vmem:[%s4371 + $0x34] sm:$0xf]
    %v4386 = vld [vmem:[%s4371 + $0x38] sm:$0xf]
    %v4387 = vld [vmem:[%s4371 + $0x3c] sm:$0xf]
    %v4388 = vlaneseq
    %v4389 = vshrl.u32 %v4388, 7
    %v4390 = vsub.s32 0, %v4389
    %v4391 = vrot.slane %v2539, %v4390
    %v4408 = vunpack.c.l.b16 %v4372
    %v4409 = vunpack.c.l.b16 %v4373
    %v4410 = vunpack.c.l.b16 %v4374
    %v4411 = vunpack.c.l.b16 %v4375
    %v4412 = vunpack.c.l.b16 %v4376
    %v4413 = vunpack.c.l.b16 %v4377
    %v4414 = vunpack.c.l.b16 %v4378
    %v4415 = vunpack.c.l.b16 %v4379
    %v4416 = vunpack.c.l.b16 %v4380
    %v4417 = vunpack.c.l.b16 %v4381
    %v4418 = vunpack.c.l.b16 %v4382
    %v4419 = vunpack.c.l.b16 %v4383
    %v4420 = vunpack.c.l.b16 %v4384
    %v4421 = vunpack.c.l.b16 %v4385
    %v4422 = vunpack.c.l.b16 %v4386
    %v4423 = vunpack.c.l.b16 %v4387
    %v4424 = vpack.c.b16 %v4409, %v4408
    %v4425 = vpack.c.b16 %v4411, %v4410
    %v4426 = vpack.c.b16 %v4413, %v4412
    %v4427 = vpack.c.b16 %v4415, %v4414
    %v4428 = vpack.c.b16 %v4417, %v4416
    %v4429 = vpack.c.b16 %v4419, %v4418
    %v4430 = vpack.c.b16 %v4421, %v4420
    %v4431 = vpack.c.b16 %v4423, %v4422
    %4440 = vmatprep.subr.bf16.mxu0 0
    %4441 = vmatpush1.bf16.msra.mxu0 %v4431
    %4442 = vmatprep.subr.bf16.mxu0 0
    %4443 = vmatpush1.bf16.msra.mxu0 %v4430
    %4444 = vmatprep.subr.bf16.mxu0 0
    %4445 = vmatpush1.bf16.msra.mxu0 %v4429
    %4446 = vmatprep.subr.bf16.mxu0 0
    %4447 = vmatpush1.bf16.msra.mxu0 %v4428
    %4448 = vmatprep.subr.bf16.mxu0 0
    %4449 = vmatpush1.bf16.msra.mxu0 %v4427
    %4450 = vmatprep.subr.bf16.mxu0 0
    %4451 = vmatpush1.bf16.msra.mxu0 %v4426
    %4452 = vmatprep.subr.bf16.mxu0 0
    %4453 = vmatpush1.bf16.msra.mxu0 %v4425
    %4454 = vmatprep.subr.bf16.mxu0 0
    %4455 = vmatpush1.bf16.msra.mxu0 %v4424
    %4456 = vmatprep.subr.bf16.mxu0 0
    %4457 = vmatpush2.bf16.msra.mxu0 0
    %4458 = vmatprep.subr.bf16.mxu0 0
    %4459 = vmatpush2.bf16.msra.mxu0 0
    %4460 = vmatprep.subr.bf16.mxu0 0
    %4461 = vmatpush2.bf16.msra.mxu0 0
    %4462 = vmatprep.subr.bf16.mxu0 0
    %4463 = vmatpush2.bf16.msra.mxu0 0
    %4464 = vmatprep.subr.bf16.mxu0 0
    %4465 = vmatpush2.bf16.msra.mxu0 0
    %4466 = vmatprep.subr.bf16.mxu0 0
    %4467 = vmatpush2.bf16.msra.mxu0 0
    %4468 = vmatprep.subr.bf16.mxu0 0
    %4469 = vmatpush2.bf16.msra.mxu0 0
    %4470 = vmatprep.subr.bf16.mxu0 0
    %4471 = vmatpush2.bf16.msra.mxu0 0
    %4472 = vmatprep.mubr.bf16.mxu0 0
    %4473 = vmatmul.mubr.bf16.gmra.mxu0 %v4370
    %v4474 = vpop.f32.mrf.mxu0
    %v4475 = vadd.f32 %v4391, %v4474
    %v4476 = vpop.f32.mrf.mxu0
    %v4477 = vpop.f32.mrf.mxu0
    %v4478 = vadd.f32 %v4391, %v4477
    %v4479 = vpop.f32.mrf.mxu0
    %4480 = vdwg.mxu0
    %v4481 = vadd.f32 %v4475, %v2536
    %v4482 = vadd.f32 %v4478, %v2537
    %4483 = vadd.xlane.f32.xlu0 %v4481
    %v4484 = vpop.xlane.xlu0 %4483
    %4485 = vadd.xlane.f32.xlu0 %v4482
    %v4486 = vpop.xlane.xlu0 %4485
    %v4487 = vmul.f32 %v4484, %v109
    %v4488 = vmul.f32 %v4486, %v109
    %v4489 = vmul.f32 %v4481, %v4481
    %v4490 = vmul.f32 %v4482, %v4482
    %4491 = vadd.xlane.f32.xlu0 %v4489
    %v4492 = vpop.xlane.xlu0 %4491
    %4493 = vadd.xlane.f32.xlu0 %v4490
    %v4494 = vpop.xlane.xlu0 %4493
    %v4495 = vmul.f32 %v4492, %v109
    %v4496 = vmul.f32 %v4494, %v109
    %v4497 = vmul.f32 %v4487, %v4487
    %v4498 = vmul.f32 %v4488, %v4488
    %v4499 = vsub.f32 %v4495, %v4497
    %v4500 = vsub.f32 %v4496, %v4498
    %v4501 = vsub.f32 %v4481, %v4487
    %v4502 = vsub.f32 %v4482, %v4488
    %v4503 = vadd.f32 %v4499, 1e-05
    %v4504 = vadd.f32 %v4500, 1e-05
    %v4505 = vrsqrt.pop %v4503
    %v4506 = vrsqrt.pop %v4504
    %v4507 = vmul.f32 %v4501, %v4505
    %v4508 = vmul.f32 %v4502, %v4506
    %v4509 = vlaneseq
    %v4510 = vshrl.u32 %v4509, 7
    %v4511 = vsub.s32 1, %v4510
    %v4512 = vrot.slane %v2539, %v4511
    %v4513 = vmul.f32 %v4507, %v4512
    %v4514 = vmul.f32 %v4508, %v4512
    %v4515 = vlaneseq
    %v4516 = vshrl.u32 %v4515, 7
    %v4517 = vsub.s32 2, %v4516
    %v4518 = vrot.slane %v2539, %v4517
    %v4519 = vadd.f32 %v4513, %v4518
    %v4520 = vadd.f32 %v4514, %v4518
    %v4521 = vpack.c.bf16 %v4520, %v4519
    %s4522 = scalar_lea.vmem %s6, 128
    %v4523 = vld [vmem:[%s4522] sm:$0xff]
    %v4524 = vld [vmem:[%s4522 + $0x8] sm:$0xff]
    %v4525 = vld [vmem:[%s4522 + $0x10] sm:$0xff]
    %v4526 = vld [vmem:[%s4522 + $0x18] sm:$0xff]
    %v4527 = vld [vmem:[%s4522 + $0x20] sm:$0xff]
    %v4528 = vld [vmem:[%s4522 + $0x28] sm:$0xff]
    %v4529 = vld [vmem:[%s4522 + $0x30] sm:$0xff]
    %v4530 = vld [vmem:[%s4522 + $0x38] sm:$0xff]
    %v4531 = vld [vmem:[%s4522 + $0x40] sm:$0xff]
    %v4532 = vld [vmem:[%s4522 + $0x48] sm:$0xff]
    %v4533 = vld [vmem:[%s4522 + $0x50] sm:$0xff]
    %v4534 = vld [vmem:[%s4522 + $0x58] sm:$0xff]
    %v4535 = vld [vmem:[%s4522 + $0x60] sm:$0xff]
    %v4536 = vld [vmem:[%s4522 + $0x68] sm:$0xff]
    %v4537 = vld [vmem:[%s4522 + $0x70] sm:$0xff]
    %v4538 = vld [vmem:[%s4522 + $0x78] sm:$0xff]
    %s4539 = scalar_lea.vmem %s7, 2
    %v4540 = vld [vmem:[%s4539] sm:$0x3]
    %v4542 = vlaneseq
    %v4543 = vshrl.u32 %v4542, 7
    %v4544 = vsub.s32 0, %v4543
    %v4545 = vrot.slane %v4540, %v4544
    %v4546 = vlaneseq
    %v4547 = vshrl.u32 %v4546, 7
    %v4548 = vsub.s32 1, %v4547
    %v4549 = vrot.slane %v4540, %v4548
    %v4568 = vunpack.c.l.b16 %v4523
    %v4569 = vunpack.c.h.b16 %v4523
    %v4570 = vunpack.c.l.b16 %v4524
    %v4571 = vunpack.c.h.b16 %v4524
    %v4572 = vunpack.c.l.b16 %v4525
    %v4573 = vunpack.c.h.b16 %v4525
    %v4574 = vunpack.c.l.b16 %v4526
    %v4575 = vunpack.c.h.b16 %v4526
    %v4576 = vunpack.c.l.b16 %v4527
    %v4577 = vunpack.c.h.b16 %v4527
    %v4578 = vunpack.c.l.b16 %v4528
    %v4579 = vunpack.c.h.b16 %v4528
    %v4580 = vunpack.c.l.b16 %v4529
    %v4581 = vunpack.c.h.b16 %v4529
    %v4582 = vunpack.c.l.b16 %v4530
    %v4583 = vunpack.c.h.b16 %v4530
    %v4584 = vunpack.c.l.b16 %v4531
    %v4585 = vunpack.c.h.b16 %v4531
    %v4586 = vunpack.c.l.b16 %v4532
    %v4587 = vunpack.c.h.b16 %v4532
    %v4588 = vunpack.c.l.b16 %v4533
    %v4589 = vunpack.c.h.b16 %v4533
    %v4590 = vunpack.c.l.b16 %v4534
    %v4591 = vunpack.c.h.b16 %v4534
    %v4592 = vunpack.c.l.b16 %v4535
    %v4593 = vunpack.c.h.b16 %v4535
    %v4594 = vunpack.c.l.b16 %v4536
    %v4595 = vunpack.c.h.b16 %v4536
    %v4596 = vunpack.c.l.b16 %v4537
    %v4597 = vunpack.c.h.b16 %v4537
    %v4598 = vunpack.c.l.b16 %v4538
    %v4599 = vunpack.c.h.b16 %v4538
    %v4600 = vpack.c.b16 %v4570, %v4568
    %v4601 = vpack.c.b16 %v4571, %v4569
    %v4602 = vpack.c.b16 %v4574, %v4572
    %v4603 = vpack.c.b16 %v4575, %v4573
    %v4604 = vpack.c.b16 %v4578, %v4576
    %v4605 = vpack.c.b16 %v4579, %v4577
    %v4606 = vpack.c.b16 %v4582, %v4580
    %v4607 = vpack.c.b16 %v4583, %v4581
    %v4608 = vpack.c.b16 %v4586, %v4584
    %v4609 = vpack.c.b16 %v4587, %v4585
    %v4610 = vpack.c.b16 %v4590, %v4588
    %v4611 = vpack.c.b16 %v4591, %v4589
    %v4612 = vpack.c.b16 %v4594, %v4592
    %v4613 = vpack.c.b16 %v4595, %v4593
    %v4614 = vpack.c.b16 %v4598, %v4596
    %v4615 = vpack.c.b16 %v4599, %v4597
    %4632 = vmatprep.subr.bf16.mxu0 %v4615
    %4633 = vmatpush1.bf16.msra.mxu0 %v4614
    %4634 = vmatprep.subr.bf16.mxu0 %v4613
    %4635 = vmatpush1.bf16.msra.mxu0 %v4612
    %4636 = vmatprep.subr.bf16.mxu0 %v4611
    %4637 = vmatpush1.bf16.msra.mxu0 %v4610
    %4638 = vmatprep.subr.bf16.mxu0 %v4609
    %4639 = vmatpush1.bf16.msra.mxu0 %v4608
    %4640 = vmatprep.subr.bf16.mxu0 %v4607
    %4641 = vmatpush1.bf16.msra.mxu0 %v4606
    %4642 = vmatprep.subr.bf16.mxu0 %v4605
    %4643 = vmatpush1.bf16.msra.mxu0 %v4604
    %4644 = vmatprep.subr.bf16.mxu0 %v4603
    %4645 = vmatpush1.bf16.msra.mxu0 %v4602
    %4646 = vmatprep.subr.bf16.mxu0 %v4601
    %4647 = vmatpush1.bf16.msra.mxu0 %v4600
    %4648 = vmatprep.subr.bf16.mxu0 0
    %4649 = vmatpush2.bf16.msra.mxu0 0
    %4650 = vmatprep.subr.bf16.mxu0 0
    %4651 = vmatpush2.bf16.msra.mxu0 0
    %4652 = vmatprep.subr.bf16.mxu0 0
    %4653 = vmatpush2.bf16.msra.mxu0 0
    %4654 = vmatprep.subr.bf16.mxu0 0
    %4655 = vmatpush2.bf16.msra.mxu0 0
    %4656 = vmatprep.subr.bf16.mxu0 0
    %4657 = vmatpush2.bf16.msra.mxu0 0
    %4658 = vmatprep.subr.bf16.mxu0 0
    %4659 = vmatpush2.bf16.msra.mxu0 0
    %4660 = vmatprep.subr.bf16.mxu0 0
    %4661 = vmatpush2.bf16.msra.mxu0 0
    %4662 = vmatprep.subr.bf16.mxu0 0
    %4663 = vmatpush2.bf16.msra.mxu0 0
    %4664 = vmatprep.mubr.bf16.mxu0 0
    %4665 = vmatmul.mubr.bf16.gmra.mxu0 %v4521
    %v4666 = vpop.f32.mrf.mxu0
    %v4667 = vadd.f32 %v4545, %v4666
    %v4668 = vpop.f32.mrf.mxu0
    %v4669 = vadd.f32 %v4549, %v4668
    %v4670 = vpop.f32.mrf.mxu0
    %v4671 = vadd.f32 %v4545, %v4670
    %v4672 = vpop.f32.mrf.mxu0
    %v4673 = vadd.f32 %v4549, %v4672
    %4674 = vdwg.mxu0
    %v4675 = vmul.f32 %v4667, %v4667
    %v4676 = vmul.f32 %v4669, %v4669
    %v4677 = vmul.f32 %v4671, %v4671
    %v4678 = vmul.f32 %v4673, %v4673
    %v4679 = vmul.f32 %v4667, %v4675
    %v4680 = vmul.f32 %v4669, %v4676
    %v4681 = vmul.f32 %v4671, %v4677
    %v4682 = vmul.f32 %v4673, %v4678
    %v4683 = vmul.f32 %v4679, 0.044715
    %v4684 = vmul.f32 %v4680, 0.044715
    %v4685 = vmul.f32 %v4681, 0.044715
    %v4686 = vmul.f32 %v4682, 0.044715
    %v4687 = vadd.f32 %v4667, %v4683
    %v4688 = vadd.f32 %v4669, %v4684
    %v4689 = vadd.f32 %v4671, %v4685
    %v4690 = vadd.f32 %v4673, %v4686
    %v4691 = vmul.f32 %v4687, 0.7978846
    %v4692 = vmul.f32 %v4688, 0.7978846
    %v4693 = vmul.f32 %v4689, 0.7978846
    %v4694 = vmul.f32 %v4690, 0.7978846
    %v4695 = vtanh.pop %v4691
    %v4696 = vtanh.pop %v4692
    %v4697 = vtanh.pop %v4693
    %v4698 = vtanh.pop %v4694
    %v4699 = vadd.f32 %v4695, 1.0
    %v4700 = vadd.f32 %v4696, 1.0
    %v4701 = vadd.f32 %v4697, 1.0
    %v4702 = vadd.f32 %v4698, 1.0
    %v4703 = vmul.f32 %v4699, 0.5
    %v4704 = vmul.f32 %v4700, 0.5
    %v4705 = vmul.f32 %v4701, 0.5
    %v4706 = vmul.f32 %v4702, 0.5
    %v4707 = vmul.f32 %v4667, %v4703
    %v4708 = vmul.f32 %v4669, %v4704
    %v4709 = vmul.f32 %v4671, %v4705
    %v4710 = vmul.f32 %v4673, %v4706
    %v4711 = vpack.c.bf16 %v4709, %v4707
    %v4712 = vpack.c.bf16 %v4710, %v4708
    %s4713 = scalar_lea.vmem [#allocation5], 128
    %v4714 = vld [vmem:[%s4713] sm:$0xf]
    %v4715 = vld [vmem:[%s4713 + $0x4] sm:$0xf]
    %v4716 = vld [vmem:[%s4713 + $0x8] sm:$0xf]
    %v4717 = vld [vmem:[%s4713 + $0xc] sm:$0xf]
    %v4718 = vld [vmem:[%s4713 + $0x10] sm:$0xf]
    %v4719 = vld [vmem:[%s4713 + $0x14] sm:$0xf]
    %v4720 = vld [vmem:[%s4713 + $0x18] sm:$0xf]
    %v4721 = vld [vmem:[%s4713 + $0x1c] sm:$0xf]
    %v4722 = vld [vmem:[%s4713 + $0x20] sm:$0xf]
    %v4723 = vld [vmem:[%s4713 + $0x24] sm:$0xf]
    %v4724 = vld [vmem:[%s4713 + $0x28] sm:$0xf]
    %v4725 = vld [vmem:[%s4713 + $0x2c] sm:$0xf]
    %v4726 = vld [vmem:[%s4713 + $0x30] sm:$0xf]
    %v4727 = vld [vmem:[%s4713 + $0x34] sm:$0xf]
    %v4728 = vld [vmem:[%s4713 + $0x38] sm:$0xf]
    %v4729 = vld [vmem:[%s4713 + $0x3c] sm:$0xf]
    %v4730 = vld [vmem:[%s4713 + $0x40] sm:$0xf]
    %v4731 = vld [vmem:[%s4713 + $0x44] sm:$0xf]
    %v4732 = vld [vmem:[%s4713 + $0x48] sm:$0xf]
    %v4733 = vld [vmem:[%s4713 + $0x4c] sm:$0xf]
    %v4734 = vld [vmem:[%s4713 + $0x50] sm:$0xf]
    %v4735 = vld [vmem:[%s4713 + $0x54] sm:$0xf]
    %v4736 = vld [vmem:[%s4713 + $0x58] sm:$0xf]
    %v4737 = vld [vmem:[%s4713 + $0x5c] sm:$0xf]
    %v4738 = vld [vmem:[%s4713 + $0x60] sm:$0xf]
    %v4739 = vld [vmem:[%s4713 + $0x64] sm:$0xf]
    %v4740 = vld [vmem:[%s4713 + $0x68] sm:$0xf]
    %v4741 = vld [vmem:[%s4713 + $0x6c] sm:$0xf]
    %v4742 = vld [vmem:[%s4713 + $0x70] sm:$0xf]
    %v4743 = vld [vmem:[%s4713 + $0x74] sm:$0xf]
    %v4744 = vld [vmem:[%s4713 + $0x78] sm:$0xf]
    %v4745 = vld [vmem:[%s4713 + $0x7c] sm:$0xf]
    %v4746 = vlaneseq
    %v4747 = vshrl.u32 %v4746, 7
    %v4748 = vsub.s32 3, %v4747
    %v4749 = vrot.slane %v2539, %v4748
    %v4782 = vunpack.c.l.b16 %v4714
    %v4783 = vunpack.c.l.b16 %v4715
    %v4784 = vunpack.c.l.b16 %v4716
    %v4785 = vunpack.c.l.b16 %v4717
    %v4786 = vunpack.c.l.b16 %v4718
    %v4787 = vunpack.c.l.b16 %v4719
    %v4788 = vunpack.c.l.b16 %v4720
    %v4789 = vunpack.c.l.b16 %v4721
    %v4790 = vunpack.c.l.b16 %v4722
    %v4791 = vunpack.c.l.b16 %v4723
    %v4792 = vunpack.c.l.b16 %v4724
    %v4793 = vunpack.c.l.b16 %v4725
    %v4794 = vunpack.c.l.b16 %v4726
    %v4795 = vunpack.c.l.b16 %v4727
    %v4796 = vunpack.c.l.b16 %v4728
    %v4797 = vunpack.c.l.b16 %v4729
    %v4798 = vunpack.c.l.b16 %v4730
    %v4799 = vunpack.c.l.b16 %v4731
    %v4800 = vunpack.c.l.b16 %v4732
    %v4801 = vunpack.c.l.b16 %v4733
    %v4802 = vunpack.c.l.b16 %v4734
    %v4803 = vunpack.c.l.b16 %v4735
    %v4804 = vunpack.c.l.b16 %v4736
    %v4805 = vunpack.c.l.b16 %v4737
    %v4806 = vunpack.c.l.b16 %v4738
    %v4807 = vunpack.c.l.b16 %v4739
    %v4808 = vunpack.c.l.b16 %v4740
    %v4809 = vunpack.c.l.b16 %v4741
    %v4810 = vunpack.c.l.b16 %v4742
    %v4811 = vunpack.c.l.b16 %v4743
    %v4812 = vunpack.c.l.b16 %v4744
    %v4813 = vunpack.c.l.b16 %v4745
    %v4814 = vpack.c.b16 %v4783, %v4782
    %v4815 = vpack.c.b16 %v4785, %v4784
    %v4816 = vpack.c.b16 %v4787, %v4786
    %v4817 = vpack.c.b16 %v4789, %v4788
    %v4818 = vpack.c.b16 %v4791, %v4790
    %v4819 = vpack.c.b16 %v4793, %v4792
    %v4820 = vpack.c.b16 %v4795, %v4794
    %v4821 = vpack.c.b16 %v4797, %v4796
    %v4822 = vpack.c.b16 %v4799, %v4798
    %v4823 = vpack.c.b16 %v4801, %v4800
    %v4824 = vpack.c.b16 %v4803, %v4802
    %v4825 = vpack.c.b16 %v4805, %v4804
    %v4826 = vpack.c.b16 %v4807, %v4806
    %v4827 = vpack.c.b16 %v4809, %v4808
    %v4828 = vpack.c.b16 %v4811, %v4810
    %v4829 = vpack.c.b16 %v4813, %v4812
    %4846 = vmatprep.subr.bf16.mxu0 0
    %4847 = vmatpush1.bf16.msra.mxu0 %v4821
    %4848 = vmatprep.subr.bf16.mxu0 0
    %4849 = vmatpush1.bf16.msra.mxu0 %v4820
    %4850 = vmatprep.subr.bf16.mxu0 0
    %4851 = vmatpush1.bf16.msra.mxu0 %v4819
    %4852 = vmatprep.subr.bf16.mxu0 0
    %4853 = vmatpush1.bf16.msra.mxu0 %v4818
    %4854 = vmatprep.subr.bf16.mxu0 0
    %4855 = vmatpush1.bf16.msra.mxu0 %v4817
    %4856 = vmatprep.subr.bf16.mxu0 0
    %4857 = vmatpush1.bf16.msra.mxu0 %v4816
    %4858 = vmatprep.subr.bf16.mxu0 0
    %4859 = vmatpush1.bf16.msra.mxu0 %v4815
    %4860 = vmatprep.subr.bf16.mxu0 0
    %4861 = vmatpush1.bf16.msra.mxu0 %v4814
    %4862 = vmatprep.subr.bf16.mxu0 0
    %4863 = vmatpush2.bf16.msra.mxu0 %v4829
    %4864 = vmatprep.subr.bf16.mxu0 0
    %4865 = vmatpush2.bf16.msra.mxu0 %v4828
    %4866 = vmatprep.subr.bf16.mxu0 0
    %4867 = vmatpush2.bf16.msra.mxu0 %v4827
    %4868 = vmatprep.subr.bf16.mxu0 0
    %4869 = vmatpush2.bf16.msra.mxu0 %v4826
    %4870 = vmatprep.subr.bf16.mxu0 0
    %4871 = vmatpush2.bf16.msra.mxu0 %v4825
    %4872 = vmatprep.subr.bf16.mxu0 0
    %4873 = vmatpush2.bf16.msra.mxu0 %v4824
    %4874 = vmatprep.subr.bf16.mxu0 0
    %4875 = vmatpush2.bf16.msra.mxu0 %v4823
    %4876 = vmatprep.subr.bf16.mxu0 0
    %4877 = vmatpush2.bf16.msra.mxu0 %v4822
    %4878 = vmatprep.mubr.bf16.mxu0 %v4712
    %4879 = vmatmul.mubr.bf16.gmra.mxu0 %v4711
    %v4880 = vpop.f32.mrf.mxu0
    %v4881 = vadd.f32 %v4749, %v4880
    %v4882 = vpop.f32.mrf.mxu0
    %v4883 = vpop.f32.mrf.mxu0
    %v4884 = vadd.f32 %v4749, %v4883
    %v4885 = vpop.f32.mrf.mxu0
    %4886 = vdwg.mxu0
    %v4887 = vadd.f32 %v4881, %v4519
    %v4888 = vadd.f32 %v4884, %v4520
    %4889 = vadd.xlane.f32.xlu0 %v4887
    %v4890 = vpop.xlane.xlu0 %4889
    %4891 = vadd.xlane.f32.xlu0 %v4888
    %v4892 = vpop.xlane.xlu0 %4891
    %v4893 = vmul.f32 %v4890, %v109
    %v4894 = vmul.f32 %v4892, %v109
    %v4895 = vmul.f32 %v4887, %v4887
    %v4896 = vmul.f32 %v4888, %v4888
    %4897 = vadd.xlane.f32.xlu0 %v4895
    %v4898 = vpop.xlane.xlu0 %4897
    %4899 = vadd.xlane.f32.xlu0 %v4896
    %v4900 = vpop.xlane.xlu0 %4899
    %v4901 = vmul.f32 %v4898, %v109
    %v4902 = vmul.f32 %v4900, %v109
    %v4903 = vmul.f32 %v4893, %v4893
    %v4904 = vmul.f32 %v4894, %v4894
    %v4905 = vsub.f32 %v4901, %v4903
    %v4906 = vsub.f32 %v4902, %v4904
    %v4907 = vsub.f32 %v4887, %v4893
    %v4908 = vsub.f32 %v4888, %v4894
    %v4909 = vadd.f32 %v4905, 1e-05
    %v4910 = vadd.f32 %v4906, 1e-05
    %v4911 = vrsqrt.pop %v4909
    %v4912 = vrsqrt.pop %v4910
    %v4913 = vmul.f32 %v4907, %v4911
    %v4914 = vmul.f32 %v4908, %v4912
    %v4915 = vlaneseq
    %v4916 = vshrl.u32 %v4915, 7
    %v4917 = vsub.s32 4, %v4916
    %v4918 = vrot.slane %v2539, %v4917
    %v4919 = vmul.f32 %v4913, %v4918
    %v4920 = vmul.f32 %v4914, %v4918
    %v4921 = vlaneseq
    %v4922 = vshrl.u32 %v4921, 7
    %v4923 = vsub.s32 5, %v4922
    %v4924 = vrot.slane %v2539, %v4923
    %v4925 = vadd.f32 %v4919, %v4924
    %v4926 = vadd.f32 %v4920, %v4924
    %v4927 = vpack.c.bf16 %v4925, %v4925
    %v4928 = vpack.c.bf16 %v4926, %v4926
    %v4929 = vld [vmem:[#allocation7] sm:$0xf]
    %v4930 = vld [vmem:[#allocation7 + $0x4] sm:$0xf]
    %v4931 = vld [vmem:[#allocation7 + $0x8] sm:$0xf]
    %v4932 = vld [vmem:[#allocation7 + $0xc] sm:$0xf]
    %v4933 = vld [vmem:[#allocation7 + $0x10] sm:$0xf]
    %v4934 = vld [vmem:[#allocation7 + $0x14] sm:$0xf]
    %v4935 = vld [vmem:[#allocation7 + $0x18] sm:$0xf]
    %v4936 = vld [vmem:[#allocation7 + $0x1c] sm:$0xf]
    %v4937 = vld [vmem:[#allocation7 + $0x20] sm:$0xf]
    %v4938 = vld [vmem:[#allocation7 + $0x24] sm:$0xf]
    %v4939 = vld [vmem:[#allocation7 + $0x28] sm:$0xf]
    %v4940 = vld [vmem:[#allocation7 + $0x2c] sm:$0xf]
    %v4941 = vld [vmem:[#allocation7 + $0x30] sm:$0xf]
    %v4942 = vld [vmem:[#allocation7 + $0x34] sm:$0xf]
    %v4943 = vld [vmem:[#allocation7 + $0x38] sm:$0xf]
    %v4944 = vld [vmem:[#allocation7 + $0x3c] sm:$0xf]
    %v4945 = vld [vmem:[%s12] sm:$0x1]
    %v4946 = vlaneseq
    %v4947 = vshrl.u32 %v4946, 7
    %v4948 = vsub.s32 0, %v4947
    %v4949 = vrot.slane %v4945, %v4948
    %v4952 = vunpack.c.l.b16 %v4927
    %v4953 = vunpack.c.l.b16 %v4928
    %v4954 = vrot.slane %v4953, 7
    %vm4955 = vcmask 1041409
    %v4956 = vsel %vm4955, %v4954, %v4952
    %v4957 = vpack.c.b16 %v4956, %v4956
    %v4975 = vunpack.c.l.b16 %v4929
    %v4976 = vunpack.c.l.b16 %v4930
    %v4977 = vunpack.c.l.b16 %v4931
    %v4978 = vunpack.c.l.b16 %v4932
    %v4979 = vunpack.c.l.b16 %v4933
    %v4980 = vunpack.c.l.b16 %v4934
    %v4981 = vunpack.c.l.b16 %v4935
    %v4982 = vunpack.c.l.b16 %v4936
    %v4983 = vunpack.c.l.b16 %v4937
    %v4984 = vunpack.c.l.b16 %v4938
    %v4985 = vunpack.c.l.b16 %v4939
    %v4986 = vunpack.c.l.b16 %v4940
    %v4987 = vunpack.c.l.b16 %v4941
    %v4988 = vunpack.c.l.b16 %v4942
    %v4989 = vunpack.c.l.b16 %v4943
    %v4990 = vunpack.c.l.b16 %v4944
    %v4991 = vpack.c.b16 %v4976, %v4975
    %v4992 = vpack.c.b16 %v4978, %v4977
    %v4993 = vpack.c.b16 %v4980, %v4979
    %v4994 = vpack.c.b16 %v4982, %v4981
    %v4995 = vpack.c.b16 %v4984, %v4983
    %v4996 = vpack.c.b16 %v4986, %v4985
    %v4997 = vpack.c.b16 %v4988, %v4987
    %v4998 = vpack.c.b16 %v4990, %v4989
    %5007 = vmatprep.subr.bf16.mxu0 0
    %5008 = vmatpush1.bf16.msra.mxu0 %v4998
    %5009 = vmatprep.subr.bf16.mxu0 0
    %5010 = vmatpush1.bf16.msra.mxu0 %v4997
    %5011 = vmatprep.subr.bf16.mxu0 0
    %5012 = vmatpush1.bf16.msra.mxu0 %v4996
    %5013 = vmatprep.subr.bf16.mxu0 0
    %5014 = vmatpush1.bf16.msra.mxu0 %v4995
    %5015 = vmatprep.subr.bf16.mxu0 0
    %5016 = vmatpush1.bf16.msra.mxu0 %v4994
    %5017 = vmatprep.subr.bf16.mxu0 0
    %5018 = vmatpush1.bf16.msra.mxu0 %v4993
    %5019 = vmatprep.subr.bf16.mxu0 0
    %5020 = vmatpush1.bf16.msra.mxu0 %v4992
    %5021 = vmatprep.subr.bf16.mxu0 0
    %5022 = vmatpush1.bf16.msra.mxu0 %v4991
    %5023 = vmatprep.subr.bf16.mxu0 0
    %5024 = vmatpush2.bf16.msra.mxu0 0
    %5025 = vmatprep.subr.bf16.mxu0 0
    %5026 = vmatpush2.bf16.msra.mxu0 0
    %5027 = vmatprep.subr.bf16.mxu0 0
    %5028 = vmatpush2.bf16.msra.mxu0 0
    %5029 = vmatprep.subr.bf16.mxu0 0
    %5030 = vmatpush2.bf16.msra.mxu0 0
    %5031 = vmatprep.subr.bf16.mxu0 0
    %5032 = vmatpush2.bf16.msra.mxu0 0
    %5033 = vmatprep.subr.bf16.mxu0 0
    %5034 = vmatpush2.bf16.msra.mxu0 0
    %5035 = vmatprep.subr.bf16.mxu0 0
    %5036 = vmatpush2.bf16.msra.mxu0 0
    %5037 = vmatprep.subr.bf16.mxu0 0
    %5038 = vmatpush2.bf16.msra.mxu0 0
    %5039 = vmatprep.mubr.bf16.mxu0 0
    %5040 = vmatmul.mubr.bf16.gmra.mxu0 %v4957
    %v5041 = vpop.f32.mrf.mxu0
    %v5042 = vadd.f32 %v4949, %v5041
    %v5043 = vpop.f32.mrf.mxu0
    %v5044 = vpop.f32.mrf.mxu0
    %v5045 = vpop.f32.mrf.mxu0
    %5046 = vdwg.mxu0
    %v5047 = vtanh.pop %v5042
    %v5048 = vpack.c.bf16 %v5047, %v5047
    %v5049 = vld [vmem:[#allocation8] sm:$0xf]
    %v5050 = vld [vmem:[#allocation8 + $0x4] sm:$0xf]
    %v5051 = vld [vmem:[#allocation8 + $0x8] sm:$0xf]
    %v5052 = vld [vmem:[#allocation8 + $0xc] sm:$0xf]
    %v5053 = vld [vmem:[#allocation8 + $0x10] sm:$0xf]
    %v5054 = vld [vmem:[#allocation8 + $0x14] sm:$0xf]
    %v5055 = vld [vmem:[#allocation8 + $0x18] sm:$0xf]
    %v5056 = vld [vmem:[#allocation8 + $0x1c] sm:$0xf]
    %v5057 = vld [vmem:[#allocation8 + $0x20] sm:$0xf]
    %v5058 = vld [vmem:[#allocation8 + $0x24] sm:$0xf]
    %v5059 = vld [vmem:[#allocation8 + $0x28] sm:$0xf]
    %v5060 = vld [vmem:[#allocation8 + $0x2c] sm:$0xf]
    %v5061 = vld [vmem:[#allocation8 + $0x30] sm:$0xf]
    %v5062 = vld [vmem:[#allocation8 + $0x34] sm:$0xf]
    %v5063 = vld [vmem:[#allocation8 + $0x38] sm:$0xf]
    %v5064 = vld [vmem:[#allocation8 + $0x3c] sm:$0xf]
    %v5065 = vld [vmem:[%s12 + $0x1] sm:$0x1]
    %v5066 = vlaneseq
    %v5067 = vshrl.u32 %v5066, 7
    %v5068 = vsub.s32 0, %v5067
    %v5069 = vrot.slane %v5065, %v5068
    %v5086 = vunpack.c.l.b16 %v5049
    %v5087 = vunpack.c.l.b16 %v5050
    %v5088 = vunpack.c.l.b16 %v5051
    %v5089 = vunpack.c.l.b16 %v5052
    %v5090 = vunpack.c.l.b16 %v5053
    %v5091 = vunpack.c.l.b16 %v5054
    %v5092 = vunpack.c.l.b16 %v5055
    %v5093 = vunpack.c.l.b16 %v5056
    %v5094 = vunpack.c.l.b16 %v5057
    %v5095 = vunpack.c.l.b16 %v5058
    %v5096 = vunpack.c.l.b16 %v5059
    %v5097 = vunpack.c.l.b16 %v5060
    %v5098 = vunpack.c.l.b16 %v5061
    %v5099 = vunpack.c.l.b16 %v5062
    %v5100 = vunpack.c.l.b16 %v5063
    %v5101 = vunpack.c.l.b16 %v5064
    %v5102 = vpack.c.b16 %v5087, %v5086
    %v5103 = vpack.c.b16 %v5089, %v5088
    %v5104 = vpack.c.b16 %v5091, %v5090
    %v5105 = vpack.c.b16 %v5093, %v5092
    %v5106 = vpack.c.b16 %v5095, %v5094
    %v5107 = vpack.c.b16 %v5097, %v5096
    %v5108 = vpack.c.b16 %v5099, %v5098
    %v5109 = vpack.c.b16 %v5101, %v5100
    %5118 = vmatprep.subr.bf16.mxu0 0
    %5119 = vmatpush1.bf16.msra.mxu0 %v5109
    %5120 = vmatprep.subr.bf16.mxu0 0
    %5121 = vmatpush1.bf16.msra.mxu0 %v5108
    %5122 = vmatprep.subr.bf16.mxu0 0
    %5123 = vmatpush1.bf16.msra.mxu0 %v5107
    %5124 = vmatprep.subr.bf16.mxu0 0
    %5125 = vmatpush1.bf16.msra.mxu0 %v5106
    %5126 = vmatprep.subr.bf16.mxu0 0
    %5127 = vmatpush1.bf16.msra.mxu0 %v5105
    %5128 = vmatprep.subr.bf16.mxu0 0
    %5129 = vmatpush1.bf16.msra.mxu0 %v5104
    %5130 = vmatprep.subr.bf16.mxu0 0
    %5131 = vmatpush1.bf16.msra.mxu0 %v5103
    %5132 = vmatprep.subr.bf16.mxu0 0
    %5133 = vmatpush1.bf16.msra.mxu0 %v5102
    %5134 = vmatprep.subr.bf16.mxu0 0
    %5135 = vmatpush2.bf16.msra.mxu0 0
    %5136 = vmatprep.subr.bf16.mxu0 0
    %5137 = vmatpush2.bf16.msra.mxu0 0
    %5138 = vmatprep.subr.bf16.mxu0 0
    %5139 = vmatpush2.bf16.msra.mxu0 0
    %5140 = vmatprep.subr.bf16.mxu0 0
    %5141 = vmatpush2.bf16.msra.mxu0 0
    %5142 = vmatprep.subr.bf16.mxu0 0
    %5143 = vmatpush2.bf16.msra.mxu0 0
    %5144 = vmatprep.subr.bf16.mxu0 0
    %5145 = vmatpush2.bf16.msra.mxu0 0
    %5146 = vmatprep.subr.bf16.mxu0 0
    %5147 = vmatpush2.bf16.msra.mxu0 0
    %5148 = vmatprep.subr.bf16.mxu0 0
    %5149 = vmatpush2.bf16.msra.mxu0 0
    %5150 = vmatprep.mubr.bf16.mxu0 0
    %5151 = vmatmul.mubr.bf16.gmra.mxu0 %v5048
    %v5152 = vpop.f32.mrf.mxu0
    %v5153 = vadd.f32 %v5069, %v5152
    %v5154 = vpop.f32.mrf.mxu0
    %v5155 = vpop.f32.mrf.mxu0
    %v5156 = vpop.f32.mrf.mxu0
    %5157 = vdwg.mxu0
    %5158 = vst [vmem:[#allocation10] sm:$0x3] %v5153
    // Predicated region
    $region70: #{codebert_classifier_forward.1} parent=1 // pred_check
      _
    $region71: #{codebert_classifier_forward.1} parent=1 // pred_check_branch
      %5160 = sbr.rel (0) target = $region73
    $region72: #{codebert_classifier_forward.1} parent=1 // pred_region
      %s5162 = ssub.s32 32, 32
      %5163 = vsyncadd [#allocation4], %s5162
      %s5165 = sshll.u32 [#allocation10], 4
      %s5166 = int_to_ptr.vmem [resolvable:$true] %s5165
      %5168 = dma.vmem_to_hbm [thread:$0]  %s5166, 32, %s13, [#allocation4]
    $region73: #{codebert_classifier_forward.1} parent=1 // pred_fallthru
      _
    // Predicated region
    $region74: #{codebert_classifier_forward.1} parent=1 // pred_check
      _
    $region75: #{codebert_classifier_forward.1} parent=1 // pred_check_branch
      %5170 = sbr.rel (0) target = $region77
    $region76: #{codebert_classifier_forward.1} parent=1 // pred_region
      %5171 = dma.done [#allocation4], 32
    $region77: #{codebert_classifier_forward.1} parent=1 // pred_fallthru
      _
    %5172 = vsyncpa [#allocation3], 1
    %5173 = vsyncpa [#allocation6], 1
    %5174 = vsyncpa [#allocation9], 1
    %5175 = vsyncpa [#allocation4], 1

</llo_original>
